<compile_context>
chip_gen: v7x
topology: tpu7x:2x2x1
jax: 0.10.0
libtpu: 0.0.40
codegen_flags: <defaults>
</compile_context>

<pallas_src>
import functools

import jax
import jax.numpy as jnp
from jax.experimental import pallas as pl
from jax.experimental.pallas import tpu as pltpu

# ----------------------------- configuration --------------------------------
NUM_CLASSES = 5
NUM_ANCHORS = 3
FEATURE_LAYER = [1, 2]               # indices into the base list producing sources
BASE_CFG = ((1, 1), (2, 1), (2, 1))  # (stride, pad) per base conv (static, not traced)
MATMUL_DTYPE = jnp.bfloat16          # MXU input dtype; epilogue math stays f32


# ----------------------- Pallas GEMM + bias + ReLU ---------------------------
def _gemm_bias_relu_kernel(x_ref, w_ref, b_ref, o_ref):
    acc = jnp.dot(x_ref[...], w_ref[...], preferred_element_type=jnp.float32)
    acc = acc + b_ref[...]
    o_ref[...] = jnp.maximum(acc, 0.0).astype(o_ref.dtype)


def gemm_bias_relu(x, w, b):
    """x: (M, K), w: (K, N), b: (1, N) -> relu(x @ w + b) as f32.

    Single resident block (no M padding / K loop).  For the largest problem
    (first conv, M = 512) the rows are split across a 2-step "parallel" grid
    so a v7x megacore can use both TensorCores.
    """
    M, K = x.shape
    _, N = w.shape
    if M >= 256 and (M // 2) % 8 == 0:
        tm, steps = M // 2, 2
    else:
        tm, steps = M, 1
    return pl.pallas_call(
        _gemm_bias_relu_kernel,
        out_shape=jax.ShapeDtypeStruct((M, N), jnp.float32),
        grid=(steps,),
        in_specs=[
            pl.BlockSpec((tm, K), lambda i: (i, 0)),
            pl.BlockSpec((K, N), lambda i: (0, 0)),
            pl.BlockSpec((1, N), lambda i: (0, 0)),
        ],
        out_specs=pl.BlockSpec((tm, N), lambda i: (i, 0)),
        compiler_params=pltpu.CompilerParams(
            dimension_semantics=("parallel",)),
    )(x, w, b)


# ------------------- fused loc+conf head GEMM (+ softmax) --------------------
def _head_kernel(x_ref, w_ref, b_ref, loc_ref, conf_ref, *, apply_softmax):
    """One source's loc+conf head: acc = x @ [W_loc | W_conf] + [b_loc | b_conf].

    Optionally applies the per-anchor softmax over NUM_CLASSES in the epilogue
    (eval phase), exactly matching torch's softmax(conf.view(-1, C), dim=-1).
    """
    acc = jnp.dot(x_ref[...], w_ref[...], preferred_element_type=jnp.float32)
    acc = acc + b_ref[...]
    n_loc = loc_ref.shape[-1]
    loc_ref[...] = acc[:, :n_loc].astype(loc_ref.dtype)
    conf = acc[:, n_loc:]
    if apply_softmax:
        for g in range(NUM_ANCHORS):
            lo, hi = g * NUM_CLASSES, (g + 1) * NUM_CLASSES
            s = conf[:, lo:hi]
            m = jnp.max(s, axis=-1, keepdims=True)
            e = jnp.exp(s - m)
            conf_ref[:, lo:hi] = (
                e / jnp.sum(e, axis=-1, keepdims=True)).astype(conf_ref.dtype)
    else:
        conf_ref[...] = conf.astype(conf_ref.dtype)


# ------------------------------ im2col glue ----------------------------------
def _im2col(x, kh, kw, stride, pad):
    """x: (B,H,W,Cin) NHWC -> patches (B*Ho*Wo, kh*kw*Cin), plus Ho, Wo."""
    B, H, W, Cin = x.shape
    xp = jnp.pad(x, ((0, 0), (pad, pad), (pad, pad), (0, 0)))
    Ho = (H + 2 * pad - kh) // stride + 1
    Wo = (W + 2 * pad - kw) // stride + 1
    cols = [xp[:, i:i + stride * Ho:stride, j:j + stride * Wo:stride, :]
            for i in range(kh) for j in range(kw)]
    patches = jnp.concatenate(cols, axis=-1).reshape(B * Ho * Wo, kh * kw * Cin)
    return patches, Ho, Wo


def conv2d_relu(x, w, b, stride, pad):
    """x NHWC; w (kh,kw,Cin,Cout); b (Cout,). im2col + fused Pallas GEMM/bias/ReLU."""
    B = x.shape[0]
    kh, kw, cin, cout = w.shape
    patches, Ho, Wo = _im2col(x, kh, kw, stride, pad)
    out = gemm_bias_relu(
        patches.astype(MATMUL_DTYPE),
        w.reshape(kh * kw * cin, cout).astype(MATMUL_DTYPE),
        b.reshape(1, cout).astype(jnp.float32),
    )
    return out.reshape(B, Ho, Wo, cout)


def heads_fused(sources, loc_params, conf_params, apply_softmax):
    """All loc/conf head convs for all sources in ONE pallas_call.

    loc+conf weights are concatenated along N (they share im2col patches);
    the sources are stacked along a "parallel" grid axis (row-padded to a
    common M) so the two v7x TensorCores can each take one source.
    """
    n_loc = NUM_ANCHORS * 4
    n_conf = NUM_ANCHORS * NUM_CLASSES
    n_tot = n_loc + n_conf

    pats, dims = [], []
    for s in sources:
        p, ho, wo = _im2col(s, 3, 3, 1, 1)
        pats.append(p)
        dims.append((s.shape[0], ho, wo))
    K = pats[0].shape[1]
    m_max = max(p.shape[0] for p in pats)
    m_max = ((m_max + 7) // 8) * 8

    xs = jnp.stack([jnp.pad(p, ((0, m_max - p.shape[0]), (0, 0)))
                    for p in pats]).astype(MATMUL_DTYPE)          # (S, m_max, K)
    ws = jnp.stack([jnp.concatenate([l["w"].reshape(K, n_loc),
                                     c["w"].reshape(K, n_conf)], axis=1)
                    for l, c in zip(loc_params, conf_params)]
                   ).astype(MATMUL_DTYPE)                         # (S, K, 27)
    bs = jnp.stack([jnp.concatenate([l["b"], c["b"]])[None, :]
                    for l, c in zip(loc_params, conf_params)]
                   ).astype(jnp.float32)                          # (S, 1, 27)
    S = len(pats)

    loc_o, conf_o = pl.pallas_call(
        functools.partial(_head_kernel, apply_softmax=apply_softmax),
        out_shape=(jax.ShapeDtypeStruct((S, m_max, n_loc), jnp.float32),
                   jax.ShapeDtypeStruct((S, m_max, n_conf), jnp.float32)),
        grid=(S,),
        in_specs=[
            pl.BlockSpec((None, m_max, K), lambda s: (s, 0, 0)),
            pl.BlockSpec((None, K, n_tot), lambda s: (s, 0, 0)),
            pl.BlockSpec((None, 1, n_tot), lambda s: (s, 0, 0)),
        ],
        out_specs=(
            pl.BlockSpec((None, m_max, n_loc), lambda s: (s, 0, 0)),
            pl.BlockSpec((None, m_max, n_conf), lambda s: (s, 0, 0)),
        ),
        compiler_params=pltpu.CompilerParams(
            dimension_semantics=("parallel",)),
    )(xs, ws, bs)

    locs, confs = [], []
    for i, (B, ho, wo) in enumerate(dims):
        M = B * ho * wo
        locs.append(loc_o[i, :M].reshape(B, ho, wo, n_loc))
        confs.append(conf_o[i, :M].reshape(B, ho, wo, n_conf))
    return locs, confs


# ----------------------------- parameter init --------------------------------
def _conv_params(key, kh, kw, cin, cout):
    kw_, kb_ = jax.random.split(key)
    scale = 1.0 / jnp.sqrt(kh * kw * cin)
    return {
        "w": jax.random.normal(kw_, (kh, kw, cin, cout), jnp.float32) * scale,
        "b": jax.random.normal(kb_, (cout,), jnp.float32) * 0.01,
    }


def init_params(key):
    keys = jax.random.split(key, 8)
    base = [
        _conv_params(keys[0], 3, 3, 4, 8),    # stride 1, pad 1 (BASE_CFG[0])
        _conv_params(keys[1], 3, 3, 8, 16),   # stride 2, pad 1
        _conv_params(keys[2], 3, 3, 16, 16),  # stride 2, pad 1
    ]
    loc = [
        _conv_params(keys[3], 3, 3, 16, NUM_ANCHORS * 4),
        _conv_params(keys[4], 3, 3, 16, NUM_ANCHORS * 4),
    ]
    conf = [
        _conv_params(keys[5], 3, 3, 16, NUM_ANCHORS * NUM_CLASSES),
        _conv_params(keys[6], 3, 3, 16, NUM_ANCHORS * NUM_CLASSES),
    ]
    return {"base": base, "loc": loc, "conf": conf}


# -------------------------------- forward ------------------------------------
def xssd_forward(params, x_nchw, phase="eval"):
    x = jnp.transpose(x_nchw, (0, 2, 3, 1))          # NCHW -> NHWC
    sources = []
    for k, (layer, (stride, pad)) in enumerate(zip(params["base"], BASE_CFG)):
        x = conv2d_relu(x, layer["w"], layer["b"], stride, pad)
        if k in FEATURE_LAYER:
            sources.append(x)
    if phase == "feature":
        return sources

    locs, confs = heads_fused(sources, params["loc"], params["conf"],
                              apply_softmax=(phase == "eval"))

    B = x_nchw.shape[0]
    loc = jnp.concatenate([o.reshape(B, -1) for o in locs], axis=1)
    conf = jnp.concatenate([o.reshape(B, -1) for o in confs], axis=1)

    if phase == "eval":
        # softmax already applied in the head-kernel epilogue
        return loc.reshape(B, -1, 4), conf.reshape(-1, NUM_CLASSES)
    else:
        return loc.reshape(B, -1, 4), conf.reshape(B, -1, NUM_CLASSES)


# ---------------------------------- main --------------------------------------
if __name__ == "__main__":
    key = jax.random.PRNGKey(0)
    k_param, k_in = jax.random.split(key)
    params = init_params(k_param)
    x = jax.random.normal(k_in, (2, 4, 16, 16), jnp.float32)   # NCHW like torch

    forward = jax.jit(xssd_forward, static_argnames=("phase",))

    loc_out, conf_out = forward(params, x, phase="eval")
    jax.block_until_ready((loc_out, conf_out))

    # shapes implied by the architecture:
    #   sources: (2,8,8,16) and (2,4,4,16); anchors=3 -> priors = 3*(64+16) = 240
    assert loc_out.shape == (2, 240, 4)
    assert conf_out.shape == (2 * 240, NUM_CLASSES)
    # fused softmax sanity: rows are normalized probability vectors
    assert bool(jnp.allclose(jnp.sum(conf_out, axis=-1), 1.0, atol=1e-3))

    # train-phase path (no softmax, per-batch class view)
    loc_tr, conf_tr = forward(params, x, phase="train")
    jax.block_until_ready((loc_tr, conf_tr))
    assert loc_tr.shape == (2, 240, 4)
    assert conf_tr.shape == (2, 240, NUM_CLASSES)

    print("KERNEL_OK")
</pallas_src>

<mosaic_0001>
module attributes {stable_mosaic.version = 11 : i64} {
  func.func @_gemm_bias_relu_kernel(%arg0: i32, %arg1: memref<256x36xbf16, #tpu.memory_space<vmem>>, %arg2: memref<36x8xbf16, #tpu.memory_space<vmem>>, %arg3: memref<1x8xf32, #tpu.memory_space<vmem>>, %arg4: memref<256x8xf32, #tpu.memory_space<vmem>>) attributes {dimension_semantics = [#tpu.dimension_semantics<parallel>], iteration_bounds = array<i64: 2>, scalar_prefetch = 0 : i64, scratch_operands = 0 : i64, tpu.core_type = #tpu.core_type<tc>, window_params = [{transform_indices = @transform_0, window_bounds = array<i64: 256, 36>}, {pipeline_mode = #tpu.pipeline_mode<synchronous>, transform_indices = @transform_1, window_bounds = array<i64: 36, 8>}, {pipeline_mode = #tpu.pipeline_mode<synchronous>, transform_indices = @transform_2, window_bounds = array<i64: 1, 8>}, {transform_indices = @transform_3, window_bounds = array<i64: 256, 8>}]} {
    %c0 = arith.constant 0 : index
    %c0_0 = arith.constant 0 : index
    %0 = vector.load %arg1[%c0, %c0_0] : memref<256x36xbf16, #tpu.memory_space<vmem>>, vector<256x36xbf16>
    %c0_1 = arith.constant 0 : index
    %c0_2 = arith.constant 0 : index
    %1 = vector.load %arg2[%c0_1, %c0_2] : memref<36x8xbf16, #tpu.memory_space<vmem>>, vector<36x8xbf16>
    %cst = arith.constant dense<0.000000e+00> : vector<256x8xf32>
    %2 = tpu.matmul %0, %1, %cst {dimension_numbers = #tpu.dot_dimension_numbers<[1], [0], [0], [1], [0, 0, 1, 1], [], []>} : vector<256x36xbf16>, vector<36x8xbf16>, vector<256x8xf32> -> vector<256x8xf32>
    %c0_3 = arith.constant 0 : index
    %c0_4 = arith.constant 0 : index
    %3 = vector.load %arg3[%c0_3, %c0_4] : memref<1x8xf32, #tpu.memory_space<vmem>>, vector<1x8xf32>
    %4 = vector.broadcast %3 : vector<1x8xf32> to vector<256x8xf32>
    %5 = arith.addf %2, %4 : vector<256x8xf32>
    %cst_5 = arith.constant 0.000000e+00 : f32
    %6 = vector.broadcast %cst_5 : f32 to vector<256x8xf32>
    %7 = arith.maximumf %5, %6 : vector<256x8xf32>
    %c0_6 = arith.constant 0 : index
    %c0_7 = arith.constant 0 : index
    %8 = vector.load %arg4[%c0_6, %c0_7] : memref<256x8xf32, #tpu.memory_space<vmem>>, vector<256x8xf32>
    tpu.vector_store %arg4[%c0_6, %c0_7], %7 {strides = array<i32>} : memref<256x8xf32, #tpu.memory_space<vmem>>, vector<256x8xf32>,
    return
  }
  func.func @transform_0(%arg0: i32) -> (i32, i32) {
    %c0_i32 = arith.constant 0 : i32
    %c0_i32_0 = arith.constant 0 : i32
    return %arg0, %c0_i32 : i32, i32
  }
  func.func @transform_1(%arg0: i32) -> (i32, i32) {
    %c0_i32 = arith.constant 0 : i32
    %c0_i32_0 = arith.constant 0 : i32
    %c0_i32_1 = arith.constant 0 : i32
    return %c0_i32, %c0_i32_0 : i32, i32
  }
  func.func @transform_2(%arg0: i32) -> (i32, i32) {
    %c0_i32 = arith.constant 0 : i32
    %c0_i32_0 = arith.constant 0 : i32
    %c0_i32_1 = arith.constant 0 : i32
    return %c0_i32, %c0_i32_0 : i32, i32
  }
  func.func @transform_3(%arg0: i32) -> (i32, i32) {
    %c0_i32 = arith.constant 0 : i32
    %c0_i32_0 = arith.constant 0 : i32
    return %arg0, %c0_i32 : i32, i32
  }
}

module attributes {stable_mosaic.version = 11 : i64} {
  func.func @_gemm_bias_relu_kernel(%arg0: i32, %arg1: memref<128x72xbf16, #tpu.memory_space<vmem>>, %arg2: memref<72x16xbf16, #tpu.memory_space<vmem>>, %arg3: memref<1x16xf32, #tpu.memory_space<vmem>>, %arg4: memref<128x16xf32, #tpu.memory_space<vmem>>) attributes {dimension_semantics = [#tpu.dimension_semantics<parallel>], iteration_bounds = array<i64: 1>, scalar_prefetch = 0 : i64, scratch_operands = 0 : i64, tpu.core_type = #tpu.core_type<tc>, window_params = [{transform_indices = @transform_0, window_bounds = array<i64: 128, 72>}, {pipeline_mode = #tpu.pipeline_mode<synchronous>, transform_indices = @transform_1, window_bounds = array<i64: 72, 16>}, {pipeline_mode = #tpu.pipeline_mode<synchronous>, transform_indices = @transform_2, window_bounds = array<i64: 1, 16>}, {transform_indices = @transform_3, window_bounds = array<i64: 128, 16>}]} {
    %c0 = arith.constant 0 : index
    %c0_0 = arith.constant 0 : index
    %0 = vector.load %arg1[%c0, %c0_0] : memref<128x72xbf16, #tpu.memory_space<vmem>>, vector<128x72xbf16>
    %c0_1 = arith.constant 0 : index
    %c0_2 = arith.constant 0 : index
    %1 = vector.load %arg2[%c0_1, %c0_2] : memref<72x16xbf16, #tpu.memory_space<vmem>>, vector<72x16xbf16>
    %cst = arith.constant dense<0.000000e+00> : vector<128x16xf32>
    %2 = tpu.matmul %0, %1, %cst {dimension_numbers = #tpu.dot_dimension_numbers<[1], [0], [0], [1], [0, 0, 1, 1], [], []>} : vector<128x72xbf16>, vector<72x16xbf16>, vector<128x16xf32> -> vector<128x16xf32>
    %c0_3 = arith.constant 0 : index
    %c0_4 = arith.constant 0 : index
    %3 = vector.load %arg3[%c0_3, %c0_4] : memref<1x16xf32, #tpu.memory_space<vmem>>, vector<1x16xf32>
    %4 = vector.broadcast %3 : vector<1x16xf32> to vector<128x16xf32>
    %5 = arith.addf %2, %4 : vector<128x16xf32>
    %cst_5 = arith.constant 0.000000e+00 : f32
    %6 = vector.broadcast %cst_5 : f32 to vector<128x16xf32>
    %7 = arith.maximumf %5, %6 : vector<128x16xf32>
    %c0_6 = arith.constant 0 : index
    %c0_7 = arith.constant 0 : index
    %8 = vector.load %arg4[%c0_6, %c0_7] : memref<128x16xf32, #tpu.memory_space<vmem>>, vector<128x16xf32>
    tpu.vector_store %arg4[%c0_6, %c0_7], %7 {strides = array<i32>} : memref<128x16xf32, #tpu.memory_space<vmem>>, vector<128x16xf32>,
    return
  }
  func.func @transform_0(%arg0: i32) -> (i32, i32) {
    %c0_i32 = arith.constant 0 : i32
    %c0_i32_0 = arith.constant 0 : i32
    return %arg0, %c0_i32 : i32, i32
  }
  func.func @transform_1(%arg0: i32) -> (i32, i32) {
    %c0_i32 = arith.constant 0 : i32
    %c0_i32_0 = arith.constant 0 : i32
    %c0_i32_1 = arith.constant 0 : i32
    return %c0_i32, %c0_i32_0 : i32, i32
  }
  func.func @transform_2(%arg0: i32) -> (i32, i32) {
    %c0_i32 = arith.constant 0 : i32
    %c0_i32_0 = arith.constant 0 : i32
    %c0_i32_1 = arith.constant 0 : i32
    return %c0_i32, %c0_i32_0 : i32, i32
  }
  func.func @transform_3(%arg0: i32) -> (i32, i32) {
    %c0_i32 = arith.constant 0 : i32
    %c0_i32_0 = arith.constant 0 : i32
    return %arg0, %c0_i32 : i32, i32
  }
}

module attributes {stable_mosaic.version = 11 : i64} {
  func.func @_gemm_bias_relu_kernel(%arg0: i32, %arg1: memref<32x144xbf16, #tpu.memory_space<vmem>>, %arg2: memref<144x16xbf16, #tpu.memory_space<vmem>>, %arg3: memref<1x16xf32, #tpu.memory_space<vmem>>, %arg4: memref<32x16xf32, #tpu.memory_space<vmem>>) attributes {dimension_semantics = [#tpu.dimension_semantics<parallel>], iteration_bounds = array<i64: 1>, scalar_prefetch = 0 : i64, scratch_operands = 0 : i64, tpu.core_type = #tpu.core_type<tc>, window_params = [{transform_indices = @transform_0, window_bounds = array<i64: 32, 144>}, {pipeline_mode = #tpu.pipeline_mode<synchronous>, transform_indices = @transform_1, window_bounds = array<i64: 144, 16>}, {pipeline_mode = #tpu.pipeline_mode<synchronous>, transform_indices = @transform_2, window_bounds = array<i64: 1, 16>}, {transform_indices = @transform_3, window_bounds = array<i64: 32, 16>}]} {
    %c0 = arith.constant 0 : index
    %c0_0 = arith.constant 0 : index
    %0 = vector.load %arg1[%c0, %c0_0] : memref<32x144xbf16, #tpu.memory_space<vmem>>, vector<32x144xbf16>
    %c0_1 = arith.constant 0 : index
    %c0_2 = arith.constant 0 : index
    %1 = vector.load %arg2[%c0_1, %c0_2] : memref<144x16xbf16, #tpu.memory_space<vmem>>, vector<144x16xbf16>
    %cst = arith.constant dense<0.000000e+00> : vector<32x16xf32>
    %2 = tpu.matmul %0, %1, %cst {dimension_numbers = #tpu.dot_dimension_numbers<[1], [0], [0], [1], [0, 0, 1, 1], [], []>} : vector<32x144xbf16>, vector<144x16xbf16>, vector<32x16xf32> -> vector<32x16xf32>
    %c0_3 = arith.constant 0 : index
    %c0_4 = arith.constant 0 : index
    %3 = vector.load %arg3[%c0_3, %c0_4] : memref<1x16xf32, #tpu.memory_space<vmem>>, vector<1x16xf32>
    %4 = vector.broadcast %3 : vector<1x16xf32> to vector<32x16xf32>
    %5 = arith.addf %2, %4 : vector<32x16xf32>
    %cst_5 = arith.constant 0.000000e+00 : f32
    %6 = vector.broadcast %cst_5 : f32 to vector<32x16xf32>
    %7 = arith.maximumf %5, %6 : vector<32x16xf32>
    %c0_6 = arith.constant 0 : index
    %c0_7 = arith.constant 0 : index
    %8 = vector.load %arg4[%c0_6, %c0_7] : memref<32x16xf32, #tpu.memory_space<vmem>>, vector<32x16xf32>
    tpu.vector_store %arg4[%c0_6, %c0_7], %7 {strides = array<i32>} : memref<32x16xf32, #tpu.memory_space<vmem>>, vector<32x16xf32>,
    return
  }
  func.func @transform_0(%arg0: i32) -> (i32, i32) {
    %c0_i32 = arith.constant 0 : i32
    %c0_i32_0 = arith.constant 0 : i32
    return %arg0, %c0_i32 : i32, i32
  }
  func.func @transform_1(%arg0: i32) -> (i32, i32) {
    %c0_i32 = arith.constant 0 : i32
    %c0_i32_0 = arith.constant 0 : i32
    %c0_i32_1 = arith.constant 0 : i32
    return %c0_i32, %c0_i32_0 : i32, i32
  }
  func.func @transform_2(%arg0: i32) -> (i32, i32) {
    %c0_i32 = arith.constant 0 : i32
    %c0_i32_0 = arith.constant 0 : i32
    %c0_i32_1 = arith.constant 0 : i32
    return %c0_i32, %c0_i32_0 : i32, i32
  }
  func.func @transform_3(%arg0: i32) -> (i32, i32) {
    %c0_i32 = arith.constant 0 : i32
    %c0_i32_0 = arith.constant 0 : i32
    return %arg0, %c0_i32 : i32, i32
  }
}

module attributes {stable_mosaic.version = 11 : i64} {
  func.func @_head_kernel(%arg0: i32, %arg1: memref<1x128x144xbf16, #tpu.memory_space<vmem>>, %arg2: memref<1x144x27xbf16, #tpu.memory_space<vmem>>, %arg3: memref<1x1x27xf32, #tpu.memory_space<vmem>>, %arg4: memref<1x128x12xf32, #tpu.memory_space<vmem>>, %arg5: memref<1x128x15xf32, #tpu.memory_space<vmem>>) attributes {dimension_semantics = [#tpu.dimension_semantics<parallel>], iteration_bounds = array<i64: 2>, scalar_prefetch = 0 : i64, scratch_operands = 0 : i64, tpu.core_type = #tpu.core_type<tc>, window_params = [{transform_indices = @transform_0, window_bounds = array<i64: 1, 128, 144>}, {transform_indices = @transform_1, window_bounds = array<i64: 1, 144, 27>}, {transform_indices = @transform_2, window_bounds = array<i64: 1, 1, 27>}, {transform_indices = @transform_3, window_bounds = array<i64: 1, 128, 12>}, {transform_indices = @transform_4, window_bounds = array<i64: 1, 128, 15>}]} {
    %c0 = arith.constant 0 : index
    %c0_0 = arith.constant 0 : index
    %c0_1 = arith.constant 0 : index
    %0 = vector.load %arg1[%c0, %c0_0, %c0_1] : memref<1x128x144xbf16, #tpu.memory_space<vmem>>, vector<1x128x144xbf16>
    %1 = vector.shape_cast %0 : vector<1x128x144xbf16> to vector<128x144xbf16>
    %c0_2 = arith.constant 0 : index
    %c0_3 = arith.constant 0 : index
    %c0_4 = arith.constant 0 : index
    %2 = vector.load %arg2[%c0_2, %c0_3, %c0_4] : memref<1x144x27xbf16, #tpu.memory_space<vmem>>, vector<1x144x27xbf16>
    %3 = vector.shape_cast %2 : vector<1x144x27xbf16> to vector<144x27xbf16>
    %cst = arith.constant dense<0.000000e+00> : vector<128x27xf32>
    %4 = tpu.matmul %1, %3, %cst {dimension_numbers = #tpu.dot_dimension_numbers<[1], [0], [0], [1], [0, 0, 1, 1], [], []>} : vector<128x144xbf16>, vector<144x27xbf16>, vector<128x27xf32> -> vector<128x27xf32>
    %c0_5 = arith.constant 0 : index
    %c0_6 = arith.constant 0 : index
    %c0_7 = arith.constant 0 : index
    %5 = vector.load %arg3[%c0_5, %c0_6, %c0_7] : memref<1x1x27xf32, #tpu.memory_space<vmem>>, vector<1x1x27xf32>
    %6 = vector.shape_cast %5 : vector<1x1x27xf32> to vector<1x27xf32>
    %7 = vector.broadcast %6 : vector<1x27xf32> to vector<128x27xf32>
    %8 = arith.addf %4, %7 : vector<128x27xf32>
    %9 = vector.extract_strided_slice %8 {offsets = [0, 0], sizes = [128, 12], strides = [1, 1]} : vector<128x27xf32> to vector<128x12xf32>
    %c0_8 = arith.constant 0 : index
    %c0_9 = arith.constant 0 : index
    %c0_10 = arith.constant 0 : index
    %10 = vector.load %arg4[%c0_8, %c0_9, %c0_10] : memref<1x128x12xf32, #tpu.memory_space<vmem>>, vector<1x128x12xf32>
    %11 = vector.shape_cast %10 : vector<1x128x12xf32> to vector<128x12xf32>
    %12 = vector.shape_cast %9 : vector<128x12xf32> to vector<1x128x12xf32>
    tpu.vector_store %arg4[%c0_8, %c0_9, %c0_10], %12 {strides = array<i32>} : memref<1x128x12xf32, #tpu.memory_space<vmem>>, vector<1x128x12xf32>,
    %13 = vector.extract_strided_slice %8 {offsets = [0, 12], sizes = [128, 15], strides = [1, 1]} : vector<128x27xf32> to vector<128x15xf32>
    %14 = vector.extract_strided_slice %13 {offsets = [0, 0], sizes = [128, 5], strides = [1, 1]} : vector<128x15xf32> to vector<128x5xf32>
    %cst_11 = arith.constant dense<0xFF800000> : vector<128xf32>
    %15 = vector.multi_reduction <maximumf>, %14, %cst_11 [1] : vector<128x5xf32> to vector<128xf32>
    %16 = vector.shape_cast %15 : vector<128xf32> to vector<128x1xf32>
    %17 = vector.broadcast %16 : vector<128x1xf32> to vector<128x5xf32>
    %18 = arith.subf %14, %17 : vector<128x5xf32>
    %19 = math.exp %18 : vector<128x5xf32>
    %cst_12 = arith.constant dense<0.000000e+00> : vector<128xf32>
    %20 = vector.multi_reduction <add>, %19, %cst_12 [1] : vector<128x5xf32> to vector<128xf32>
    %21 = vector.shape_cast %20 : vector<128xf32> to vector<128x1xf32>
    %22 = vector.broadcast %21 : vector<128x1xf32> to vector<128x5xf32>
    %23 = arith.divf %19, %22 : vector<128x5xf32>
    %c0_13 = arith.constant 0 : index
    %c0_14 = arith.constant 0 : index
    %c0_15 = arith.constant 0 : index
    %24 = vector.load %arg5[%c0_13, %c0_14, %c0_15] : memref<1x128x15xf32, #tpu.memory_space<vmem>>, vector<1x128x5xf32>
    %25 = vector.shape_cast %24 : vector<1x128x5xf32> to vector<128x5xf32>
    %26 = vector.shape_cast %23 : vector<128x5xf32> to vector<1x128x5xf32>
    tpu.vector_store %arg5[%c0_13, %c0_14, %c0_15], %26 {strides = array<i32>} : memref<1x128x15xf32, #tpu.memory_space<vmem>>, vector<1x128x5xf32>,
    %27 = vector.extract_strided_slice %13 {offsets = [0, 5], sizes = [128, 5], strides = [1, 1]} : vector<128x15xf32> to vector<128x5xf32>
    %cst_16 = arith.constant dense<0xFF800000> : vector<128xf32>
    %28 = vector.multi_reduction <maximumf>, %27, %cst_16 [1] : vector<128x5xf32> to vector<128xf32>
    %29 = vector.shape_cast %28 : vector<128xf32> to vector<128x1xf32>
    %30 = vector.broadcast %29 : vector<128x1xf32> to vector<128x5xf32>
    %31 = arith.subf %27, %30 : vector<128x5xf32>
    %32 = math.exp %31 : vector<128x5xf32>
    %cst_17 = arith.constant dense<0.000000e+00> : vector<128xf32>
    %33 = vector.multi_reduction <add>, %32, %cst_17 [1] : vector<128x5xf32> to vector<128xf32>
    %34 = vector.shape_cast %33 : vector<128xf32> to vector<128x1xf32>
    %35 = vector.broadcast %34 : vector<128x1xf32> to vector<128x5xf32>
    %36 = arith.divf %32, %35 : vector<128x5xf32>
    %c0_18 = arith.constant 0 : index
    %c0_19 = arith.constant 0 : index
    %c5 = arith.constant 5 : index
    %37 = vector.load %arg5[%c0_18, %c0_19, %c5] : memref<1x128x15xf32, #tpu.memory_space<vmem>>, vector<1x128x5xf32>
    %38 = vector.shape_cast %37 : vector<1x128x5xf32> to vector<128x5xf32>
    %39 = vector.shape_cast %36 : vector<128x5xf32> to vector<1x128x5xf32>
    tpu.vector_store %arg5[%c0_18, %c0_19, %c5], %39 {strides = array<i32>} : memref<1x128x15xf32, #tpu.memory_space<vmem>>, vector<1x128x5xf32>,
    %40 = vector.extract_strided_slice %13 {offsets = [0, 10], sizes = [128, 5], strides = [1, 1]} : vector<128x15xf32> to vector<128x5xf32>
    %cst_20 = arith.constant dense<0xFF800000> : vector<128xf32>
    %41 = vector.multi_reduction <maximumf>, %40, %cst_20 [1] : vector<128x5xf32> to vector<128xf32>
    %42 = vector.shape_cast %41 : vector<128xf32> to vector<128x1xf32>
    %43 = vector.broadcast %42 : vector<128x1xf32> to vector<128x5xf32>
    %44 = arith.subf %40, %43 : vector<128x5xf32>
    %45 = math.exp %44 : vector<128x5xf32>
    %cst_21 = arith.constant dense<0.000000e+00> : vector<128xf32>
    %46 = vector.multi_reduction <add>, %45, %cst_21 [1] : vector<128x5xf32> to vector<128xf32>
    %47 = vector.shape_cast %46 : vector<128xf32> to vector<128x1xf32>
    %48 = vector.broadcast %47 : vector<128x1xf32> to vector<128x5xf32>
    %49 = arith.divf %45, %48 : vector<128x5xf32>
    %c0_22 = arith.constant 0 : index
    %c0_23 = arith.constant 0 : index
    %c10 = arith.constant 10 : index
    %50 = vector.load %arg5[%c0_22, %c0_23, %c10] : memref<1x128x15xf32, #tpu.memory_space<vmem>>, vector<1x128x5xf32>
    %51 = vector.shape_cast %50 : vector<1x128x5xf32> to vector<128x5xf32>
    %52 = vector.shape_cast %49 : vector<128x5xf32> to vector<1x128x5xf32>
    tpu.vector_store %arg5[%c0_22, %c0_23, %c10], %52 {strides = array<i32>} : memref<1x128x15xf32, #tpu.memory_space<vmem>>, vector<1x128x5xf32>,
    return
  }
  func.func @transform_0(%arg0: i32) -> (i32, i32, i32) {
    %c0_i32 = arith.constant 0 : i32
    %c0_i32_0 = arith.constant 0 : i32
    %c0_i32_1 = arith.constant 0 : i32
    return %arg0, %c0_i32, %c0_i32_0 : i32, i32, i32
  }
  func.func @transform_1(%arg0: i32) -> (i32, i32, i32) {
    %c0_i32 = arith.constant 0 : i32
    %c0_i32_0 = arith.constant 0 : i32
    %c0_i32_1 = arith.constant 0 : i32
    return %arg0, %c0_i32, %c0_i32_0 : i32, i32, i32
  }
  func.func @transform_2(%arg0: i32) -> (i32, i32, i32) {
    %c0_i32 = arith.constant 0 : i32
    %c0_i32_0 = arith.constant 0 : i32
    %c0_i32_1 = arith.constant 0 : i32
    return %arg0, %c0_i32, %c0_i32_0 : i32, i32, i32
  }
  func.func @transform_3(%arg0: i32) -> (i32, i32, i32) {
    %c0_i32 = arith.constant 0 : i32
    %c0_i32_0 = arith.constant 0 : i32
    %c0_i32_1 = arith.constant 0 : i32
    return %arg0, %c0_i32, %c0_i32_0 : i32, i32, i32
  }
  func.func @transform_4(%arg0: i32) -> (i32, i32, i32) {
    %c0_i32 = arith.constant 0 : i32
    %c0_i32_0 = arith.constant 0 : i32
    %c0_i32_1 = arith.constant 0 : i32
    return %arg0, %c0_i32, %c0_i32_0 : i32, i32, i32
  }
}

</mosaic_0001>

<llo_original>
// kernel: xssd_forward.4
$region0: #{xssd_forward.4}
  #allocation0 [shape = 'u32[]', space=smem, size = 0x4, offset = 0x4, fixed_abs, tag = 'smem constant byte address 0x4 - core index']
  #allocation1 [shape = 'u32[144,128]{1,0:T(1,128)}', space=vmem, size = 0x12000, scoped, tag = 'internal scratch']
  %s0 = inlined_call_operand.vmem [shape: bf16[512,36], index: 0, kind: input, shape index: {}]
  %s1 = inlined_call_operand.vmem [shape: bf16[36,8], index: 1, kind: input, shape index: {}]
  %s2 = inlined_call_operand.vmem [shape: f32[1,8], index: 2, kind: input, shape index: {}]
  %s3 = inlined_call_operand.vmem [shape: f32[512,8], index: 3, kind: output, shape index: {}]
  %s4 = sld [smem:[#allocation0]]
  $region45: #{xssd_forward.4} parent=0
    _
  %s6 = ssub.s32 1, %s4
  %s7 = scalar_select 0, %s6, %s4
  loop: start=0, step=1, limit=4
  $region2: #{xssd_forward.4} parent=0 // loop_pre_header
    _
  $region3: #{xssd_forward.4} parent=0 // loop_header
    %s9 = sphi 0, %s13
    %p10 = scmp.ge.s32.totalorder %s9, 4
    %s19 = sphi 0, %s21
    %s22 = sphi 0, %s19
    %s23 = sphi 0, %s22
    %s39 = sphi 0, %s23
    %s43 = sphi 0, %s43
    %s45 = sphi 0, %s43
    %s46 = sphi 0, %s45
    %s60 = sphi 0, %s46
    %s64 = sphi 0, %s64
    %s66 = sphi 0, %s64
    %s67 = sphi 0, %s66
    %s81 = sphi 0, %s67
    %s87 = sphi 0, %s89
    %s90 = sphi 0, %s87
    %s91 = sphi 0, %s90
    %s107 = sphi 0, %s91
  $region4: #{xssd_forward.4} parent=0 // loop_header_branch
    %12 = sbr.rel (%p10) target = $region8
  $region5: #{xssd_forward.4} parent=0 // loop_body
    %s14 = ssub.s32 %s9, 1
    %s15 = ssub.s32 %s9, 2
    %s16 = sadd.s32 %s9, 1
    %s17 = ssub.s32 %s9, %s16
    %p18 = scmp.eq.s32.totalorder %s17, 0
    %s20 = sadd.s32 %s19, 1
    %s21 = scalar_select %p18, %s19, %s20
    %p24 = pneg %p18
    %p25 = scmp.eq.s32.totalorder %s9, 1
    %p26 = por %p24, %p25
    %p27 = scmp.ne.s32.totalorder %s19, %s22
    %p28 = scmp.eq.s32.totalorder %s9, 0
    %p29 = por %p27, %p28
    %p30 = scmp.ne.s32.totalorder %s19, %s22
    %p31 = scmp.eq.s32.totalorder %s14, 1
    %p32 = por %p30, %p31
    %p33 = scmp.ne.s32.totalorder %s22, %s23
    %p34 = scmp.eq.s32.totalorder %s14, 0
    %p35 = por %p33, %p34
    %p36 = scmp.ne.s32.totalorder %s22, %s23
    %p37 = scmp.eq.s32.totalorder %s15, 1
    %p38 = por %p36, %p37
    %p40 = scmp.ne.s32.totalorder %s23, %s39
    %p41 = scmp.eq.s32.totalorder %s15, 0
    %p42 = por %p40, %p41
    %s44 = sadd.s32 %s43, 1
    %p47 = scmp.eq.s32.totalorder %s9, 1
    %p48 = scmp.ne.s32.totalorder %s43, %s45
    %p49 = scmp.eq.s32.totalorder %s9, 0
    %p50 = por %p48, %p49
    %p51 = scmp.ne.s32.totalorder %s43, %s45
    %p52 = scmp.eq.s32.totalorder %s14, 1
    %p53 = por %p51, %p52
    %p54 = scmp.ne.s32.totalorder %s45, %s46
    %p55 = scmp.eq.s32.totalorder %s14, 0
    %p56 = por %p54, %p55
    %p57 = scmp.ne.s32.totalorder %s45, %s46
    %p58 = scmp.eq.s32.totalorder %s15, 1
    %p59 = por %p57, %p58
    %p61 = scmp.ne.s32.totalorder %s46, %s60
    %p62 = scmp.eq.s32.totalorder %s15, 0
    %p63 = por %p61, %p62
    %s65 = sadd.s32 %s64, 1
    %p68 = scmp.eq.s32.totalorder %s9, 1
    %p69 = scmp.ne.s32.totalorder %s64, %s66
    %p70 = scmp.eq.s32.totalorder %s9, 0
    %p71 = por %p69, %p70
    %p72 = scmp.ne.s32.totalorder %s64, %s66
    %p73 = scmp.eq.s32.totalorder %s14, 1
    %p74 = por %p72, %p73
    %p75 = scmp.ne.s32.totalorder %s66, %s67
    %p76 = scmp.eq.s32.totalorder %s14, 0
    %p77 = por %p75, %p76
    %p78 = scmp.ne.s32.totalorder %s66, %s67
    %p79 = scmp.eq.s32.totalorder %s15, 1
    %p80 = por %p78, %p79
    %p82 = scmp.ne.s32.totalorder %s67, %s81
    %p83 = scmp.eq.s32.totalorder %s15, 0
    %p84 = por %p82, %p83
    %s85 = ssub.s32 %s9, %s16
    %p86 = scmp.eq.s32.totalorder %s85, 0
    %s88 = sadd.s32 %s87, 1
    %s89 = scalar_select %p86, %s87, %s88
    %p92 = pneg %p86
    %p93 = scmp.eq.s32.totalorder %s9, 1
    %p94 = por %p92, %p93
    %p95 = scmp.ne.s32.totalorder %s87, %s90
    %p96 = scmp.eq.s32.totalorder %s9, 0
    %p97 = por %p95, %p96
    %p98 = scmp.ne.s32.totalorder %s87, %s90
    %p99 = scmp.eq.s32.totalorder %s14, 1
    %p100 = por %p98, %p99
    %p101 = scmp.ne.s32.totalorder %s90, %s91
    %p102 = scmp.eq.s32.totalorder %s14, 0
    %p103 = por %p101, %p102
    %p104 = scmp.ne.s32.totalorder %s90, %s91
    %p105 = scmp.eq.s32.totalorder %s15, 1
    %p106 = por %p104, %p105
    %p108 = scmp.ne.s32.totalorder %s91, %s107
    %p109 = scmp.eq.s32.totalorder %s15, 0
    %p110 = por %p108, %p109
    %p111 = scmp.le.s32.totalorder 1, %s9
    %p112 = scmp.lt.s32.totalorder %s9, 3
    %p113 = pnand %p111, %p112
    %p114 = pneg %p113
    // Predicated region
    $region9: #{xssd_forward.4} parent=5 // pred_check
      _
    $region10: #{xssd_forward.4} parent=5 // pred_check_branch
      %116 = sbr.rel (%p113) target = $region12
    $region11: #{xssd_forward.4} parent=5 // pred_region
      %s117 = ssub.s32 %s9, 1
      // Predicated region
      $region13: #{xssd_forward.4} parent=11 // pred_check
        %p118 = pneg %p56
      $region14: #{xssd_forward.4} parent=11 // pred_check_branch
        %120 = sbr.rel (%p118) target = $region16
      $region15: #{xssd_forward.4} parent=11 // pred_region
        _
      $region16: #{xssd_forward.4} parent=11 // pred_fallthru
        _
      // Predicated region
      $region17: #{xssd_forward.4} parent=11 // pred_check
        %p121 = pneg %p77
      $region18: #{xssd_forward.4} parent=11 // pred_check_branch
        %123 = sbr.rel (%p121) target = $region20
      $region19: #{xssd_forward.4} parent=11 // pred_region
        _
      $region20: #{xssd_forward.4} parent=11 // pred_fallthru
        _
    $region12: #{xssd_forward.4} parent=5 // pred_fallthru
      _
    %p124 = scmp.lt.s32.totalorder %s9, 2
    // Predicated region
    $region21: #{xssd_forward.4} parent=5 // pred_check
      %p125 = pneg %p124
    $region22: #{xssd_forward.4} parent=5 // pred_check_branch
      %127 = sbr.rel (%p125) target = $region24
    $region23: #{xssd_forward.4} parent=5 // pred_region
      // Predicated region
      $region25: #{xssd_forward.4} parent=23 // pred_check
        %p128 = pneg %p29
      $region26: #{xssd_forward.4} parent=23 // pred_check_branch
        %130 = sbr.rel (%p128) target = $region28
      $region27: #{xssd_forward.4} parent=23 // pred_region
        %s131 = smul.u32 32, %s9
        %p132 = scmp.lt.s32.totalorder %s131, 63
        %s133 = scalar_select %p132, %s131, 63
        %s134 = smul.addr %s133, 4
        %s135 = scalar_lea.vmem %s0, %s134
        %s136 = smul.u32 32, %s9
      $region28: #{xssd_forward.4} parent=23 // pred_fallthru
        _
    $region24: #{xssd_forward.4} parent=5 // pred_fallthru
      _
    %p137 = scmp.le.s32.totalorder 1, %s9
    %p138 = scmp.lt.s32.totalorder %s9, 3
    %p139 = pnand %p137, %p138
    %p140 = pneg %p139
    // Predicated region
    $region29: #{xssd_forward.4} parent=5 // pred_check
      _
    $region30: #{xssd_forward.4} parent=5 // pred_check_branch
      %142 = sbr.rel (%p139) target = $region32
    $region31: #{xssd_forward.4} parent=5 // pred_region
      %s143 = ssub.s32 %s9, 1
      %s144 = smul.u32 32, %s14
      %p145 = scmp.lt.s32.totalorder %s144, 63
      %s146 = scalar_select %p145, %s144, 63
      %s147 = smul.addr %s146, 4
      %s148 = scalar_lea.vmem %s0, %s147
      %p149 = pneg %p35
      %p150 = pneg %p32
      %p151 = pneg %p56
      %p152 = pneg %p53
      %p153 = pneg %p77
      %p154 = pneg %p74
      %p155 = pneg %p103
      %p156 = pneg %p100
      %s157 = smul.u32 32, %s14
      %p158 = scmp.lt.s32.totalorder %s157, 63
      %s159 = scalar_select %p158, %s157, 63
      %s160 = smul.addr %s159, 8
      %s161 = scalar_lea.vmem %s3, %s160
      %s162 = smul.u32 32, %s14
      %p163 = scmp.lt.s32.totalorder %s162, 63
      %s164 = scalar_select %p163, %s162, 63
      %s165 = smul.addr %s164, 4
      %s166 = scalar_lea.vmem %s0, %s165
      %s167 = smul.u32 32, %s14
      %s168 = smul.u32 32, %s14
      %p169 = scmp.lt.s32.totalorder %s168, 63
      %s170 = scalar_select %p169, %s168, 63
      %s171 = smul.addr %s170, 8
      %s172 = scalar_lea.vmem %s3, %s171
      %s173 = smul.u32 32, %s14
      %v175 = vld [vmem:[%s166] sm:$0xf]
      %v176 = vld [vmem:[%s166 + $0x4] sm:$0xf]
      %v177 = vld [vmem:[%s166 + $0x8] sm:$0xf]
      %v178 = vld [vmem:[%s166 + $0xc] sm:$0xf]
      %v179 = vld [vmem:[%s166 + $0x10] sm:$0xf]
      %v180 = vld [vmem:[%s166 + $0x14] sm:$0xf]
      %v181 = vld [vmem:[%s166 + $0x18] sm:$0xf]
      %v182 = vld [vmem:[%s166 + $0x1c] sm:$0xf]
      %v183 = vld [vmem:[%s166 + $0x20] sm:$0xf]
      %v184 = vld [vmem:[%s166 + $0x24] sm:$0xf]
      %v185 = vld [vmem:[%s166 + $0x28] sm:$0xf]
      %v186 = vld [vmem:[%s166 + $0x2c] sm:$0xf]
      %v187 = vld [vmem:[%s166 + $0x30] sm:$0xf]
      %v188 = vld [vmem:[%s166 + $0x34] sm:$0xf]
      %v189 = vld [vmem:[%s166 + $0x38] sm:$0xf]
      %v190 = vld [vmem:[%s166 + $0x3c] sm:$0xf]
      %v191 = vld [vmem:[%s166 + $0x40] sm:$0xf]
      %v192 = vld [vmem:[%s166 + $0x44] sm:$0xf]
      %v193 = vld [vmem:[%s166 + $0x48] sm:$0xf]
      %v194 = vld [vmem:[%s166 + $0x4c] sm:$0xf]
      %v195 = vld [vmem:[%s166 + $0x50] sm:$0xf]
      %v196 = vld [vmem:[%s166 + $0x54] sm:$0xf]
      %v197 = vld [vmem:[%s166 + $0x58] sm:$0xf]
      %v198 = vld [vmem:[%s166 + $0x5c] sm:$0xf]
      %v199 = vld [vmem:[%s166 + $0x60] sm:$0xf]
      %v200 = vld [vmem:[%s166 + $0x64] sm:$0xf]
      %v201 = vld [vmem:[%s166 + $0x68] sm:$0xf]
      %v202 = vld [vmem:[%s166 + $0x6c] sm:$0xf]
      %v203 = vld [vmem:[%s166 + $0x70] sm:$0xf]
      %v204 = vld [vmem:[%s166 + $0x74] sm:$0xf]
      %v205 = vld [vmem:[%s166 + $0x78] sm:$0xf]
      %v206 = vld [vmem:[%s166 + $0x7c] sm:$0xf]
      %v207 = vld [vmem:[%s1] sm:$0xf]
      %v208 = vld [vmem:[%s1 + $0x4] sm:$0xf]
      %v209 = vld [vmem:[%s1 + $0x8] sm:$0xf]
      %v210 = vld [vmem:[%s1 + $0xc] sm:$0xf]
      %v211 = vld [vmem:[%s1 + $0x10] sm:$0x3]
      %v212 = vld [vmem:[%s2] sm:$0x1]
      %v214 = vlaneseq
      %v215 = vshrl.u32 %v214, 7
      %v216 = vsub.s32 0, %v215
      %v217 = vrot.slane %v212, %v216
      %v251 = vunpack.c.l.b16 %v175
      %v252 = vunpack.c.l.b16 %v176
      %v253 = vunpack.c.l.b16 %v177
      %v254 = vunpack.c.l.b16 %v178
      %v255 = vunpack.c.l.b16 %v179
      %v256 = vunpack.c.l.b16 %v180
      %v257 = vunpack.c.l.b16 %v181
      %v258 = vunpack.c.l.b16 %v182
      %v259 = vunpack.c.l.b16 %v183
      %v260 = vunpack.c.l.b16 %v184
      %v261 = vunpack.c.l.b16 %v185
      %v262 = vunpack.c.l.b16 %v186
      %v263 = vunpack.c.l.b16 %v187
      %v264 = vunpack.c.l.b16 %v188
      %v265 = vunpack.c.l.b16 %v189
      %v266 = vunpack.c.l.b16 %v190
      %v267 = vunpack.c.l.b16 %v191
      %v268 = vunpack.c.l.b16 %v192
      %v269 = vunpack.c.l.b16 %v193
      %v270 = vunpack.c.l.b16 %v194
      %v271 = vunpack.c.l.b16 %v195
      %v272 = vunpack.c.l.b16 %v196
      %v273 = vunpack.c.l.b16 %v197
      %v274 = vunpack.c.l.b16 %v198
      %v275 = vunpack.c.l.b16 %v199
      %v276 = vunpack.c.l.b16 %v200
      %v277 = vunpack.c.l.b16 %v201
      %v278 = vunpack.c.l.b16 %v202
      %v279 = vunpack.c.l.b16 %v203
      %v280 = vunpack.c.l.b16 %v204
      %v281 = vunpack.c.l.b16 %v205
      %v282 = vunpack.c.l.b16 %v206
      %v283 = vpack.c.b16 %v252, %v251
      %v284 = vpack.c.b16 %v254, %v253
      %v285 = vpack.c.b16 %v256, %v255
      %v286 = vpack.c.b16 %v258, %v257
      %v287 = vpack.c.b16 %v260, %v259
      %v288 = vpack.c.b16 %v262, %v261
      %v289 = vpack.c.b16 %v264, %v263
      %v290 = vpack.c.b16 %v266, %v265
      %v291 = vpack.c.b16 %v268, %v267
      %v292 = vpack.c.b16 %v270, %v269
      %v293 = vpack.c.b16 %v272, %v271
      %v294 = vpack.c.b16 %v274, %v273
      %v295 = vpack.c.b16 %v276, %v275
      %v296 = vpack.c.b16 %v278, %v277
      %v297 = vpack.c.b16 %v280, %v279
      %v298 = vpack.c.b16 %v282, %v281
      %v304 = vunpack.c.l.b16 %v207
      %v305 = vunpack.c.l.b16 %v208
      %v306 = vunpack.c.l.b16 %v209
      %v307 = vunpack.c.l.b16 %v210
      %v308 = vunpack.c.l.b16 %v211
      %v309 = vpack.c.b16 %v305, %v304
      %v310 = vpack.c.b16 %v307, %v306
      %v311 = vpack.c.b16 %v308, %v308
      %vm314 = vcmask 293888
      %v316 = vsel %vm314, %v283, 0
      %v319 = vsel %vm314, %v284, 0
      %v322 = vsel %vm314, %v285, 0
      %v325 = vsel %vm314, %v286, 0
      %v328 = vsel %vm314, %v287, 0
      %v331 = vsel %vm314, %v288, 0
      %v334 = vsel %vm314, %v289, 0
      %v337 = vsel %vm314, %v290, 0
      %v340 = vsel %vm314, %v291, 0
      %v343 = vsel %vm314, %v292, 0
      %v346 = vsel %vm314, %v293, 0
      %v349 = vsel %vm314, %v294, 0
      %v352 = vsel %vm314, %v295, 0
      %v355 = vsel %vm314, %v296, 0
      %v358 = vsel %vm314, %v297, 0
      %v361 = vsel %vm314, %v298, 0
      %vm363 = vcmask 1041408
      %v365 = vsel %vm363, %v311, 0
      %367 = vmatprep.subr.bf16.mxu0 0
      %368 = vmatpush1.bf16.msra.mxu0 %v309
      %369 = vmatprep.subr.bf16.mxu0 0
      %370 = vmatpush1.bf16.msra.mxu0 %v310
      %371 = vmatprep.subr.bf16.mxu0 0
      %372 = vmatpush1.bf16.msra.mxu0 %v365
      %373 = vmatprep.subr.bf16.mxu0 0
      %374 = vmatpush1.bf16.msra.mxu0 0
      %375 = vmatprep.subr.bf16.mxu0 0
      %376 = vmatpush1.bf16.msra.mxu0 0
      %377 = vmatprep.subr.bf16.mxu0 0
      %378 = vmatpush1.bf16.msra.mxu0 0
      %379 = vmatprep.subr.bf16.mxu0 0
      %380 = vmatpush1.bf16.msra.mxu0 0
      %381 = vmatprep.subr.bf16.mxu0 0
      %382 = vmatpush1.bf16.msra.mxu0 0
      %383 = vmatprep.subr.bf16.mxu0 0
      %384 = vmatpush1.bf16.msra.mxu0 0
      %385 = vmatprep.subr.bf16.mxu0 0
      %386 = vmatpush1.bf16.msra.mxu0 0
      %387 = vmatprep.subr.bf16.mxu0 0
      %388 = vmatpush1.bf16.msra.mxu0 0
      %389 = vmatprep.subr.bf16.mxu0 0
      %390 = vmatpush1.bf16.msra.mxu0 0
      %391 = vmatprep.subr.bf16.mxu0 0
      %392 = vmatpush1.bf16.msra.mxu0 0
      %393 = vmatprep.subr.bf16.mxu0 0
      %394 = vmatpush1.bf16.msra.mxu0 0
      %395 = vmatprep.subr.bf16.mxu0 0
      %396 = vmatpush1.bf16.msra.mxu0 0
      %397 = vmatprep.subr.bf16.mxu0 0
      %398 = vmatpush1.bf16.msra.mxu0 0
      %399 = vmatprep.mubr.bf16.mxu0 0
      %400 = vmatmul.mubr.bf16.gmra.mrb[0].mxu0 %v316
      %v401 = vpop.f32.mrb[0].mxu0
      %v402 = vadd.f32 %v217, %v401
      %v403 = vpop.f32.mrb[0].mxu0
      %v404 = vpop.f32.mrb[0].mxu0
      %v405 = vadd.f32 %v217, %v404
      %v406 = vpop.f32.mrb[0].mxu0
      %407 = vmatprep.mubr.bf16.mxu0 0
      %408 = vmatmul.mubr.bf16.gmra.mrb[0].mxu0 %v319
      %v409 = vpop.f32.mrb[0].mxu0
      %v410 = vadd.f32 %v217, %v409
      %v411 = vpop.f32.mrb[0].mxu0
      %v412 = vpop.f32.mrb[0].mxu0
      %v413 = vadd.f32 %v217, %v412
      %v414 = vpop.f32.mrb[0].mxu0
      %415 = vmatprep.mubr.bf16.mxu0 0
      %416 = vmatmul.mubr.bf16.gmra.mrb[0].mxu0 %v322
      %v417 = vpop.f32.mrb[0].mxu0
      %v418 = vadd.f32 %v217, %v417
      %v419 = vpop.f32.mrb[0].mxu0
      %v420 = vpop.f32.mrb[0].mxu0
      %v421 = vadd.f32 %v217, %v420
      %v422 = vpop.f32.mrb[0].mxu0
      %423 = vmatprep.mubr.bf16.mxu0 0
      %424 = vmatmul.mubr.bf16.gmra.mrb[0].mxu0 %v325
      %v425 = vpop.f32.mrb[0].mxu0
      %v426 = vadd.f32 %v217, %v425
      %v427 = vpop.f32.mrb[0].mxu0
      %v428 = vpop.f32.mrb[0].mxu0
      %v429 = vadd.f32 %v217, %v428
      %v430 = vpop.f32.mrb[0].mxu0
      %431 = vmatprep.mubr.bf16.mxu0 0
      %432 = vmatmul.mubr.bf16.gmra.mrb[0].mxu0 %v328
      %v433 = vpop.f32.mrb[0].mxu0
      %v434 = vadd.f32 %v217, %v433
      %v435 = vpop.f32.mrb[0].mxu0
      %v436 = vpop.f32.mrb[0].mxu0
      %v437 = vadd.f32 %v217, %v436
      %v438 = vpop.f32.mrb[0].mxu0
      %439 = vmatprep.mubr.bf16.mxu0 0
      %440 = vmatmul.mubr.bf16.gmra.mrb[0].mxu0 %v331
      %v441 = vpop.f32.mrb[0].mxu0
      %v442 = vadd.f32 %v217, %v441
      %v443 = vpop.f32.mrb[0].mxu0
      %v444 = vpop.f32.mrb[0].mxu0
      %v445 = vadd.f32 %v217, %v444
      %v446 = vpop.f32.mrb[0].mxu0
      %447 = vmatprep.mubr.bf16.mxu0 0
      %448 = vmatmul.mubr.bf16.gmra.mrb[0].mxu0 %v334
      %v449 = vpop.f32.mrb[0].mxu0
      %v450 = vadd.f32 %v217, %v449
      %v451 = vpop.f32.mrb[0].mxu0
      %v452 = vpop.f32.mrb[0].mxu0
      %v453 = vadd.f32 %v217, %v452
      %v454 = vpop.f32.mrb[0].mxu0
      %455 = vmatprep.mubr.bf16.mxu0 0
      %456 = vmatmul.mubr.bf16.gmra.mrb[0].mxu0 %v337
      %v457 = vpop.f32.mrb[0].mxu0
      %v458 = vadd.f32 %v217, %v457
      %v459 = vpop.f32.mrb[0].mxu0
      %v460 = vpop.f32.mrb[0].mxu0
      %v461 = vadd.f32 %v217, %v460
      %v462 = vpop.f32.mrb[0].mxu0
      %463 = vmatprep.mubr.bf16.mxu0 0
      %464 = vmatmul.mubr.bf16.gmra.mrb[0].mxu0 %v340
      %v465 = vpop.f32.mrb[0].mxu0
      %v466 = vadd.f32 %v217, %v465
      %v467 = vpop.f32.mrb[0].mxu0
      %v468 = vpop.f32.mrb[0].mxu0
      %v469 = vadd.f32 %v217, %v468
      %v470 = vpop.f32.mrb[0].mxu0
      %471 = vmatprep.mubr.bf16.mxu0 0
      %472 = vmatmul.mubr.bf16.gmra.mrb[0].mxu0 %v343
      %v473 = vpop.f32.mrb[0].mxu0
      %v474 = vadd.f32 %v217, %v473
      %v475 = vpop.f32.mrb[0].mxu0
      %v476 = vpop.f32.mrb[0].mxu0
      %v477 = vadd.f32 %v217, %v476
      %v478 = vpop.f32.mrb[0].mxu0
      %479 = vmatprep.mubr.bf16.mxu0 0
      %480 = vmatmul.mubr.bf16.gmra.mrb[0].mxu0 %v346
      %v481 = vpop.f32.mrb[0].mxu0
      %v482 = vadd.f32 %v217, %v481
      %v483 = vpop.f32.mrb[0].mxu0
      %v484 = vpop.f32.mrb[0].mxu0
      %v485 = vadd.f32 %v217, %v484
      %v486 = vpop.f32.mrb[0].mxu0
      %487 = vmatprep.mubr.bf16.mxu0 0
      %488 = vmatmul.mubr.bf16.gmra.mrb[0].mxu0 %v349
      %v489 = vpop.f32.mrb[0].mxu0
      %v490 = vadd.f32 %v217, %v489
      %v491 = vpop.f32.mrb[0].mxu0
      %v492 = vpop.f32.mrb[0].mxu0
      %v493 = vadd.f32 %v217, %v492
      %v494 = vpop.f32.mrb[0].mxu0
      %495 = vmatprep.mubr.bf16.mxu0 0
      %496 = vmatmul.mubr.bf16.gmra.mrb[0].mxu0 %v352
      %v497 = vpop.f32.mrb[0].mxu0
      %v498 = vadd.f32 %v217, %v497
      %v499 = vpop.f32.mrb[0].mxu0
      %v500 = vpop.f32.mrb[0].mxu0
      %v501 = vadd.f32 %v217, %v500
      %v502 = vpop.f32.mrb[0].mxu0
      %503 = vmatprep.mubr.bf16.mxu0 0
      %504 = vmatmul.mubr.bf16.gmra.mrb[0].mxu0 %v355
      %v505 = vpop.f32.mrb[0].mxu0
      %v506 = vadd.f32 %v217, %v505
      %v507 = vpop.f32.mrb[0].mxu0
      %v508 = vpop.f32.mrb[0].mxu0
      %v509 = vadd.f32 %v217, %v508
      %v510 = vpop.f32.mrb[0].mxu0
      %511 = vmatprep.mubr.bf16.mxu0 0
      %512 = vmatmul.mubr.bf16.gmra.mrb[0].mxu0 %v358
      %v513 = vpop.f32.mrb[0].mxu0
      %v514 = vadd.f32 %v217, %v513
      %v515 = vpop.f32.mrb[0].mxu0
      %v516 = vpop.f32.mrb[0].mxu0
      %v517 = vadd.f32 %v217, %v516
      %v518 = vpop.f32.mrb[0].mxu0
      %519 = vmatprep.mubr.bf16.mxu0 0
      %520 = vmatmul.mubr.bf16.gmra.mrb[0].mxu0 %v361
      %v521 = vpop.f32.mrb[0].mxu0
      %v522 = vadd.f32 %v217, %v521
      %v523 = vpop.f32.mrb[0].mxu0
      %v524 = vpop.f32.mrb[0].mxu0
      %v525 = vadd.f32 %v217, %v524
      %v526 = vpop.f32.mrb[0].mxu0
      %527 = vdwg.mxu0
      %v528 = vmax.f32 %v402, 0.0
      %v529 = vmax.f32 %v405, 0.0
      %v530 = vmax.f32 %v410, 0.0
      %v531 = vmax.f32 %v413, 0.0
      %v532 = vmax.f32 %v418, 0.0
      %v533 = vmax.f32 %v421, 0.0
      %v534 = vmax.f32 %v426, 0.0
      %v535 = vmax.f32 %v429, 0.0
      %v536 = vmax.f32 %v434, 0.0
      %v537 = vmax.f32 %v437, 0.0
      %v538 = vmax.f32 %v442, 0.0
      %v539 = vmax.f32 %v445, 0.0
      %v540 = vmax.f32 %v450, 0.0
      %v541 = vmax.f32 %v453, 0.0
      %v542 = vmax.f32 %v458, 0.0
      %v543 = vmax.f32 %v461, 0.0
      %v544 = vmax.f32 %v466, 0.0
      %v545 = vmax.f32 %v469, 0.0
      %v546 = vmax.f32 %v474, 0.0
      %v547 = vmax.f32 %v477, 0.0
      %v548 = vmax.f32 %v482, 0.0
      %v549 = vmax.f32 %v485, 0.0
      %v550 = vmax.f32 %v490, 0.0
      %v551 = vmax.f32 %v493, 0.0
      %v552 = vmax.f32 %v498, 0.0
      %v553 = vmax.f32 %v501, 0.0
      %v554 = vmax.f32 %v506, 0.0
      %v555 = vmax.f32 %v509, 0.0
      %v556 = vmax.f32 %v514, 0.0
      %v557 = vmax.f32 %v517, 0.0
      %v558 = vmax.f32 %v522, 0.0
      %v559 = vmax.f32 %v525, 0.0
      %vm560 = vcmask 64512
      %561 = vst.msk [vmem:[%s172] sm:$0xff] %vm560, %v528
      %562 = vst.msk [vmem:[%s172 + $0x8] sm:$0xff] %vm560, %v529
      %563 = vst.msk [vmem:[%s172 + $0x10] sm:$0xff] %vm560, %v530
      %564 = vst.msk [vmem:[%s172 + $0x18] sm:$0xff] %vm560, %v531
      %565 = vst.msk [vmem:[%s172 + $0x20] sm:$0xff] %vm560, %v532
      %566 = vst.msk [vmem:[%s172 + $0x28] sm:$0xff] %vm560, %v533
      %567 = vst.msk [vmem:[%s172 + $0x30] sm:$0xff] %vm560, %v534
      %568 = vst.msk [vmem:[%s172 + $0x38] sm:$0xff] %vm560, %v535
      %569 = vst.msk [vmem:[%s172 + $0x40] sm:$0xff] %vm560, %v536
      %570 = vst.msk [vmem:[%s172 + $0x48] sm:$0xff] %vm560, %v537
      %571 = vst.msk [vmem:[%s172 + $0x50] sm:$0xff] %vm560, %v538
      %572 = vst.msk [vmem:[%s172 + $0x58] sm:$0xff] %vm560, %v539
      %573 = vst.msk [vmem:[%s172 + $0x60] sm:$0xff] %vm560, %v540
      %574 = vst.msk [vmem:[%s172 + $0x68] sm:$0xff] %vm560, %v541
      %575 = vst.msk [vmem:[%s172 + $0x70] sm:$0xff] %vm560, %v542
      %576 = vst.msk [vmem:[%s172 + $0x78] sm:$0xff] %vm560, %v543
      %577 = vst.msk [vmem:[%s172 + $0x80] sm:$0xff] %vm560, %v544
      %578 = vst.msk [vmem:[%s172 + $0x88] sm:$0xff] %vm560, %v545
      %579 = vst.msk [vmem:[%s172 + $0x90] sm:$0xff] %vm560, %v546
      %580 = vst.msk [vmem:[%s172 + $0x98] sm:$0xff] %vm560, %v547
      %581 = vst.msk [vmem:[%s172 + $0xa0] sm:$0xff] %vm560, %v548
      %582 = vst.msk [vmem:[%s172 + $0xa8] sm:$0xff] %vm560, %v549
      %583 = vst.msk [vmem:[%s172 + $0xb0] sm:$0xff] %vm560, %v550
      %584 = vst.msk [vmem:[%s172 + $0xb8] sm:$0xff] %vm560, %v551
      %585 = vst.msk [vmem:[%s172 + $0xc0] sm:$0xff] %vm560, %v552
      %586 = vst.msk [vmem:[%s172 + $0xc8] sm:$0xff] %vm560, %v553
      %587 = vst.msk [vmem:[%s172 + $0xd0] sm:$0xff] %vm560, %v554
      %588 = vst.msk [vmem:[%s172 + $0xd8] sm:$0xff] %vm560, %v555
      %589 = vst.msk [vmem:[%s172 + $0xe0] sm:$0xff] %vm560, %v556
      %590 = vst.msk [vmem:[%s172 + $0xe8] sm:$0xff] %vm560, %v557
      %591 = vst.msk [vmem:[%s172 + $0xf0] sm:$0xff] %vm560, %v558
      %592 = vst.msk [vmem:[%s172 + $0xf8] sm:$0xff] %vm560, %v559
      %s593 = smul.u32 32, %s14
      %p594 = scmp.lt.s32.totalorder %s593, 63
      %s595 = scalar_select %p594, %s593, 63
      %s596 = smul.addr %s595, 8
      %s597 = scalar_lea.vmem %s3, %s596
      // Predicated region
      $region33: #{xssd_forward.4} parent=31 // pred_check
        %p598 = pneg %p100
      $region34: #{xssd_forward.4} parent=31 // pred_check_branch
        %600 = sbr.rel (%p598) target = $region36
      $region35: #{xssd_forward.4} parent=31 // pred_region
        %s601 = smul.u32 32, %s14
      $region36: #{xssd_forward.4} parent=31 // pred_fallthru
        _
    $region32: #{xssd_forward.4} parent=5 // pred_fallthru
      _
    %p602 = scmp.le.s32.totalorder 2, %s9
    // Predicated region
    $region37: #{xssd_forward.4} parent=5 // pred_check
      %p603 = pneg %p602
    $region38: #{xssd_forward.4} parent=5 // pred_check_branch
      %605 = sbr.rel (%p603) target = $region40
    $region39: #{xssd_forward.4} parent=5 // pred_region
      %s606 = ssub.s32 %s9, 2
      // Predicated region
      $region41: #{xssd_forward.4} parent=39 // pred_check
        %p607 = pneg %p106
      $region42: #{xssd_forward.4} parent=39 // pred_check_branch
        %609 = sbr.rel (%p607) target = $region44
      $region43: #{xssd_forward.4} parent=39 // pred_region
        %s610 = smul.u32 32, %s15
        %p611 = scmp.lt.s32.totalorder %s610, 63
        %s612 = scalar_select %p611, %s610, 63
        %s613 = smul.addr %s612, 8
        %s614 = scalar_lea.vmem %s3, %s613
      $region44: #{xssd_forward.4} parent=39 // pred_fallthru
        _
    $region40: #{xssd_forward.4} parent=5 // pred_fallthru
      _
  $region6: #{xssd_forward.4} parent=0 // loop_footer
    %s13 = sadd.s32 1, %s9
  $region7: #{xssd_forward.4} parent=0 // loop_footer_branch
    %8 = sbr.rel target = $region3
  $region8: #{xssd_forward.4} parent=0 // loop_exit
    _

// kernel: xssd_forward.5
$region0: #{xssd_forward.5}
  #allocation0 [shape = 'u32[]', space=smem, size = 0x4, offset = 0x4, fixed_abs, tag = 'smem constant byte address 0x4 - core index']
  #allocation1 [shape = 'u32[144,128]{1,0:T(1,128)}', space=vmem, size = 0x12000, scoped, tag = 'internal scratch']
  %s0 = inlined_call_operand.vmem [shape: bf16[128,72], index: 0, kind: input, shape index: {}]
  %s1 = inlined_call_operand.vmem [shape: bf16[72,16], index: 1, kind: input, shape index: {}]
  %s2 = inlined_call_operand.vmem [shape: f32[1,16], index: 2, kind: input, shape index: {}]
  %s3 = inlined_call_operand.vmem [shape: f32[128,16], index: 3, kind: output, shape index: {}]
  %s4 = sld [smem:[#allocation0]]
  $region22: #{xssd_forward.5} parent=0
    _
  %s6 = ssub.s32 1, %s4
  %s7 = scalar_select 0, %s6, %s4
  // Predicated region
  $region2: #{xssd_forward.5} parent=0 // pred_check
    _
  $region3: #{xssd_forward.5} parent=0 // pred_check_branch
    %9 = sbr.rel (0) target = $region5
  $region4: #{xssd_forward.5} parent=0 // pred_region
    _
  $region5: #{xssd_forward.5} parent=0 // pred_fallthru
    _
  // Predicated region
  $region6: #{xssd_forward.5} parent=0 // pred_check
    _
  $region7: #{xssd_forward.5} parent=0 // pred_check_branch
    %11 = sbr.rel (0) target = $region9
  $region8: #{xssd_forward.5} parent=0 // pred_region
    _
  $region9: #{xssd_forward.5} parent=0 // pred_fallthru
    _
  // Predicated region
  $region10: #{xssd_forward.5} parent=0 // pred_check
    _
  $region11: #{xssd_forward.5} parent=0 // pred_check_branch
    %13 = sbr.rel (0) target = $region13
  $region12: #{xssd_forward.5} parent=0 // pred_region
    _
  $region13: #{xssd_forward.5} parent=0 // pred_fallthru
    _
  %v15 = vld [vmem:[%s0] sm:$0xf]
  %v16 = vld [vmem:[%s0 + $0x4] sm:$0xf]
  %v17 = vld [vmem:[%s0 + $0x8] sm:$0xf]
  %v18 = vld [vmem:[%s0 + $0xc] sm:$0xf]
  %v19 = vld [vmem:[%s0 + $0x10] sm:$0xf]
  %v20 = vld [vmem:[%s0 + $0x14] sm:$0xf]
  %v21 = vld [vmem:[%s0 + $0x18] sm:$0xf]
  %v22 = vld [vmem:[%s0 + $0x1c] sm:$0xf]
  %v23 = vld [vmem:[%s0 + $0x20] sm:$0xf]
  %v24 = vld [vmem:[%s0 + $0x24] sm:$0xf]
  %v25 = vld [vmem:[%s0 + $0x28] sm:$0xf]
  %v26 = vld [vmem:[%s0 + $0x2c] sm:$0xf]
  %v27 = vld [vmem:[%s0 + $0x30] sm:$0xf]
  %v28 = vld [vmem:[%s0 + $0x34] sm:$0xf]
  %v29 = vld [vmem:[%s0 + $0x38] sm:$0xf]
  %v30 = vld [vmem:[%s0 + $0x3c] sm:$0xf]
  %v31 = vld [vmem:[%s1] sm:$0xf]
  %v32 = vld [vmem:[%s1 + $0x4] sm:$0xf]
  %v33 = vld [vmem:[%s1 + $0x8] sm:$0xf]
  %v34 = vld [vmem:[%s1 + $0xc] sm:$0xf]
  %v35 = vld [vmem:[%s1 + $0x10] sm:$0xf]
  %v36 = vld [vmem:[%s1 + $0x14] sm:$0xf]
  %v37 = vld [vmem:[%s1 + $0x18] sm:$0xf]
  %v38 = vld [vmem:[%s1 + $0x1c] sm:$0xf]
  %v39 = vld [vmem:[%s1 + $0x20] sm:$0xf]
  %v40 = vld [vmem:[%s2] sm:$0x1]
  %v42 = vlaneseq
  %v43 = vshrl.u32 %v42, 7
  %v44 = vsub.s32 0, %v43
  %v45 = vrot.slane %v40, %v44
  %v63 = vunpack.c.l.b16 %v15
  %v64 = vunpack.c.l.b16 %v16
  %v65 = vunpack.c.l.b16 %v17
  %v66 = vunpack.c.l.b16 %v18
  %v67 = vunpack.c.l.b16 %v19
  %v68 = vunpack.c.l.b16 %v20
  %v69 = vunpack.c.l.b16 %v21
  %v70 = vunpack.c.l.b16 %v22
  %v71 = vunpack.c.l.b16 %v23
  %v72 = vunpack.c.l.b16 %v24
  %v73 = vunpack.c.l.b16 %v25
  %v74 = vunpack.c.l.b16 %v26
  %v75 = vunpack.c.l.b16 %v27
  %v76 = vunpack.c.l.b16 %v28
  %v77 = vunpack.c.l.b16 %v29
  %v78 = vunpack.c.l.b16 %v30
  %v79 = vpack.c.b16 %v64, %v63
  %v80 = vpack.c.b16 %v66, %v65
  %v81 = vpack.c.b16 %v68, %v67
  %v82 = vpack.c.b16 %v70, %v69
  %v83 = vpack.c.b16 %v72, %v71
  %v84 = vpack.c.b16 %v74, %v73
  %v85 = vpack.c.b16 %v76, %v75
  %v86 = vpack.c.b16 %v78, %v77
  %v96 = vunpack.c.l.b16 %v31
  %v97 = vunpack.c.l.b16 %v32
  %v98 = vunpack.c.l.b16 %v33
  %v99 = vunpack.c.l.b16 %v34
  %v100 = vunpack.c.l.b16 %v35
  %v101 = vunpack.c.l.b16 %v36
  %v102 = vunpack.c.l.b16 %v37
  %v103 = vunpack.c.l.b16 %v38
  %v104 = vunpack.c.l.b16 %v39
  %v105 = vpack.c.b16 %v97, %v96
  %v106 = vpack.c.b16 %v99, %v98
  %v107 = vpack.c.b16 %v101, %v100
  %v108 = vpack.c.b16 %v103, %v102
  %v109 = vpack.c.b16 %v104, %v104
  %vm114 = vcmask 588800
  %v116 = vsel %vm114, %v79, 0
  %v119 = vsel %vm114, %v80, 0
  %v122 = vsel %vm114, %v81, 0
  %v125 = vsel %vm114, %v82, 0
  %v128 = vsel %vm114, %v83, 0
  %v131 = vsel %vm114, %v84, 0
  %v134 = vsel %vm114, %v85, 0
  %v137 = vsel %vm114, %v86, 0
  %vm139 = vcmask 1043456
  %v141 = vsel %vm139, %v109, 0
  %143 = vmatprep.subr.bf16.mxu0 0
  %144 = vmatpush1.bf16.msra.mxu0 %v105
  %145 = vmatprep.subr.bf16.mxu0 0
  %146 = vmatpush1.bf16.msra.mxu0 %v106
  %147 = vmatprep.subr.bf16.mxu0 0
  %148 = vmatpush1.bf16.msra.mxu0 %v107
  %149 = vmatprep.subr.bf16.mxu0 0
  %150 = vmatpush1.bf16.msra.mxu0 %v108
  %151 = vmatprep.subr.bf16.mxu0 0
  %152 = vmatpush1.bf16.msra.mxu0 %v141
  %153 = vmatprep.subr.bf16.mxu0 0
  %154 = vmatpush1.bf16.msra.mxu0 0
  %155 = vmatprep.subr.bf16.mxu0 0
  %156 = vmatpush1.bf16.msra.mxu0 0
  %157 = vmatprep.subr.bf16.mxu0 0
  %158 = vmatpush1.bf16.msra.mxu0 0
  %159 = vmatprep.subr.bf16.mxu0 0
  %160 = vmatpush1.bf16.msra.mxu0 0
  %161 = vmatprep.subr.bf16.mxu0 0
  %162 = vmatpush1.bf16.msra.mxu0 0
  %163 = vmatprep.subr.bf16.mxu0 0
  %164 = vmatpush1.bf16.msra.mxu0 0
  %165 = vmatprep.subr.bf16.mxu0 0
  %166 = vmatpush1.bf16.msra.mxu0 0
  %167 = vmatprep.subr.bf16.mxu0 0
  %168 = vmatpush1.bf16.msra.mxu0 0
  %169 = vmatprep.subr.bf16.mxu0 0
  %170 = vmatpush1.bf16.msra.mxu0 0
  %171 = vmatprep.subr.bf16.mxu0 0
  %172 = vmatpush1.bf16.msra.mxu0 0
  %173 = vmatprep.subr.bf16.mxu0 0
  %174 = vmatpush1.bf16.msra.mxu0 0
  %175 = vmatprep.mubr.bf16.mxu0 0
  %176 = vmatmul.mubr.bf16.gmra.mrb[0].mxu0 %v116
  %v177 = vpop.f32.mrb[0].mxu0
  %v178 = vadd.f32 %v45, %v177
  %v179 = vpop.f32.mrb[0].mxu0
  %v180 = vpop.f32.mrb[0].mxu0
  %v181 = vadd.f32 %v45, %v180
  %v182 = vpop.f32.mrb[0].mxu0
  %183 = vmatprep.mubr.bf16.mxu0 0
  %184 = vmatmul.mubr.bf16.gmra.mrb[0].mxu0 %v119
  %v185 = vpop.f32.mrb[0].mxu0
  %v186 = vadd.f32 %v45, %v185
  %v187 = vpop.f32.mrb[0].mxu0
  %v188 = vpop.f32.mrb[0].mxu0
  %v189 = vadd.f32 %v45, %v188
  %v190 = vpop.f32.mrb[0].mxu0
  %191 = vmatprep.mubr.bf16.mxu0 0
  %192 = vmatmul.mubr.bf16.gmra.mrb[0].mxu0 %v122
  %v193 = vpop.f32.mrb[0].mxu0
  %v194 = vadd.f32 %v45, %v193
  %v195 = vpop.f32.mrb[0].mxu0
  %v196 = vpop.f32.mrb[0].mxu0
  %v197 = vadd.f32 %v45, %v196
  %v198 = vpop.f32.mrb[0].mxu0
  %199 = vmatprep.mubr.bf16.mxu0 0
  %200 = vmatmul.mubr.bf16.gmra.mrb[0].mxu0 %v125
  %v201 = vpop.f32.mrb[0].mxu0
  %v202 = vadd.f32 %v45, %v201
  %v203 = vpop.f32.mrb[0].mxu0
  %v204 = vpop.f32.mrb[0].mxu0
  %v205 = vadd.f32 %v45, %v204
  %v206 = vpop.f32.mrb[0].mxu0
  %207 = vmatprep.mubr.bf16.mxu0 0
  %208 = vmatmul.mubr.bf16.gmra.mrb[0].mxu0 %v128
  %v209 = vpop.f32.mrb[0].mxu0
  %v210 = vadd.f32 %v45, %v209
  %v211 = vpop.f32.mrb[0].mxu0
  %v212 = vpop.f32.mrb[0].mxu0
  %v213 = vadd.f32 %v45, %v212
  %v214 = vpop.f32.mrb[0].mxu0
  %215 = vmatprep.mubr.bf16.mxu0 0
  %216 = vmatmul.mubr.bf16.gmra.mrb[0].mxu0 %v131
  %v217 = vpop.f32.mrb[0].mxu0
  %v218 = vadd.f32 %v45, %v217
  %v219 = vpop.f32.mrb[0].mxu0
  %v220 = vpop.f32.mrb[0].mxu0
  %v221 = vadd.f32 %v45, %v220
  %v222 = vpop.f32.mrb[0].mxu0
  %223 = vmatprep.mubr.bf16.mxu0 0
  %224 = vmatmul.mubr.bf16.gmra.mrb[0].mxu0 %v134
  %v225 = vpop.f32.mrb[0].mxu0
  %v226 = vadd.f32 %v45, %v225
  %v227 = vpop.f32.mrb[0].mxu0
  %v228 = vpop.f32.mrb[0].mxu0
  %v229 = vadd.f32 %v45, %v228
  %v230 = vpop.f32.mrb[0].mxu0
  %231 = vmatprep.mubr.bf16.mxu0 0
  %232 = vmatmul.mubr.bf16.gmra.mrb[0].mxu0 %v137
  %v233 = vpop.f32.mrb[0].mxu0
  %v234 = vadd.f32 %v45, %v233
  %v235 = vpop.f32.mrb[0].mxu0
  %v236 = vpop.f32.mrb[0].mxu0
  %v237 = vadd.f32 %v45, %v236
  %v238 = vpop.f32.mrb[0].mxu0
  %239 = vdwg.mxu0
  %v240 = vmax.f32 %v178, 0.0
  %v241 = vmax.f32 %v181, 0.0
  %v242 = vmax.f32 %v186, 0.0
  %v243 = vmax.f32 %v189, 0.0
  %v244 = vmax.f32 %v194, 0.0
  %v245 = vmax.f32 %v197, 0.0
  %v246 = vmax.f32 %v202, 0.0
  %v247 = vmax.f32 %v205, 0.0
  %v248 = vmax.f32 %v210, 0.0
  %v249 = vmax.f32 %v213, 0.0
  %v250 = vmax.f32 %v218, 0.0
  %v251 = vmax.f32 %v221, 0.0
  %v252 = vmax.f32 %v226, 0.0
  %v253 = vmax.f32 %v229, 0.0
  %v254 = vmax.f32 %v234, 0.0
  %v255 = vmax.f32 %v237, 0.0
  %vm256 = vcmask 130048
  %257 = vst.msk [vmem:[%s3] sm:$0xff] %vm256, %v240
  %258 = vst.msk [vmem:[%s3 + $0x8] sm:$0xff] %vm256, %v241
  %259 = vst.msk [vmem:[%s3 + $0x10] sm:$0xff] %vm256, %v242
  %260 = vst.msk [vmem:[%s3 + $0x18] sm:$0xff] %vm256, %v243
  %261 = vst.msk [vmem:[%s3 + $0x20] sm:$0xff] %vm256, %v244
  %262 = vst.msk [vmem:[%s3 + $0x28] sm:$0xff] %vm256, %v245
  %263 = vst.msk [vmem:[%s3 + $0x30] sm:$0xff] %vm256, %v246
  %264 = vst.msk [vmem:[%s3 + $0x38] sm:$0xff] %vm256, %v247
  %265 = vst.msk [vmem:[%s3 + $0x40] sm:$0xff] %vm256, %v248
  %266 = vst.msk [vmem:[%s3 + $0x48] sm:$0xff] %vm256, %v249
  %267 = vst.msk [vmem:[%s3 + $0x50] sm:$0xff] %vm256, %v250
  %268 = vst.msk [vmem:[%s3 + $0x58] sm:$0xff] %vm256, %v251
  %269 = vst.msk [vmem:[%s3 + $0x60] sm:$0xff] %vm256, %v252
  %270 = vst.msk [vmem:[%s3 + $0x68] sm:$0xff] %vm256, %v253
  %271 = vst.msk [vmem:[%s3 + $0x70] sm:$0xff] %vm256, %v254
  %272 = vst.msk [vmem:[%s3 + $0x78] sm:$0xff] %vm256, %v255
  // Predicated region
  $region14: #{xssd_forward.5} parent=0 // pred_check
    _
  $region15: #{xssd_forward.5} parent=0 // pred_check_branch
    %274 = sbr.rel (0) target = $region17
  $region16: #{xssd_forward.5} parent=0 // pred_region
    _
  $region17: #{xssd_forward.5} parent=0 // pred_fallthru
    _
  // Predicated region
  $region18: #{xssd_forward.5} parent=0 // pred_check
    _
  $region19: #{xssd_forward.5} parent=0 // pred_check_branch
    %276 = sbr.rel (0) target = $region21
  $region20: #{xssd_forward.5} parent=0 // pred_region
    _
  $region21: #{xssd_forward.5} parent=0 // pred_fallthru
    _

// kernel: xssd_forward.6
$region0: #{xssd_forward.6}
  #allocation0 [shape = 'u32[]', space=smem, size = 0x4, offset = 0x4, fixed_abs, tag = 'smem constant byte address 0x4 - core index']
  #allocation1 [shape = 'u32[144,128]{1,0:T(1,128)}', space=vmem, size = 0x12000, scoped, tag = 'internal scratch']
  %s0 = inlined_call_operand.vmem [shape: bf16[32,144], index: 0, kind: input, shape index: {}]
  %s1 = inlined_call_operand.vmem [shape: bf16[144,16], index: 1, kind: input, shape index: {}]
  %s2 = inlined_call_operand.vmem [shape: f32[1,16], index: 2, kind: input, shape index: {}]
  %s3 = inlined_call_operand.vmem [shape: f32[32,16], index: 3, kind: output, shape index: {}]
  %s4 = sld [smem:[#allocation0]]
  $region22: #{xssd_forward.6} parent=0
    _
  %s6 = ssub.s32 1, %s4
  %s7 = scalar_select 0, %s6, %s4
  // Predicated region
  $region2: #{xssd_forward.6} parent=0 // pred_check
    _
  $region3: #{xssd_forward.6} parent=0 // pred_check_branch
    %9 = sbr.rel (0) target = $region5
  $region4: #{xssd_forward.6} parent=0 // pred_region
    _
  $region5: #{xssd_forward.6} parent=0 // pred_fallthru
    _
  // Predicated region
  $region6: #{xssd_forward.6} parent=0 // pred_check
    _
  $region7: #{xssd_forward.6} parent=0 // pred_check_branch
    %11 = sbr.rel (0) target = $region9
  $region8: #{xssd_forward.6} parent=0 // pred_region
    _
  $region9: #{xssd_forward.6} parent=0 // pred_fallthru
    _
  // Predicated region
  $region10: #{xssd_forward.6} parent=0 // pred_check
    _
  $region11: #{xssd_forward.6} parent=0 // pred_check_branch
    %13 = sbr.rel (0) target = $region13
  $region12: #{xssd_forward.6} parent=0 // pred_region
    _
  $region13: #{xssd_forward.6} parent=0 // pred_fallthru
    _
  %v15 = vld [vmem:[%s0] sm:$0xff]
  %v16 = vld [vmem:[%s0 + $0x8] sm:$0xff]
  %v17 = vld [vmem:[%s0 + $0x10] sm:$0xff]
  %v18 = vld [vmem:[%s0 + $0x18] sm:$0xff]
  %v19 = vld [vmem:[%s1] sm:$0xf]
  %v20 = vld [vmem:[%s1 + $0x4] sm:$0xf]
  %v21 = vld [vmem:[%s1 + $0x8] sm:$0xf]
  %v22 = vld [vmem:[%s1 + $0xc] sm:$0xf]
  %v23 = vld [vmem:[%s1 + $0x10] sm:$0xf]
  %v24 = vld [vmem:[%s1 + $0x14] sm:$0xf]
  %v25 = vld [vmem:[%s1 + $0x18] sm:$0xf]
  %v26 = vld [vmem:[%s1 + $0x1c] sm:$0xf]
  %v27 = vld [vmem:[%s1 + $0x20] sm:$0xf]
  %v28 = vld [vmem:[%s1 + $0x24] sm:$0xf]
  %v29 = vld [vmem:[%s1 + $0x28] sm:$0xf]
  %v30 = vld [vmem:[%s1 + $0x2c] sm:$0xf]
  %v31 = vld [vmem:[%s1 + $0x30] sm:$0xf]
  %v32 = vld [vmem:[%s1 + $0x34] sm:$0xf]
  %v33 = vld [vmem:[%s1 + $0x38] sm:$0xf]
  %v34 = vld [vmem:[%s1 + $0x3c] sm:$0xf]
  %v35 = vld [vmem:[%s1 + $0x40] sm:$0xf]
  %v36 = vld [vmem:[%s1 + $0x44] sm:$0xf]
  %v37 = vld [vmem:[%s2] sm:$0x1]
  %v39 = vlaneseq
  %v40 = vshrl.u32 %v39, 7
  %v41 = vsub.s32 0, %v40
  %v42 = vrot.slane %v37, %v41
  %v48 = vunpack.c.l.b16 %v15
  %v49 = vunpack.c.h.b16 %v15
  %v50 = vunpack.c.l.b16 %v16
  %v51 = vunpack.c.h.b16 %v16
  %v52 = vunpack.c.l.b16 %v17
  %v53 = vunpack.c.h.b16 %v17
  %v54 = vunpack.c.l.b16 %v18
  %v55 = vunpack.c.h.b16 %v18
  %v56 = vpack.c.b16 %v50, %v48
  %v57 = vpack.c.b16 %v51, %v49
  %v58 = vpack.c.b16 %v54, %v52
  %v59 = vpack.c.b16 %v55, %v53
  %v80 = vunpack.c.l.b16 %v19
  %v81 = vunpack.c.l.b16 %v20
  %v82 = vunpack.c.l.b16 %v21
  %v83 = vunpack.c.l.b16 %v22
  %v84 = vunpack.c.l.b16 %v23
  %v85 = vunpack.c.l.b16 %v24
  %v86 = vunpack.c.l.b16 %v25
  %v87 = vunpack.c.l.b16 %v26
  %v88 = vunpack.c.l.b16 %v27
  %v89 = vunpack.c.l.b16 %v28
  %v90 = vunpack.c.l.b16 %v29
  %v91 = vunpack.c.l.b16 %v30
  %v92 = vunpack.c.l.b16 %v31
  %v93 = vunpack.c.l.b16 %v32
  %v94 = vunpack.c.l.b16 %v33
  %v95 = vunpack.c.l.b16 %v34
  %v96 = vunpack.c.l.b16 %v35
  %v97 = vunpack.c.l.b16 %v36
  %v98 = vpack.c.b16 %v81, %v80
  %v99 = vpack.c.b16 %v83, %v82
  %v100 = vpack.c.b16 %v85, %v84
  %v101 = vpack.c.b16 %v87, %v86
  %v102 = vpack.c.b16 %v89, %v88
  %v103 = vpack.c.b16 %v91, %v90
  %v104 = vpack.c.b16 %v93, %v92
  %v105 = vpack.c.b16 %v95, %v94
  %v106 = vpack.c.b16 %v97, %v96
  %vm116 = vcmask 130048
  %v118 = vsel %vm116, %v57, 0
  %v121 = vsel %vm116, %v59, 0
  %123 = vmatprep.subr.bf16.mxu0 0
  %124 = vmatpush1.bf16.msra.mxu0 %v98
  %125 = vmatprep.subr.bf16.mxu0 0
  %126 = vmatpush1.bf16.msra.mxu0 %v99
  %127 = vmatprep.subr.bf16.mxu0 0
  %128 = vmatpush1.bf16.msra.mxu0 %v100
  %129 = vmatprep.subr.bf16.mxu0 0
  %130 = vmatpush1.bf16.msra.mxu0 %v101
  %131 = vmatprep.subr.bf16.mxu0 0
  %132 = vmatpush1.bf16.msra.mxu0 %v102
  %133 = vmatprep.subr.bf16.mxu0 0
  %134 = vmatpush1.bf16.msra.mxu0 %v103
  %135 = vmatprep.subr.bf16.mxu0 0
  %136 = vmatpush1.bf16.msra.mxu0 %v104
  %137 = vmatprep.subr.bf16.mxu0 0
  %138 = vmatpush1.bf16.msra.mxu0 %v105
  %139 = vmatprep.subr.bf16.mxu0 0
  %140 = vmatpush1.bf16.msra.mxu0 %v106
  %141 = vmatprep.subr.bf16.mxu0 0
  %142 = vmatpush1.bf16.msra.mxu0 0
  %143 = vmatprep.subr.bf16.mxu0 0
  %144 = vmatpush1.bf16.msra.mxu0 0
  %145 = vmatprep.subr.bf16.mxu0 0
  %146 = vmatpush1.bf16.msra.mxu0 0
  %147 = vmatprep.subr.bf16.mxu0 0
  %148 = vmatpush1.bf16.msra.mxu0 0
  %149 = vmatprep.subr.bf16.mxu0 0
  %150 = vmatpush1.bf16.msra.mxu0 0
  %151 = vmatprep.subr.bf16.mxu0 0
  %152 = vmatpush1.bf16.msra.mxu0 0
  %153 = vmatprep.subr.bf16.mxu0 0
  %154 = vmatpush1.bf16.msra.mxu0 0
  %155 = vmatprep.mubr.bf16.mxu0 %v118
  %156 = vmatmul.mubr.bf16.gmra.mrb[0].mxu0 %v56
  %v157 = vpop.f32.mrb[0].mxu0
  %v158 = vadd.f32 %v42, %v157
  %v159 = vpop.f32.mrb[0].mxu0
  %v160 = vpop.f32.mrb[0].mxu0
  %v161 = vadd.f32 %v42, %v160
  %v162 = vpop.f32.mrb[0].mxu0
  %163 = vmatprep.mubr.bf16.mxu0 %v121
  %164 = vmatmul.mubr.bf16.gmra.mrb[0].mxu0 %v58
  %v165 = vpop.f32.mrb[0].mxu0
  %v166 = vadd.f32 %v42, %v165
  %v167 = vpop.f32.mrb[0].mxu0
  %v168 = vpop.f32.mrb[0].mxu0
  %v169 = vadd.f32 %v42, %v168
  %v170 = vpop.f32.mrb[0].mxu0
  %171 = vdwg.mxu0
  %v172 = vmax.f32 %v158, 0.0
  %v173 = vmax.f32 %v161, 0.0
  %v174 = vmax.f32 %v166, 0.0
  %v175 = vmax.f32 %v169, 0.0
  %176 = vst.msk [vmem:[%s3] sm:$0xff] %vm116, %v172
  %177 = vst.msk [vmem:[%s3 + $0x8] sm:$0xff] %vm116, %v173
  %178 = vst.msk [vmem:[%s3 + $0x10] sm:$0xff] %vm116, %v174
  %179 = vst.msk [vmem:[%s3 + $0x18] sm:$0xff] %vm116, %v175
  // Predicated region
  $region14: #{xssd_forward.6} parent=0 // pred_check
    _
  $region15: #{xssd_forward.6} parent=0 // pred_check_branch
    %181 = sbr.rel (0) target = $region17
  $region16: #{xssd_forward.6} parent=0 // pred_region
    _
  $region17: #{xssd_forward.6} parent=0 // pred_fallthru
    _
  // Predicated region
  $region18: #{xssd_forward.6} parent=0 // pred_check
    _
  $region19: #{xssd_forward.6} parent=0 // pred_check_branch
    %183 = sbr.rel (0) target = $region21
  $region20: #{xssd_forward.6} parent=0 // pred_region
    _
  $region21: #{xssd_forward.6} parent=0 // pred_fallthru
    _

// kernel: squeeze.6
$region0: #{squeeze.6}
  %s0 = inlined_call_operand.vmem [shape: f32[1,128,15], index: 0, kind: input, shape index: {}]
  %s1 = inlined_call_operand.vmem [shape: f32[2,960], index: 1, kind: output, shape index: {}]
  $region1: #{squeeze.6} parent=0
    #allocation0 [shape = 'u8[32768]{0}', space=vmem, size = 0x8000, scoped, tag = 'scoped mem for output reshape']
    %v2 = vld [vmem:[%s0] sm:$0x1]
    %s3 = scalar_lea.vmem %s0, 63
    %v4 = vld [vmem:[%s3] sm:$0x2]
    %vm5 = vcmask 1041409
    %v6 = vsel %vm5, %v4, %v2
    %vm7 = vcmask 121856
    %8 = vst.msk [vmem:[#allocation0] sm:$0x3] %vm7, %v6
    %s9 = scalar_lea.vmem %s0, 17
    %v10 = vld [vmem:[%s9] sm:$0x1]
    %s11 = scalar_lea.vmem %s0, 80
    %v12 = vld [vmem:[%s11] sm:$0x2]
    %vm13 = vcmask 1041409
    %v14 = vsel %vm13, %v12, %v10
    %s15 = scalar_lea.vmem %s0, 17
    %v16 = vld [vmem:[%s15] sm:$0x1]
    %s17 = scalar_lea.vmem %s0, 80
    %v18 = vld [vmem:[%s17] sm:$0x2]
    %vm19 = vcmask 1041409
    %v20 = vsel %vm19, %v18, %v16
    %vm21 = vcmask 7168
    %v22 = vsel %vm21, %v20, %v14
    %23 = vrot.lane.b32.xlu0 %v22, 127
    %v24 = vpop.permute.xlu0 %23
    %vm25 = vcmask 113664
    %s26 = scalar_lea.vmem [#allocation0], 16
    %27 = vst.msk [vmem:[%s26] sm:$0x3] %vm25, %v24
    %vm28 = vcmask 1048568
    %s29 = scalar_lea.vmem [#allocation0], 8
    %30 = vst.msk [vmem:[%s29] sm:$0x3] %vm28, %v24
    %s31 = scalar_lea.vmem %s0, 34
    %v32 = vld [vmem:[%s31] sm:$0x1]
    %s33 = scalar_lea.vmem %s0, 97
    %v34 = vld [vmem:[%s33] sm:$0x2]
    %vm35 = vcmask 1041409
    %v36 = vsel %vm35, %v34, %v32
    %s37 = scalar_lea.vmem %s0, 34
    %v38 = vld [vmem:[%s37] sm:$0x1]
    %s39 = scalar_lea.vmem %s0, 97
    %v40 = vld [vmem:[%s39] sm:$0x2]
    %vm41 = vcmask 1041409
    %v42 = vsel %vm41, %v40, %v38
    %vm43 = vcmask 15360
    %v44 = vsel %vm43, %v42, %v36
    %45 = vrot.lane.b32.xlu0 %v44, 126
    %v46 = vpop.permute.xlu0 %45
    %vm47 = vcmask 105472
    %s48 = scalar_lea.vmem [#allocation0], 32
    %49 = vst.msk [vmem:[%s48] sm:$0x3] %vm47, %v46
    %vm50 = vcmask 1048560
    %s51 = scalar_lea.vmem [#allocation0], 24
    %52 = vst.msk [vmem:[%s51] sm:$0x3] %vm50, %v46
    %s53 = scalar_lea.vmem %s0, 51
    %v54 = vld [vmem:[%s53] sm:$0x1]
    %s55 = scalar_lea.vmem %s0, 114
    %v56 = vld [vmem:[%s55] sm:$0x2]
    %vm57 = vcmask 1041409
    %v58 = vsel %vm57, %v56, %v54
    %s59 = scalar_lea.vmem %s0, 51
    %v60 = vld [vmem:[%s59] sm:$0x1]
    %s61 = scalar_lea.vmem %s0, 114
    %v62 = vld [vmem:[%s61] sm:$0x2]
    %vm63 = vcmask 1041409
    %v64 = vsel %vm63, %v62, %v60
    %vm65 = vcmask 23552
    %v66 = vsel %vm65, %v64, %v58
    %67 = vrot.lane.b32.xlu0 %v66, 125
    %v68 = vpop.permute.xlu0 %67
    %vm69 = vcmask 97280
    %s70 = scalar_lea.vmem [#allocation0], 48
    %71 = vst.msk [vmem:[%s70] sm:$0x3] %vm69, %v68
    %vm72 = vcmask 1048552
    %s73 = scalar_lea.vmem [#allocation0], 40
    %74 = vst.msk [vmem:[%s73] sm:$0x3] %vm72, %v68
    %s75 = scalar_lea.vmem %s0, 8
    %v76 = vld [vmem:[%s75] sm:$0x1]
    %s77 = scalar_lea.vmem %s0, 71
    %v78 = vld [vmem:[%s77] sm:$0x2]
    %vm79 = vcmask 1041409
    %v80 = vsel %vm79, %v78, %v76
    %s81 = scalar_lea.vmem %s0, 8
    %v82 = vld [vmem:[%s81] sm:$0x1]
    %s83 = scalar_lea.vmem %s0, 71
    %v84 = vld [vmem:[%s83] sm:$0x2]
    %vm85 = vcmask 1041409
    %v86 = vsel %vm85, %v84, %v82
    %vm87 = vcmask 64512
    %v88 = vsel %vm87, %v86, %v80
    %89 = vrot.lane.b32.xlu0 %v88, 120
    %v90 = vpop.permute.xlu0 %89
    %vm91 = vcmask 56320
    %s92 = scalar_lea.vmem [#allocation0], 8
    %93 = vst.msk [vmem:[%s92] sm:$0x3] %vm91, %v90
    %vm94 = vcmask 1048512
    %95 = vst.msk [vmem:[#allocation0] sm:$0x3] %vm94, %v90
    %s96 = scalar_lea.vmem %s0, 25
    %v97 = vld [vmem:[%s96] sm:$0x1]
    %s98 = scalar_lea.vmem %s0, 88
    %v99 = vld [vmem:[%s98] sm:$0x2]
    %vm100 = vcmask 1041409
    %v101 = vsel %vm100, %v99, %v97
    %s102 = scalar_lea.vmem %s0, 25
    %v103 = vld [vmem:[%s102] sm:$0x1]
    %s104 = scalar_lea.vmem %s0, 88
    %v105 = vld [vmem:[%s104] sm:$0x2]
    %vm106 = vcmask 1041409
    %v107 = vsel %vm106, %v105, %v103
    %vm108 = vcmask 72704
    %v109 = vsel %vm108, %v107, %v101
    %110 = vrot.lane.b32.xlu0 %v109, 119
    %v111 = vpop.permute.xlu0 %110
    %vm112 = vcmask 48128
    %s113 = scalar_lea.vmem [#allocation0], 24
    %114 = vst.msk [vmem:[%s113] sm:$0x3] %vm112, %v111
    %vm115 = vcmask 1048504
    %s116 = scalar_lea.vmem [#allocation0], 16
    %117 = vst.msk [vmem:[%s116] sm:$0x3] %vm115, %v111
    %s118 = scalar_lea.vmem %s0, 42
    %v119 = vld [vmem:[%s118] sm:$0x1]
    %s120 = scalar_lea.vmem %s0, 105
    %v121 = vld [vmem:[%s120] sm:$0x2]
    %vm122 = vcmask 1041409
    %v123 = vsel %vm122, %v121, %v119
    %s124 = scalar_lea.vmem %s0, 42
    %v125 = vld [vmem:[%s124] sm:$0x1]
    %s126 = scalar_lea.vmem %s0, 105
    %v127 = vld [vmem:[%s126] sm:$0x2]
    %vm128 = vcmask 1041409
    %v129 = vsel %vm128, %v127, %v125
    %vm130 = vcmask 80896
    %v131 = vsel %vm130, %v129, %v123
    %132 = vrot.lane.b32.xlu0 %v131, 118
    %v133 = vpop.permute.xlu0 %132
    %vm134 = vcmask 39936
    %s135 = scalar_lea.vmem [#allocation0], 40
    %136 = vst.msk [vmem:[%s135] sm:$0x3] %vm134, %v133
    %vm137 = vcmask 1048496
    %s138 = scalar_lea.vmem [#allocation0], 32
    %139 = vst.msk [vmem:[%s138] sm:$0x3] %vm137, %v133
    %s140 = scalar_lea.vmem %s0, 59
    %v141 = vld [vmem:[%s140] sm:$0x1]
    %s142 = scalar_lea.vmem %s0, 122
    %v143 = vld [vmem:[%s142] sm:$0x2]
    %vm144 = vcmask 1041409
    %v145 = vsel %vm144, %v143, %v141
    %s146 = scalar_lea.vmem %s0, 59
    %v147 = vld [vmem:[%s146] sm:$0x1]
    %s148 = scalar_lea.vmem %s0, 122
    %v149 = vld [vmem:[%s148] sm:$0x2]
    %vm150 = vcmask 1041409
    %v151 = vsel %vm150, %v149, %v147
    %vm152 = vcmask 89088
    %v153 = vsel %vm152, %v151, %v145
    %154 = vrot.lane.b32.xlu0 %v153, 117
    %v155 = vpop.permute.xlu0 %154
    %vm156 = vcmask 31744
    %s157 = scalar_lea.vmem [#allocation0], 56
    %158 = vst.msk [vmem:[%s157] sm:$0x3] %vm156, %v155
    %vm159 = vcmask 1048488
    %s160 = scalar_lea.vmem [#allocation0], 48
    %161 = vst.msk [vmem:[%s160] sm:$0x3] %vm159, %v155
    %s162 = scalar_lea.vmem %s0, 16
    %v163 = vld [vmem:[%s162] sm:$0x1]
    %s164 = scalar_lea.vmem %s0, 79
    %v165 = vld [vmem:[%s164] sm:$0x2]
    %vm166 = vcmask 1041409
    %v167 = vsel %vm166, %v165, %v163
    %168 = vrot.lane.b32.xlu0 %v167, 112
    %v169 = vpop.permute.xlu0 %168
    %vm170 = vcmask 1040256
    %s171 = scalar_lea.vmem [#allocation0], 8
    %172 = vst.msk [vmem:[%s171] sm:$0x3] %vm170, %v169
    %s173 = scalar_lea.vmem %s0, 33
    %v174 = vld [vmem:[%s173] sm:$0x1]
    %s175 = scalar_lea.vmem %s0, 96
    %v176 = vld [vmem:[%s175] sm:$0x2]
    %vm177 = vcmask 1041409
    %v178 = vsel %vm177, %v176, %v174
    %179 = vrot.lane.b32.xlu0 %v178, 111
    %v180 = vpop.permute.xlu0 %179
    %vm181 = vcmask 1032056
    %s182 = scalar_lea.vmem [#allocation0], 24
    %183 = vst.msk [vmem:[%s182] sm:$0x3] %vm181, %v180
    %s184 = scalar_lea.vmem %s0, 50
    %v185 = vld [vmem:[%s184] sm:$0x1]
    %s186 = scalar_lea.vmem %s0, 113
    %v187 = vld [vmem:[%s186] sm:$0x2]
    %vm188 = vcmask 1041409
    %v189 = vsel %vm188, %v187, %v185
    %190 = vrot.lane.b32.xlu0 %v189, 110
    %v191 = vpop.permute.xlu0 %190
    %vm192 = vcmask 1023856
    %s193 = scalar_lea.vmem [#allocation0], 40
    %194 = vst.msk [vmem:[%s193] sm:$0x3] %vm192, %v191
    %s195 = scalar_lea.vmem %s0, 7
    %v196 = vld [vmem:[%s195] sm:$0x1]
    %s197 = scalar_lea.vmem %s0, 70
    %v198 = vld [vmem:[%s197] sm:$0x2]
    %vm199 = vcmask 1041409
    %v200 = vsel %vm199, %v198, %v196
    %201 = vrot.lane.b32.xlu0 %v200, 105
    %v202 = vpop.permute.xlu0 %201
    %vm203 = vcmask 982856
    %204 = vst.msk [vmem:[#allocation0] sm:$0x3] %vm203, %v202
    %s205 = scalar_lea.vmem %s0, 24
    %v206 = vld [vmem:[%s205] sm:$0x1]
    %s207 = scalar_lea.vmem %s0, 87
    %v208 = vld [vmem:[%s207] sm:$0x2]
    %vm209 = vcmask 1041409
    %v210 = vsel %vm209, %v208, %v206
    %211 = vrot.lane.b32.xlu0 %v210, 104
    %v212 = vpop.permute.xlu0 %211
    %vm213 = vcmask 974656
    %s214 = scalar_lea.vmem [#allocation0], 16
    %215 = vst.msk [vmem:[%s214] sm:$0x3] %vm213, %v212
    %s216 = scalar_lea.vmem %s0, 41
    %v217 = vld [vmem:[%s216] sm:$0x1]
    %s218 = scalar_lea.vmem %s0, 104
    %v219 = vld [vmem:[%s218] sm:$0x2]
    %vm220 = vcmask 1041409
    %v221 = vsel %vm220, %v219, %v217
    %222 = vrot.lane.b32.xlu0 %v221, 103
    %v223 = vpop.permute.xlu0 %222
    %vm224 = vcmask 966456
    %s225 = scalar_lea.vmem [#allocation0], 32
    %226 = vst.msk [vmem:[%s225] sm:$0x3] %vm224, %v223
    %s227 = scalar_lea.vmem %s0, 58
    %v228 = vld [vmem:[%s227] sm:$0x1]
    %s229 = scalar_lea.vmem %s0, 121
    %v230 = vld [vmem:[%s229] sm:$0x2]
    %vm231 = vcmask 1041409
    %v232 = vsel %vm231, %v230, %v228
    %233 = vrot.lane.b32.xlu0 %v232, 102
    %v234 = vpop.permute.xlu0 %233
    %vm235 = vcmask 958256
    %s236 = scalar_lea.vmem [#allocation0], 48
    %237 = vst.msk [vmem:[%s236] sm:$0x3] %vm235, %v234
    %s238 = scalar_lea.vmem %s0, 15
    %v239 = vld [vmem:[%s238] sm:$0x1]
    %s240 = scalar_lea.vmem %s0, 78
    %v241 = vld [vmem:[%s240] sm:$0x2]
    %vm242 = vcmask 1041409
    %v243 = vsel %vm242, %v241, %v239
    %244 = vrot.lane.b32.xlu0 %v243, 97
    %v245 = vpop.permute.xlu0 %244
    %vm246 = vcmask 917256
    %s247 = scalar_lea.vmem [#allocation0], 8
    %248 = vst.msk [vmem:[%s247] sm:$0x3] %vm246, %v245
    %s249 = scalar_lea.vmem %s0, 32
    %v250 = vld [vmem:[%s249] sm:$0x1]
    %s251 = scalar_lea.vmem %s0, 95
    %v252 = vld [vmem:[%s251] sm:$0x2]
    %vm253 = vcmask 1041409
    %v254 = vsel %vm253, %v252, %v250
    %255 = vrot.lane.b32.xlu0 %v254, 96
    %v256 = vpop.permute.xlu0 %255
    %vm257 = vcmask 909056
    %s258 = scalar_lea.vmem [#allocation0], 24
    %259 = vst.msk [vmem:[%s258] sm:$0x3] %vm257, %v256
    %s260 = scalar_lea.vmem %s0, 49
    %v261 = vld [vmem:[%s260] sm:$0x1]
    %s262 = scalar_lea.vmem %s0, 112
    %v263 = vld [vmem:[%s262] sm:$0x2]
    %vm264 = vcmask 1041409
    %v265 = vsel %vm264, %v263, %v261
    %266 = vrot.lane.b32.xlu0 %v265, 95
    %v267 = vpop.permute.xlu0 %266
    %vm268 = vcmask 900856
    %s269 = scalar_lea.vmem [#allocation0], 40
    %270 = vst.msk [vmem:[%s269] sm:$0x3] %vm268, %v267
    %s271 = scalar_lea.vmem %s0, 6
    %v272 = vld [vmem:[%s271] sm:$0x1]
    %s273 = scalar_lea.vmem %s0, 69
    %v274 = vld [vmem:[%s273] sm:$0x2]
    %vm275 = vcmask 1041409
    %v276 = vsel %vm275, %v274, %v272
    %277 = vrot.lane.b32.xlu0 %v276, 90
    %v278 = vpop.permute.xlu0 %277
    %vm279 = vcmask 859856
    %280 = vst.msk [vmem:[#allocation0] sm:$0x3] %vm279, %v278
    %s281 = scalar_lea.vmem %s0, 23
    %v282 = vld [vmem:[%s281] sm:$0x1]
    %s283 = scalar_lea.vmem %s0, 86
    %v284 = vld [vmem:[%s283] sm:$0x2]
    %vm285 = vcmask 1041409
    %v286 = vsel %vm285, %v284, %v282
    %287 = vrot.lane.b32.xlu0 %v286, 89
    %v288 = vpop.permute.xlu0 %287
    %vm289 = vcmask 851656
    %s290 = scalar_lea.vmem [#allocation0], 16
    %291 = vst.msk [vmem:[%s290] sm:$0x3] %vm289, %v288
    %s292 = scalar_lea.vmem %s0, 40
    %v293 = vld [vmem:[%s292] sm:$0x1]
    %s294 = scalar_lea.vmem %s0, 103
    %v295 = vld [vmem:[%s294] sm:$0x2]
    %vm296 = vcmask 1041409
    %v297 = vsel %vm296, %v295, %v293
    %298 = vrot.lane.b32.xlu0 %v297, 88
    %v299 = vpop.permute.xlu0 %298
    %vm300 = vcmask 843456
    %s301 = scalar_lea.vmem [#allocation0], 32
    %302 = vst.msk [vmem:[%s301] sm:$0x3] %vm300, %v299
    %s303 = scalar_lea.vmem %s0, 57
    %v304 = vld [vmem:[%s303] sm:$0x1]
    %s305 = scalar_lea.vmem %s0, 120
    %v306 = vld [vmem:[%s305] sm:$0x2]
    %vm307 = vcmask 1041409
    %v308 = vsel %vm307, %v306, %v304
    %309 = vrot.lane.b32.xlu0 %v308, 87
    %v310 = vpop.permute.xlu0 %309
    %vm311 = vcmask 835256
    %s312 = scalar_lea.vmem [#allocation0], 48
    %313 = vst.msk [vmem:[%s312] sm:$0x3] %vm311, %v310
    %s314 = scalar_lea.vmem %s0, 14
    %v315 = vld [vmem:[%s314] sm:$0x1]
    %s316 = scalar_lea.vmem %s0, 77
    %v317 = vld [vmem:[%s316] sm:$0x2]
    %vm318 = vcmask 1041409
    %v319 = vsel %vm318, %v317, %v315
    %320 = vrot.lane.b32.xlu0 %v319, 82
    %v321 = vpop.permute.xlu0 %320
    %vm322 = vcmask 794256
    %s323 = scalar_lea.vmem [#allocation0], 8
    %324 = vst.msk [vmem:[%s323] sm:$0x3] %vm322, %v321
    %s325 = scalar_lea.vmem %s0, 31
    %v326 = vld [vmem:[%s325] sm:$0x1]
    %s327 = scalar_lea.vmem %s0, 94
    %v328 = vld [vmem:[%s327] sm:$0x2]
    %vm329 = vcmask 1041409
    %v330 = vsel %vm329, %v328, %v326
    %331 = vrot.lane.b32.xlu0 %v330, 81
    %v332 = vpop.permute.xlu0 %331
    %vm333 = vcmask 786056
    %s334 = scalar_lea.vmem [#allocation0], 24
    %335 = vst.msk [vmem:[%s334] sm:$0x3] %vm333, %v332
    %s336 = scalar_lea.vmem %s0, 48
    %v337 = vld [vmem:[%s336] sm:$0x1]
    %s338 = scalar_lea.vmem %s0, 111
    %v339 = vld [vmem:[%s338] sm:$0x2]
    %vm340 = vcmask 1041409
    %v341 = vsel %vm340, %v339, %v337
    %342 = vrot.lane.b32.xlu0 %v341, 80
    %v343 = vpop.permute.xlu0 %342
    %vm344 = vcmask 777856
    %s345 = scalar_lea.vmem [#allocation0], 40
    %346 = vst.msk [vmem:[%s345] sm:$0x3] %vm344, %v343
    %s347 = scalar_lea.vmem %s0, 5
    %v348 = vld [vmem:[%s347] sm:$0x1]
    %s349 = scalar_lea.vmem %s0, 68
    %v350 = vld [vmem:[%s349] sm:$0x2]
    %vm351 = vcmask 1041409
    %v352 = vsel %vm351, %v350, %v348
    %353 = vrot.lane.b32.xlu0 %v352, 75
    %v354 = vpop.permute.xlu0 %353
    %vm355 = vcmask 736856
    %356 = vst.msk [vmem:[#allocation0] sm:$0x3] %vm355, %v354
    %s357 = scalar_lea.vmem %s0, 22
    %v358 = vld [vmem:[%s357] sm:$0x1]
    %s359 = scalar_lea.vmem %s0, 85
    %v360 = vld [vmem:[%s359] sm:$0x2]
    %vm361 = vcmask 1041409
    %v362 = vsel %vm361, %v360, %v358
    %363 = vrot.lane.b32.xlu0 %v362, 74
    %v364 = vpop.permute.xlu0 %363
    %vm365 = vcmask 728656
    %s366 = scalar_lea.vmem [#allocation0], 16
    %367 = vst.msk [vmem:[%s366] sm:$0x3] %vm365, %v364
    %s368 = scalar_lea.vmem %s0, 39
    %v369 = vld [vmem:[%s368] sm:$0x1]
    %s370 = scalar_lea.vmem %s0, 102
    %v371 = vld [vmem:[%s370] sm:$0x2]
    %vm372 = vcmask 1041409
    %v373 = vsel %vm372, %v371, %v369
    %374 = vrot.lane.b32.xlu0 %v373, 73
    %v375 = vpop.permute.xlu0 %374
    %vm376 = vcmask 720456
    %s377 = scalar_lea.vmem [#allocation0], 32
    %378 = vst.msk [vmem:[%s377] sm:$0x3] %vm376, %v375
    %s379 = scalar_lea.vmem %s0, 56
    %v380 = vld [vmem:[%s379] sm:$0x1]
    %s381 = scalar_lea.vmem %s0, 119
    %v382 = vld [vmem:[%s381] sm:$0x2]
    %vm383 = vcmask 1041409
    %v384 = vsel %vm383, %v382, %v380
    %385 = vrot.lane.b32.xlu0 %v384, 72
    %v386 = vpop.permute.xlu0 %385
    %vm387 = vcmask 712256
    %s388 = scalar_lea.vmem [#allocation0], 48
    %389 = vst.msk [vmem:[%s388] sm:$0x3] %vm387, %v386
    %s390 = scalar_lea.vmem %s0, 13
    %v391 = vld [vmem:[%s390] sm:$0x1]
    %s392 = scalar_lea.vmem %s0, 76
    %v393 = vld [vmem:[%s392] sm:$0x2]
    %vm394 = vcmask 1041409
    %v395 = vsel %vm394, %v393, %v391
    %396 = vrot.lane.b32.xlu0 %v395, 67
    %v397 = vpop.permute.xlu0 %396
    %vm398 = vcmask 671256
    %s399 = scalar_lea.vmem [#allocation0], 8
    %400 = vst.msk [vmem:[%s399] sm:$0x3] %vm398, %v397
    %s401 = scalar_lea.vmem %s0, 30
    %v402 = vld [vmem:[%s401] sm:$0x1]
    %s403 = scalar_lea.vmem %s0, 93
    %v404 = vld [vmem:[%s403] sm:$0x2]
    %vm405 = vcmask 1041409
    %v406 = vsel %vm405, %v404, %v402
    %407 = vrot.lane.b32.xlu0 %v406, 66
    %v408 = vpop.permute.xlu0 %407
    %vm409 = vcmask 663056
    %s410 = scalar_lea.vmem [#allocation0], 24
    %411 = vst.msk [vmem:[%s410] sm:$0x3] %vm409, %v408
    %s412 = scalar_lea.vmem %s0, 47
    %v413 = vld [vmem:[%s412] sm:$0x1]
    %s414 = scalar_lea.vmem %s0, 110
    %v415 = vld [vmem:[%s414] sm:$0x2]
    %vm416 = vcmask 1041409
    %v417 = vsel %vm416, %v415, %v413
    %418 = vrot.lane.b32.xlu0 %v417, 65
    %v419 = vpop.permute.xlu0 %418
    %vm420 = vcmask 654856
    %s421 = scalar_lea.vmem [#allocation0], 40
    %422 = vst.msk [vmem:[%s421] sm:$0x3] %vm420, %v419
    %s423 = scalar_lea.vmem %s0, 4
    %v424 = vld [vmem:[%s423] sm:$0x1]
    %s425 = scalar_lea.vmem %s0, 67
    %v426 = vld [vmem:[%s425] sm:$0x2]
    %vm427 = vcmask 1041409
    %v428 = vsel %vm427, %v426, %v424
    %429 = vrot.lane.b32.xlu0 %v428, 60
    %v430 = vpop.permute.xlu0 %429
    %vm431 = vcmask 613856
    %432 = vst.msk [vmem:[#allocation0] sm:$0x3] %vm431, %v430
    %s433 = scalar_lea.vmem %s0, 21
    %v434 = vld [vmem:[%s433] sm:$0x1]
    %s435 = scalar_lea.vmem %s0, 84
    %v436 = vld [vmem:[%s435] sm:$0x2]
    %vm437 = vcmask 1041409
    %v438 = vsel %vm437, %v436, %v434
    %439 = vrot.lane.b32.xlu0 %v438, 59
    %v440 = vpop.permute.xlu0 %439
    %vm441 = vcmask 605656
    %s442 = scalar_lea.vmem [#allocation0], 16
    %443 = vst.msk [vmem:[%s442] sm:$0x3] %vm441, %v440
    %s444 = scalar_lea.vmem %s0, 38
    %v445 = vld [vmem:[%s444] sm:$0x1]
    %s446 = scalar_lea.vmem %s0, 101
    %v447 = vld [vmem:[%s446] sm:$0x2]
    %vm448 = vcmask 1041409
    %v449 = vsel %vm448, %v447, %v445
    %450 = vrot.lane.b32.xlu0 %v449, 58
    %v451 = vpop.permute.xlu0 %450
    %vm452 = vcmask 597456
    %s453 = scalar_lea.vmem [#allocation0], 32
    %454 = vst.msk [vmem:[%s453] sm:$0x3] %vm452, %v451
    %s455 = scalar_lea.vmem %s0, 55
    %v456 = vld [vmem:[%s455] sm:$0x1]
    %s457 = scalar_lea.vmem %s0, 118
    %v458 = vld [vmem:[%s457] sm:$0x2]
    %vm459 = vcmask 1041409
    %v460 = vsel %vm459, %v458, %v456
    %461 = vrot.lane.b32.xlu0 %v460, 57
    %v462 = vpop.permute.xlu0 %461
    %vm463 = vcmask 589256
    %s464 = scalar_lea.vmem [#allocation0], 48
    %465 = vst.msk [vmem:[%s464] sm:$0x3] %vm463, %v462
    %s466 = scalar_lea.vmem %s0, 12
    %v467 = vld [vmem:[%s466] sm:$0x1]
    %s468 = scalar_lea.vmem %s0, 75
    %v469 = vld [vmem:[%s468] sm:$0x2]
    %vm470 = vcmask 1041409
    %v471 = vsel %vm470, %v469, %v467
    %472 = vrot.lane.b32.xlu0 %v471, 52
    %v473 = vpop.permute.xlu0 %472
    %vm474 = vcmask 548256
    %s475 = scalar_lea.vmem [#allocation0], 8
    %476 = vst.msk [vmem:[%s475] sm:$0x3] %vm474, %v473
    %s477 = scalar_lea.vmem %s0, 29
    %v478 = vld [vmem:[%s477] sm:$0x1]
    %s479 = scalar_lea.vmem %s0, 92
    %v480 = vld [vmem:[%s479] sm:$0x2]
    %vm481 = vcmask 1041409
    %v482 = vsel %vm481, %v480, %v478
    %483 = vrot.lane.b32.xlu0 %v482, 51
    %v484 = vpop.permute.xlu0 %483
    %vm485 = vcmask 540056
    %s486 = scalar_lea.vmem [#allocation0], 24
    %487 = vst.msk [vmem:[%s486] sm:$0x3] %vm485, %v484
    %s488 = scalar_lea.vmem %s0, 46
    %v489 = vld [vmem:[%s488] sm:$0x1]
    %s490 = scalar_lea.vmem %s0, 109
    %v491 = vld [vmem:[%s490] sm:$0x2]
    %vm492 = vcmask 1041409
    %v493 = vsel %vm492, %v491, %v489
    %494 = vrot.lane.b32.xlu0 %v493, 50
    %v495 = vpop.permute.xlu0 %494
    %vm496 = vcmask 531856
    %s497 = scalar_lea.vmem [#allocation0], 40
    %498 = vst.msk [vmem:[%s497] sm:$0x3] %vm496, %v495
    %s499 = scalar_lea.vmem %s0, 63
    %v500 = vld [vmem:[%s499] sm:$0x1]
    %s501 = scalar_lea.vmem %s0, 126
    %v502 = vld [vmem:[%s501] sm:$0x2]
    %vm503 = vcmask 1041409
    %v504 = vsel %vm503, %v502, %v500
    %505 = vrot.lane.b32.xlu0 %v504, 49
    %v506 = vpop.permute.xlu0 %505
    %vm507 = vcmask 523656
    %s508 = scalar_lea.vmem [#allocation0], 56
    %509 = vst.msk [vmem:[%s508] sm:$0x3] %vm507, %v506
    %s510 = scalar_lea.vmem %s0, 3
    %v511 = vld [vmem:[%s510] sm:$0x1]
    %s512 = scalar_lea.vmem %s0, 66
    %v513 = vld [vmem:[%s512] sm:$0x2]
    %vm514 = vcmask 1041409
    %v515 = vsel %vm514, %v513, %v511
    %516 = vrot.lane.b32.xlu0 %v515, 45
    %v517 = vpop.permute.xlu0 %516
    %vm518 = vcmask 490856
    %519 = vst.msk [vmem:[#allocation0] sm:$0x3] %vm518, %v517
    %s520 = scalar_lea.vmem %s0, 20
    %v521 = vld [vmem:[%s520] sm:$0x1]
    %s522 = scalar_lea.vmem %s0, 83
    %v523 = vld [vmem:[%s522] sm:$0x2]
    %vm524 = vcmask 1041409
    %v525 = vsel %vm524, %v523, %v521
    %526 = vrot.lane.b32.xlu0 %v525, 44
    %v527 = vpop.permute.xlu0 %526
    %vm528 = vcmask 482656
    %s529 = scalar_lea.vmem [#allocation0], 16
    %530 = vst.msk [vmem:[%s529] sm:$0x3] %vm528, %v527
    %s531 = scalar_lea.vmem %s0, 37
    %v532 = vld [vmem:[%s531] sm:$0x1]
    %s533 = scalar_lea.vmem %s0, 100
    %v534 = vld [vmem:[%s533] sm:$0x2]
    %vm535 = vcmask 1041409
    %v536 = vsel %vm535, %v534, %v532
    %537 = vrot.lane.b32.xlu0 %v536, 43
    %v538 = vpop.permute.xlu0 %537
    %vm539 = vcmask 474456
    %s540 = scalar_lea.vmem [#allocation0], 32
    %541 = vst.msk [vmem:[%s540] sm:$0x3] %vm539, %v538
    %s542 = scalar_lea.vmem %s0, 54
    %v543 = vld [vmem:[%s542] sm:$0x1]
    %s544 = scalar_lea.vmem %s0, 117
    %v545 = vld [vmem:[%s544] sm:$0x2]
    %vm546 = vcmask 1041409
    %v547 = vsel %vm546, %v545, %v543
    %548 = vrot.lane.b32.xlu0 %v547, 42
    %v549 = vpop.permute.xlu0 %548
    %vm550 = vcmask 466256
    %s551 = scalar_lea.vmem [#allocation0], 48
    %552 = vst.msk [vmem:[%s551] sm:$0x3] %vm550, %v549
    %s553 = scalar_lea.vmem %s0, 11
    %v554 = vld [vmem:[%s553] sm:$0x1]
    %s555 = scalar_lea.vmem %s0, 74
    %v556 = vld [vmem:[%s555] sm:$0x2]
    %vm557 = vcmask 1041409
    %v558 = vsel %vm557, %v556, %v554
    %559 = vrot.lane.b32.xlu0 %v558, 37
    %v560 = vpop.permute.xlu0 %559
    %vm561 = vcmask 425256
    %s562 = scalar_lea.vmem [#allocation0], 8
    %563 = vst.msk [vmem:[%s562] sm:$0x3] %vm561, %v560
    %s564 = scalar_lea.vmem %s0, 28
    %v565 = vld [vmem:[%s564] sm:$0x1]
    %s566 = scalar_lea.vmem %s0, 91
    %v567 = vld [vmem:[%s566] sm:$0x2]
    %vm568 = vcmask 1041409
    %v569 = vsel %vm568, %v567, %v565
    %570 = vrot.lane.b32.xlu0 %v569, 36
    %v571 = vpop.permute.xlu0 %570
    %vm572 = vcmask 417056
    %s573 = scalar_lea.vmem [#allocation0], 24
    %574 = vst.msk [vmem:[%s573] sm:$0x3] %vm572, %v571
    %s575 = scalar_lea.vmem %s0, 45
    %v576 = vld [vmem:[%s575] sm:$0x1]
    %s577 = scalar_lea.vmem %s0, 108
    %v578 = vld [vmem:[%s577] sm:$0x2]
    %vm579 = vcmask 1041409
    %v580 = vsel %vm579, %v578, %v576
    %581 = vrot.lane.b32.xlu0 %v580, 35
    %v582 = vpop.permute.xlu0 %581
    %vm583 = vcmask 408856
    %s584 = scalar_lea.vmem [#allocation0], 40
    %585 = vst.msk [vmem:[%s584] sm:$0x3] %vm583, %v582
    %s586 = scalar_lea.vmem %s0, 62
    %v587 = vld [vmem:[%s586] sm:$0x1]
    %s588 = scalar_lea.vmem %s0, 125
    %v589 = vld [vmem:[%s588] sm:$0x2]
    %vm590 = vcmask 1041409
    %v591 = vsel %vm590, %v589, %v587
    %592 = vrot.lane.b32.xlu0 %v591, 34
    %v593 = vpop.permute.xlu0 %592
    %vm594 = vcmask 400656
    %s595 = scalar_lea.vmem [#allocation0], 56
    %596 = vst.msk [vmem:[%s595] sm:$0x3] %vm594, %v593
    %s597 = scalar_lea.vmem %s0, 2
    %v598 = vld [vmem:[%s597] sm:$0x1]
    %s599 = scalar_lea.vmem %s0, 65
    %v600 = vld [vmem:[%s599] sm:$0x2]
    %vm601 = vcmask 1041409
    %v602 = vsel %vm601, %v600, %v598
    %603 = vrot.lane.b32.xlu0 %v602, 30
    %v604 = vpop.permute.xlu0 %603
    %vm605 = vcmask 367856
    %606 = vst.msk [vmem:[#allocation0] sm:$0x3] %vm605, %v604
    %s607 = scalar_lea.vmem %s0, 19
    %v608 = vld [vmem:[%s607] sm:$0x1]
    %s609 = scalar_lea.vmem %s0, 82
    %v610 = vld [vmem:[%s609] sm:$0x2]
    %vm611 = vcmask 1041409
    %v612 = vsel %vm611, %v610, %v608
    %613 = vrot.lane.b32.xlu0 %v612, 29
    %v614 = vpop.permute.xlu0 %613
    %vm615 = vcmask 359656
    %s616 = scalar_lea.vmem [#allocation0], 16
    %617 = vst.msk [vmem:[%s616] sm:$0x3] %vm615, %v614
    %s618 = scalar_lea.vmem %s0, 36
    %v619 = vld [vmem:[%s618] sm:$0x1]
    %s620 = scalar_lea.vmem %s0, 99
    %v621 = vld [vmem:[%s620] sm:$0x2]
    %vm622 = vcmask 1041409
    %v623 = vsel %vm622, %v621, %v619
    %624 = vrot.lane.b32.xlu0 %v623, 28
    %v625 = vpop.permute.xlu0 %624
    %vm626 = vcmask 351456
    %s627 = scalar_lea.vmem [#allocation0], 32
    %628 = vst.msk [vmem:[%s627] sm:$0x3] %vm626, %v625
    %s629 = scalar_lea.vmem %s0, 53
    %v630 = vld [vmem:[%s629] sm:$0x1]
    %s631 = scalar_lea.vmem %s0, 116
    %v632 = vld [vmem:[%s631] sm:$0x2]
    %vm633 = vcmask 1041409
    %v634 = vsel %vm633, %v632, %v630
    %635 = vrot.lane.b32.xlu0 %v634, 27
    %v636 = vpop.permute.xlu0 %635
    %vm637 = vcmask 343256
    %s638 = scalar_lea.vmem [#allocation0], 48
    %639 = vst.msk [vmem:[%s638] sm:$0x3] %vm637, %v636
    %s640 = scalar_lea.vmem %s0, 10
    %v641 = vld [vmem:[%s640] sm:$0x1]
    %s642 = scalar_lea.vmem %s0, 73
    %v643 = vld [vmem:[%s642] sm:$0x2]
    %vm644 = vcmask 1041409
    %v645 = vsel %vm644, %v643, %v641
    %646 = vrot.lane.b32.xlu0 %v645, 22
    %v647 = vpop.permute.xlu0 %646
    %vm648 = vcmask 302256
    %s649 = scalar_lea.vmem [#allocation0], 8
    %650 = vst.msk [vmem:[%s649] sm:$0x3] %vm648, %v647
    %s651 = scalar_lea.vmem %s0, 27
    %v652 = vld [vmem:[%s651] sm:$0x1]
    %s653 = scalar_lea.vmem %s0, 90
    %v654 = vld [vmem:[%s653] sm:$0x2]
    %vm655 = vcmask 1041409
    %v656 = vsel %vm655, %v654, %v652
    %657 = vrot.lane.b32.xlu0 %v656, 21
    %v658 = vpop.permute.xlu0 %657
    %vm659 = vcmask 294056
    %s660 = scalar_lea.vmem [#allocation0], 24
    %661 = vst.msk [vmem:[%s660] sm:$0x3] %vm659, %v658
    %s662 = scalar_lea.vmem %s0, 44
    %v663 = vld [vmem:[%s662] sm:$0x1]
    %s664 = scalar_lea.vmem %s0, 107
    %v665 = vld [vmem:[%s664] sm:$0x2]
    %vm666 = vcmask 1041409
    %v667 = vsel %vm666, %v665, %v663
    %668 = vrot.lane.b32.xlu0 %v667, 20
    %v669 = vpop.permute.xlu0 %668
    %vm670 = vcmask 285856
    %s671 = scalar_lea.vmem [#allocation0], 40
    %672 = vst.msk [vmem:[%s671] sm:$0x3] %vm670, %v669
    %s673 = scalar_lea.vmem %s0, 61
    %v674 = vld [vmem:[%s673] sm:$0x1]
    %s675 = scalar_lea.vmem %s0, 124
    %v676 = vld [vmem:[%s675] sm:$0x2]
    %vm677 = vcmask 1041409
    %v678 = vsel %vm677, %v676, %v674
    %679 = vrot.lane.b32.xlu0 %v678, 19
    %v680 = vpop.permute.xlu0 %679
    %vm681 = vcmask 277656
    %s682 = scalar_lea.vmem [#allocation0], 56
    %683 = vst.msk [vmem:[%s682] sm:$0x3] %vm681, %v680
    %s684 = scalar_lea.vmem %s0, 1
    %v685 = vld [vmem:[%s684] sm:$0x1]
    %s686 = scalar_lea.vmem %s0, 64
    %v687 = vld [vmem:[%s686] sm:$0x2]
    %vm688 = vcmask 1041409
    %v689 = vsel %vm688, %v687, %v685
    %690 = vrot.lane.b32.xlu0 %v689, 15
    %v691 = vpop.permute.xlu0 %690
    %vm692 = vcmask 244856
    %693 = vst.msk [vmem:[#allocation0] sm:$0x3] %vm692, %v691
    %s694 = scalar_lea.vmem %s0, 18
    %v695 = vld [vmem:[%s694] sm:$0x1]
    %s696 = scalar_lea.vmem %s0, 81
    %v697 = vld [vmem:[%s696] sm:$0x2]
    %vm698 = vcmask 1041409
    %v699 = vsel %vm698, %v697, %v695
    %700 = vrot.lane.b32.xlu0 %v699, 14
    %v701 = vpop.permute.xlu0 %700
    %vm702 = vcmask 236656
    %s703 = scalar_lea.vmem [#allocation0], 16
    %704 = vst.msk [vmem:[%s703] sm:$0x3] %vm702, %v701
    %s705 = scalar_lea.vmem %s0, 35
    %v706 = vld [vmem:[%s705] sm:$0x1]
    %s707 = scalar_lea.vmem %s0, 98
    %v708 = vld [vmem:[%s707] sm:$0x2]
    %vm709 = vcmask 1041409
    %v710 = vsel %vm709, %v708, %v706
    %711 = vrot.lane.b32.xlu0 %v710, 13
    %v712 = vpop.permute.xlu0 %711
    %vm713 = vcmask 228456
    %s714 = scalar_lea.vmem [#allocation0], 32
    %715 = vst.msk [vmem:[%s714] sm:$0x3] %vm713, %v712
    %s716 = scalar_lea.vmem %s0, 52
    %v717 = vld [vmem:[%s716] sm:$0x1]
    %s718 = scalar_lea.vmem %s0, 115
    %v719 = vld [vmem:[%s718] sm:$0x2]
    %vm720 = vcmask 1041409
    %v721 = vsel %vm720, %v719, %v717
    %722 = vrot.lane.b32.xlu0 %v721, 12
    %v723 = vpop.permute.xlu0 %722
    %vm724 = vcmask 220256
    %s725 = scalar_lea.vmem [#allocation0], 48
    %726 = vst.msk [vmem:[%s725] sm:$0x3] %vm724, %v723
    %s727 = scalar_lea.vmem %s0, 9
    %v728 = vld [vmem:[%s727] sm:$0x1]
    %s729 = scalar_lea.vmem %s0, 72
    %v730 = vld [vmem:[%s729] sm:$0x2]
    %vm731 = vcmask 1041409
    %v732 = vsel %vm731, %v730, %v728
    %733 = vrot.lane.b32.xlu0 %v732, 7
    %v734 = vpop.permute.xlu0 %733
    %vm735 = vcmask 179256
    %s736 = scalar_lea.vmem [#allocation0], 8
    %737 = vst.msk [vmem:[%s736] sm:$0x3] %vm735, %v734
    %s738 = scalar_lea.vmem %s0, 26
    %v739 = vld [vmem:[%s738] sm:$0x1]
    %s740 = scalar_lea.vmem %s0, 89
    %v741 = vld [vmem:[%s740] sm:$0x2]
    %vm742 = vcmask 1041409
    %v743 = vsel %vm742, %v741, %v739
    %744 = vrot.lane.b32.xlu0 %v743, 6
    %v745 = vpop.permute.xlu0 %744
    %vm746 = vcmask 171056
    %s747 = scalar_lea.vmem [#allocation0], 24
    %748 = vst.msk [vmem:[%s747] sm:$0x3] %vm746, %v745
    %s749 = scalar_lea.vmem %s0, 43
    %v750 = vld [vmem:[%s749] sm:$0x1]
    %s751 = scalar_lea.vmem %s0, 106
    %v752 = vld [vmem:[%s751] sm:$0x2]
    %vm753 = vcmask 1041409
    %v754 = vsel %vm753, %v752, %v750
    %755 = vrot.lane.b32.xlu0 %v754, 5
    %v756 = vpop.permute.xlu0 %755
    %vm757 = vcmask 162856
    %s758 = scalar_lea.vmem [#allocation0], 40
    %759 = vst.msk [vmem:[%s758] sm:$0x3] %vm757, %v756
    %s760 = scalar_lea.vmem %s0, 60
    %v761 = vld [vmem:[%s760] sm:$0x1]
    %s762 = scalar_lea.vmem %s0, 123
    %v763 = vld [vmem:[%s762] sm:$0x2]
    %vm764 = vcmask 1041409
    %v765 = vsel %vm764, %v763, %v761
    %766 = vrot.lane.b32.xlu0 %v765, 4
    %v767 = vpop.permute.xlu0 %766
    %vm768 = vcmask 154656
    %s769 = scalar_lea.vmem [#allocation0], 56
    %770 = vst.msk [vmem:[%s769] sm:$0x3] %vm768, %v767
    %s772 = sshllo.u32 0, 2
    %v774 = vld [vmem:[#allocation0] sm:%s772]
    %s775 = sshllo.u32 0, 2
    %776 = vst [vmem:[%s1] sm:%s775] %v774
    %s777 = scalar_lea.vmem [#allocation0], 8
    %v778 = vld [vmem:[%s777] sm:%s772]
    %s779 = sshllo.u32 0, 2
    %s780 = scalar_lea.vmem %s1, 2
    %781 = vst [vmem:[%s780] sm:%s779] %v778
    %s782 = scalar_lea.vmem [#allocation0], 16
    %v783 = vld [vmem:[%s782] sm:%s772]
    %s784 = sshllo.u32 0, 2
    %s785 = smul.addr 2, 2
    %s786 = scalar_lea.vmem %s1, %s785
    %787 = vst [vmem:[%s786] sm:%s784] %v783
    %s788 = scalar_lea.vmem [#allocation0], 24
    %v789 = vld [vmem:[%s788] sm:%s772]
    %s790 = sshllo.u32 0, 2
    %s791 = smul.addr 2, 3
    %s792 = scalar_lea.vmem %s1, %s791
    %793 = vst [vmem:[%s792] sm:%s790] %v789
    %s794 = scalar_lea.vmem [#allocation0], 32
    %v795 = vld [vmem:[%s794] sm:%s772]
    %s796 = sshllo.u32 0, 2
    %s797 = smul.addr 2, 4
    %s798 = scalar_lea.vmem %s1, %s797
    %799 = vst [vmem:[%s798] sm:%s796] %v795
    %s800 = scalar_lea.vmem [#allocation0], 40
    %v801 = vld [vmem:[%s800] sm:%s772]
    %s802 = sshllo.u32 0, 2
    %s803 = smul.addr 2, 5
    %s804 = scalar_lea.vmem %s1, %s803
    %805 = vst [vmem:[%s804] sm:%s802] %v801
    %s806 = scalar_lea.vmem [#allocation0], 48
    %v807 = vld [vmem:[%s806] sm:%s772]
    %s808 = sshllo.u32 0, 2
    %s809 = smul.addr 2, 6
    %s810 = scalar_lea.vmem %s1, %s809
    %811 = vst [vmem:[%s810] sm:%s808] %v807
    %s812 = scalar_lea.vmem [#allocation0], 56
    %v813 = vld [vmem:[%s812] sm:%s772]
    %s814 = sshllo.u32 0, 2
    %s815 = smul.addr 2, 7
    %s816 = scalar_lea.vmem %s1, %s815
    %817 = vst [vmem:[%s816] sm:%s814] %v813

// kernel: squeeze.7
$region0: #{squeeze.7}
  %s0 = inlined_call_operand.vmem [shape: f32[1,32,15], index: 0, kind: input, shape index: {}]
  %s1 = inlined_call_operand.vmem [shape: f32[2,240], index: 1, kind: output, shape index: {}]
  $region1: #{squeeze.7} parent=0
    #allocation0 [shape = 'u8[8192]{0}', space=vmem, size = 0x2000, scoped, tag = 'scoped mem for output reshape']
    %s2 = smov 3
    %v3 = vld [vmem:[%s0] ss:$16 sm:%s2]
    %vm4 = vcmask 121856
    %5 = vst.msk [vmem:[#allocation0] sm:$0x3] %vm4, %v3
    %s6 = scalar_lea.vmem %s0, 8
    %s7 = smov 3
    %v8 = vld [vmem:[%s6] ss:$16 sm:%s7]
    %s9 = scalar_lea.vmem %s0, 8
    %s10 = smov 3
    %v11 = vld [vmem:[%s9] ss:$16 sm:%s10]
    %vm12 = vcmask 64512
    %v13 = vsel %vm12, %v11, %v8
    %14 = vrot.lane.b32.xlu0 %v13, 120
    %v15 = vpop.permute.xlu0 %14
    %vm16 = vcmask 56320
    %s17 = scalar_lea.vmem [#allocation0], 8
    %18 = vst.msk [vmem:[%s17] sm:$0x3] %vm16, %v15
    %vm19 = vcmask 1048512
    %20 = vst.msk [vmem:[#allocation0] sm:$0x3] %vm19, %v15
    %s21 = scalar_lea.vmem %s0, 7
    %s22 = smov 3
    %v23 = vld [vmem:[%s21] ss:$16 sm:%s22]
    %24 = vrot.lane.b32.xlu0 %v23, 105
    %v25 = vpop.permute.xlu0 %24
    %vm26 = vcmask 982856
    %27 = vst.msk [vmem:[#allocation0] sm:$0x3] %vm26, %v25
    %s28 = scalar_lea.vmem %s0, 15
    %s29 = smov 3
    %v30 = vld [vmem:[%s28] ss:$16 sm:%s29]
    %31 = vrot.lane.b32.xlu0 %v30, 97
    %v32 = vpop.permute.xlu0 %31
    %vm33 = vcmask 917256
    %s34 = scalar_lea.vmem [#allocation0], 8
    %35 = vst.msk [vmem:[%s34] sm:$0x3] %vm33, %v32
    %s36 = scalar_lea.vmem %s0, 6
    %s37 = smov 3
    %v38 = vld [vmem:[%s36] ss:$16 sm:%s37]
    %39 = vrot.lane.b32.xlu0 %v38, 90
    %v40 = vpop.permute.xlu0 %39
    %vm41 = vcmask 859856
    %42 = vst.msk [vmem:[#allocation0] sm:$0x3] %vm41, %v40
    %s43 = scalar_lea.vmem %s0, 14
    %s44 = smov 3
    %v45 = vld [vmem:[%s43] ss:$16 sm:%s44]
    %46 = vrot.lane.b32.xlu0 %v45, 82
    %v47 = vpop.permute.xlu0 %46
    %vm48 = vcmask 794256
    %s49 = scalar_lea.vmem [#allocation0], 8
    %50 = vst.msk [vmem:[%s49] sm:$0x3] %vm48, %v47
    %s51 = scalar_lea.vmem %s0, 5
    %s52 = smov 3
    %v53 = vld [vmem:[%s51] ss:$16 sm:%s52]
    %54 = vrot.lane.b32.xlu0 %v53, 75
    %v55 = vpop.permute.xlu0 %54
    %vm56 = vcmask 736856
    %57 = vst.msk [vmem:[#allocation0] sm:$0x3] %vm56, %v55
    %s58 = scalar_lea.vmem %s0, 13
    %s59 = smov 3
    %v60 = vld [vmem:[%s58] ss:$16 sm:%s59]
    %61 = vrot.lane.b32.xlu0 %v60, 67
    %v62 = vpop.permute.xlu0 %61
    %vm63 = vcmask 671256
    %s64 = scalar_lea.vmem [#allocation0], 8
    %65 = vst.msk [vmem:[%s64] sm:$0x3] %vm63, %v62
    %s66 = scalar_lea.vmem %s0, 4
    %s67 = smov 3
    %v68 = vld [vmem:[%s66] ss:$16 sm:%s67]
    %69 = vrot.lane.b32.xlu0 %v68, 60
    %v70 = vpop.permute.xlu0 %69
    %vm71 = vcmask 613856
    %72 = vst.msk [vmem:[#allocation0] sm:$0x3] %vm71, %v70
    %s73 = scalar_lea.vmem %s0, 12
    %s74 = smov 3
    %v75 = vld [vmem:[%s73] ss:$16 sm:%s74]
    %76 = vrot.lane.b32.xlu0 %v75, 52
    %v77 = vpop.permute.xlu0 %76
    %vm78 = vcmask 548256
    %s79 = scalar_lea.vmem [#allocation0], 8
    %80 = vst.msk [vmem:[%s79] sm:$0x3] %vm78, %v77
    %s81 = scalar_lea.vmem %s0, 3
    %s82 = smov 3
    %v83 = vld [vmem:[%s81] ss:$16 sm:%s82]
    %84 = vrot.lane.b32.xlu0 %v83, 45
    %v85 = vpop.permute.xlu0 %84
    %vm86 = vcmask 490856
    %87 = vst.msk [vmem:[#allocation0] sm:$0x3] %vm86, %v85
    %s88 = scalar_lea.vmem %s0, 11
    %s89 = smov 3
    %v90 = vld [vmem:[%s88] ss:$16 sm:%s89]
    %91 = vrot.lane.b32.xlu0 %v90, 37
    %v92 = vpop.permute.xlu0 %91
    %vm93 = vcmask 425256
    %s94 = scalar_lea.vmem [#allocation0], 8
    %95 = vst.msk [vmem:[%s94] sm:$0x3] %vm93, %v92
    %s96 = scalar_lea.vmem %s0, 2
    %s97 = smov 3
    %v98 = vld [vmem:[%s96] ss:$16 sm:%s97]
    %99 = vrot.lane.b32.xlu0 %v98, 30
    %v100 = vpop.permute.xlu0 %99
    %vm101 = vcmask 367856
    %102 = vst.msk [vmem:[#allocation0] sm:$0x3] %vm101, %v100
    %s103 = scalar_lea.vmem %s0, 10
    %s104 = smov 3
    %v105 = vld [vmem:[%s103] ss:$16 sm:%s104]
    %106 = vrot.lane.b32.xlu0 %v105, 22
    %v107 = vpop.permute.xlu0 %106
    %vm108 = vcmask 302256
    %s109 = scalar_lea.vmem [#allocation0], 8
    %110 = vst.msk [vmem:[%s109] sm:$0x3] %vm108, %v107
    %s111 = scalar_lea.vmem %s0, 1
    %s112 = smov 3
    %v113 = vld [vmem:[%s111] ss:$16 sm:%s112]
    %114 = vrot.lane.b32.xlu0 %v113, 15
    %v115 = vpop.permute.xlu0 %114
    %vm116 = vcmask 244856
    %117 = vst.msk [vmem:[#allocation0] sm:$0x3] %vm116, %v115
    %s118 = scalar_lea.vmem %s0, 9
    %s119 = smov 3
    %v120 = vld [vmem:[%s118] ss:$16 sm:%s119]
    %121 = vrot.lane.b32.xlu0 %v120, 7
    %v122 = vpop.permute.xlu0 %121
    %vm123 = vcmask 179256
    %s124 = scalar_lea.vmem [#allocation0], 8
    %125 = vst.msk [vmem:[%s124] sm:$0x3] %vm123, %v122
    %s127 = sshllo.u32 0, 2
    %v129 = vld [vmem:[#allocation0] sm:%s127]
    %s130 = sshllo.u32 0, 2
    %131 = vst [vmem:[%s1] sm:%s130] %v129
    %s132 = scalar_lea.vmem [#allocation0], 8
    %v133 = vld [vmem:[%s132] sm:%s127]
    %s134 = sshllo.u32 0, 2
    %s135 = scalar_lea.vmem %s1, 2
    %136 = vst [vmem:[%s135] sm:%s134] %v133

// kernel: squeeze.4
$region0: #{squeeze.4}
  %s0 = inlined_call_operand.vmem [shape: f32[1,128,12], index: 0, kind: input, shape index: {}]
  %s1 = inlined_call_operand.vmem [shape: f32[2,768], index: 1, kind: output, shape index: {}]
  $region1: #{squeeze.4} parent=0
    #allocation0 [shape = 'u8[24576]{0}', space=vmem, size = 0x6000, scoped, tag = 'scoped mem for output reshape']
    %v2 = vld [vmem:[%s0] sm:$0x1]
    %s3 = scalar_lea.vmem %s0, 31
    %v4 = vld [vmem:[%s3] sm:$0x2]
    %vm5 = vcmask 1041409
    %v6 = vsel %vm5, %v4, %v2
    %s7 = scalar_lea.vmem %s0, 62
    %v8 = vld [vmem:[%s7] sm:$0x4]
    %vm9 = vcmask 1042434
    %v10 = vsel %vm9, %v8, %v6
    %s11 = scalar_lea.vmem %s0, 93
    %v12 = vld [vmem:[%s11] sm:$0x8]
    %vm13 = vcmask 1043459
    %v14 = vsel %vm13, %v12, %v10
    %vm15 = vcmask 97280
    %16 = vst.msk [vmem:[#allocation0] ss:$24 sm:$0x3] %vm15, %v14
    %s17 = scalar_lea.vmem [#allocation0], 4294967249
    %18 = vst.msk [vmem:[%s17] ss:$24 sm:$0xc] %vm15, %v14
    %s19 = scalar_lea.vmem %s0, 53
    %v20 = vld [vmem:[%s19] sm:$0x1]
    %s21 = scalar_lea.vmem %s0, 116
    %v22 = vld [vmem:[%s21] sm:$0x2]
    %vm23 = vcmask 1041409
    %v24 = vsel %vm23, %v22, %v20
    %s25 = scalar_lea.vmem %s0, 19
    %v26 = vld [vmem:[%s25] sm:$0x4]
    %vm27 = vcmask 1042434
    %v28 = vsel %vm27, %v26, %v24
    %s29 = scalar_lea.vmem %s0, 82
    %v30 = vld [vmem:[%s29] sm:$0x8]
    %vm31 = vcmask 1043459
    %v32 = vsel %vm31, %v30, %v28
    %s33 = scalar_lea.vmem %s0, 53
    %v34 = vld [vmem:[%s33] sm:$0x1]
    %s35 = scalar_lea.vmem %s0, 116
    %v36 = vld [vmem:[%s35] sm:$0x2]
    %vm37 = vcmask 1041409
    %v38 = vsel %vm37, %v36, %v34
    %s39 = scalar_lea.vmem %s0, 19
    %v40 = vld [vmem:[%s39] sm:$0x4]
    %vm41 = vcmask 1042434
    %v42 = vsel %vm41, %v40, %v38
    %s43 = scalar_lea.vmem %s0, 82
    %v44 = vld [vmem:[%s43] sm:$0x8]
    %vm45 = vcmask 1043459
    %v46 = vsel %vm45, %v44, %v42
    %vm47 = vcmask 31744
    %v48 = vsel %vm47, %v46, %v32
    %49 = vrot.lane.b32.xlu0 %v48, 124
    %v50 = vpop.permute.xlu0 %49
    %vm51 = vcmask 64512
    %s52 = scalar_lea.vmem [#allocation0], 40
    %53 = vst.msk [vmem:[%s52] sm:$0x3] %vm51, %v50
    %s54 = scalar_lea.vmem [#allocation0], 14
    %55 = vst.msk [vmem:[%s54] sm:$0xc] %vm51, %v50
    %vm56 = vcmask 1048544
    %s57 = scalar_lea.vmem [#allocation0], 32
    %58 = vst.msk [vmem:[%s57] sm:$0x3] %vm56, %v50
    %s59 = scalar_lea.vmem [#allocation0], 6
    %60 = vst.msk [vmem:[%s59] sm:$0xc] %vm56, %v50
    %s61 = scalar_lea.vmem %s0, 42
    %v62 = vld [vmem:[%s61] sm:$0x1]
    %s63 = scalar_lea.vmem %s0, 105
    %v64 = vld [vmem:[%s63] sm:$0x2]
    %vm65 = vcmask 1041409
    %v66 = vsel %vm65, %v64, %v62
    %s67 = scalar_lea.vmem %s0, 8
    %v68 = vld [vmem:[%s67] sm:$0x4]
    %vm69 = vcmask 1042434
    %v70 = vsel %vm69, %v68, %v66
    %s71 = scalar_lea.vmem %s0, 71
    %v72 = vld [vmem:[%s71] sm:$0x8]
    %vm73 = vcmask 1043459
    %v74 = vsel %vm73, %v72, %v70
    %s75 = scalar_lea.vmem %s0, 10
    %v76 = vld [vmem:[%s75] sm:$0x1]
    %s77 = scalar_lea.vmem %s0, 73
    %v78 = vld [vmem:[%s77] sm:$0x2]
    %vm79 = vcmask 1041409
    %v80 = vsel %vm79, %v78, %v76
    %s81 = scalar_lea.vmem %s0, 40
    %v82 = vld [vmem:[%s81] sm:$0x4]
    %vm83 = vcmask 1042434
    %v84 = vsel %vm83, %v82, %v80
    %s85 = scalar_lea.vmem %s0, 103
    %v86 = vld [vmem:[%s85] sm:$0x8]
    %vm87 = vcmask 1043459
    %v88 = vsel %vm87, %v86, %v84
    %vm89 = vcmask 64512
    %v90 = vsel %vm89, %v88, %v74
    %91 = vrot.lane.b32.xlu0 %v90, 120
    %v92 = vpop.permute.xlu0 %91
    %vm93 = vcmask 31744
    %s94 = scalar_lea.vmem [#allocation0], 32
    %95 = vst.msk [vmem:[%s94] sm:$0x3] %vm93, %v92
    %s96 = scalar_lea.vmem [#allocation0], 6
    %97 = vst.msk [vmem:[%s96] sm:$0xc] %vm93, %v92
    %vm98 = vcmask 1048512
    %99 = vst.msk [vmem:[#allocation0] sm:$0x3] %vm98, %v92
    %s100 = scalar_lea.vmem [#allocation0], 22
    %101 = vst.msk [vmem:[%s100] sm:$0xc] %vm98, %v92
    %s102 = scalar_lea.vmem %s0, 63
    %v103 = vld [vmem:[%s102] sm:$0x1]
    %s104 = scalar_lea.vmem %s0, 126
    %v105 = vld [vmem:[%s104] sm:$0x2]
    %vm106 = vcmask 1041409
    %v107 = vsel %vm106, %v105, %v103
    %s108 = scalar_lea.vmem %s0, 29
    %v109 = vld [vmem:[%s108] sm:$0x4]
    %vm110 = vcmask 1042434
    %v111 = vsel %vm110, %v109, %v107
    %s112 = scalar_lea.vmem %s0, 92
    %v113 = vld [vmem:[%s112] sm:$0x8]
    %vm114 = vcmask 1043459
    %v115 = vsel %vm114, %v113, %v111
    %116 = vrot.lane.b32.xlu0 %v115, 116
    %v117 = vpop.permute.xlu0 %116
    %vm118 = vcmask 1048480
    %s119 = scalar_lea.vmem [#allocation0], 40
    %120 = vst.msk [vmem:[%s119] sm:$0x3] %vm118, %v117
    %s121 = scalar_lea.vmem [#allocation0], 14
    %122 = vst.msk [vmem:[%s121] sm:$0xc] %vm118, %v117
    %s123 = scalar_lea.vmem %s0, 52
    %v124 = vld [vmem:[%s123] sm:$0x1]
    %s125 = scalar_lea.vmem %s0, 115
    %v126 = vld [vmem:[%s125] sm:$0x2]
    %vm127 = vcmask 1041409
    %v128 = vsel %vm127, %v126, %v124
    %s129 = scalar_lea.vmem %s0, 18
    %v130 = vld [vmem:[%s129] sm:$0x4]
    %vm131 = vcmask 1042434
    %v132 = vsel %vm131, %v130, %v128
    %s133 = scalar_lea.vmem %s0, 81
    %v134 = vld [vmem:[%s133] sm:$0x8]
    %vm135 = vcmask 1043459
    %v136 = vsel %vm135, %v134, %v132
    %137 = vrot.lane.b32.xlu0 %v136, 112
    %v138 = vpop.permute.xlu0 %137
    %vm139 = vcmask 1015680
    %s140 = scalar_lea.vmem [#allocation0], 32
    %141 = vst.msk [vmem:[%s140] sm:$0x3] %vm139, %v138
    %s142 = scalar_lea.vmem [#allocation0], 6
    %143 = vst.msk [vmem:[%s142] sm:$0xc] %vm139, %v138
    %s144 = scalar_lea.vmem %s0, 9
    %v145 = vld [vmem:[%s144] sm:$0x1]
    %s146 = scalar_lea.vmem %s0, 72
    %v147 = vld [vmem:[%s146] sm:$0x2]
    %vm148 = vcmask 1041409
    %v149 = vsel %vm148, %v147, %v145
    %s150 = scalar_lea.vmem %s0, 39
    %v151 = vld [vmem:[%s150] sm:$0x4]
    %vm152 = vcmask 1042434
    %v153 = vsel %vm152, %v151, %v149
    %s154 = scalar_lea.vmem %s0, 102
    %v155 = vld [vmem:[%s154] sm:$0x8]
    %vm156 = vcmask 1043459
    %v157 = vsel %vm156, %v155, %v153
    %158 = vrot.lane.b32.xlu0 %v157, 108
    %v159 = vpop.permute.xlu0 %158
    %vm160 = vcmask 982880
    %161 = vst.msk [vmem:[#allocation0] sm:$0x3] %vm160, %v159
    %s162 = scalar_lea.vmem [#allocation0], 22
    %163 = vst.msk [vmem:[%s162] sm:$0xc] %vm160, %v159
    %s164 = scalar_lea.vmem %s0, 62
    %v165 = vld [vmem:[%s164] sm:$0x1]
    %s166 = scalar_lea.vmem %s0, 125
    %v167 = vld [vmem:[%s166] sm:$0x2]
    %vm168 = vcmask 1041409
    %v169 = vsel %vm168, %v167, %v165
    %s170 = scalar_lea.vmem %s0, 28
    %v171 = vld [vmem:[%s170] sm:$0x4]
    %vm172 = vcmask 1042434
    %v173 = vsel %vm172, %v171, %v169
    %s174 = scalar_lea.vmem %s0, 91
    %v175 = vld [vmem:[%s174] sm:$0x8]
    %vm176 = vcmask 1043459
    %v177 = vsel %vm176, %v175, %v173
    %178 = vrot.lane.b32.xlu0 %v177, 104
    %v179 = vpop.permute.xlu0 %178
    %vm180 = vcmask 950080
    %s181 = scalar_lea.vmem [#allocation0], 40
    %182 = vst.msk [vmem:[%s181] sm:$0x3] %vm180, %v179
    %s183 = scalar_lea.vmem [#allocation0], 14
    %184 = vst.msk [vmem:[%s183] sm:$0xc] %vm180, %v179
    %s185 = scalar_lea.vmem %s0, 51
    %v186 = vld [vmem:[%s185] sm:$0x1]
    %s187 = scalar_lea.vmem %s0, 114
    %v188 = vld [vmem:[%s187] sm:$0x2]
    %vm189 = vcmask 1041409
    %v190 = vsel %vm189, %v188, %v186
    %s191 = scalar_lea.vmem %s0, 17
    %v192 = vld [vmem:[%s191] sm:$0x4]
    %vm193 = vcmask 1042434
    %v194 = vsel %vm193, %v192, %v190
    %s195 = scalar_lea.vmem %s0, 80
    %v196 = vld [vmem:[%s195] sm:$0x8]
    %vm197 = vcmask 1043459
    %v198 = vsel %vm197, %v196, %v194
    %199 = vrot.lane.b32.xlu0 %v198, 100
    %v200 = vpop.permute.xlu0 %199
    %vm201 = vcmask 917280
    %s202 = scalar_lea.vmem [#allocation0], 32
    %203 = vst.msk [vmem:[%s202] sm:$0x3] %vm201, %v200
    %s204 = scalar_lea.vmem [#allocation0], 6
    %205 = vst.msk [vmem:[%s204] sm:$0xc] %vm201, %v200
    %s206 = scalar_lea.vmem %s0, 8
    %v207 = vld [vmem:[%s206] sm:$0x1]
    %s208 = scalar_lea.vmem %s0, 71
    %v209 = vld [vmem:[%s208] sm:$0x2]
    %vm210 = vcmask 1041409
    %v211 = vsel %vm210, %v209, %v207
    %s212 = scalar_lea.vmem %s0, 38
    %v213 = vld [vmem:[%s212] sm:$0x4]
    %vm214 = vcmask 1042434
    %v215 = vsel %vm214, %v213, %v211
    %s216 = scalar_lea.vmem %s0, 101
    %v217 = vld [vmem:[%s216] sm:$0x8]
    %vm218 = vcmask 1043459
    %v219 = vsel %vm218, %v217, %v215
    %220 = vrot.lane.b32.xlu0 %v219, 96
    %v221 = vpop.permute.xlu0 %220
    %vm222 = vcmask 884480
    %223 = vst.msk [vmem:[#allocation0] sm:$0x3] %vm222, %v221
    %s224 = scalar_lea.vmem [#allocation0], 22
    %225 = vst.msk [vmem:[%s224] sm:$0xc] %vm222, %v221
    %s226 = scalar_lea.vmem %s0, 61
    %v227 = vld [vmem:[%s226] sm:$0x1]
    %s228 = scalar_lea.vmem %s0, 124
    %v229 = vld [vmem:[%s228] sm:$0x2]
    %vm230 = vcmask 1041409
    %v231 = vsel %vm230, %v229, %v227
    %s232 = scalar_lea.vmem %s0, 27
    %v233 = vld [vmem:[%s232] sm:$0x4]
    %vm234 = vcmask 1042434
    %v235 = vsel %vm234, %v233, %v231
    %s236 = scalar_lea.vmem %s0, 90
    %v237 = vld [vmem:[%s236] sm:$0x8]
    %vm238 = vcmask 1043459
    %v239 = vsel %vm238, %v237, %v235
    %240 = vrot.lane.b32.xlu0 %v239, 92
    %v241 = vpop.permute.xlu0 %240
    %vm242 = vcmask 851680
    %s243 = scalar_lea.vmem [#allocation0], 40
    %244 = vst.msk [vmem:[%s243] sm:$0x3] %vm242, %v241
    %s245 = scalar_lea.vmem [#allocation0], 14
    %246 = vst.msk [vmem:[%s245] sm:$0xc] %vm242, %v241
    %s247 = scalar_lea.vmem %s0, 50
    %v248 = vld [vmem:[%s247] sm:$0x1]
    %s249 = scalar_lea.vmem %s0, 113
    %v250 = vld [vmem:[%s249] sm:$0x2]
    %vm251 = vcmask 1041409
    %v252 = vsel %vm251, %v250, %v248
    %s253 = scalar_lea.vmem %s0, 16
    %v254 = vld [vmem:[%s253] sm:$0x4]
    %vm255 = vcmask 1042434
    %v256 = vsel %vm255, %v254, %v252
    %s257 = scalar_lea.vmem %s0, 79
    %v258 = vld [vmem:[%s257] sm:$0x8]
    %vm259 = vcmask 1043459
    %v260 = vsel %vm259, %v258, %v256
    %261 = vrot.lane.b32.xlu0 %v260, 88
    %v262 = vpop.permute.xlu0 %261
    %vm263 = vcmask 818880
    %s264 = scalar_lea.vmem [#allocation0], 32
    %265 = vst.msk [vmem:[%s264] sm:$0x3] %vm263, %v262
    %s266 = scalar_lea.vmem [#allocation0], 6
    %267 = vst.msk [vmem:[%s266] sm:$0xc] %vm263, %v262
    %s268 = scalar_lea.vmem %s0, 7
    %v269 = vld [vmem:[%s268] sm:$0x1]
    %s270 = scalar_lea.vmem %s0, 70
    %v271 = vld [vmem:[%s270] sm:$0x2]
    %vm272 = vcmask 1041409
    %v273 = vsel %vm272, %v271, %v269
    %s274 = scalar_lea.vmem %s0, 37
    %v275 = vld [vmem:[%s274] sm:$0x4]
    %vm276 = vcmask 1042434
    %v277 = vsel %vm276, %v275, %v273
    %s278 = scalar_lea.vmem %s0, 100
    %v279 = vld [vmem:[%s278] sm:$0x8]
    %vm280 = vcmask 1043459
    %v281 = vsel %vm280, %v279, %v277
    %282 = vrot.lane.b32.xlu0 %v281, 84
    %v283 = vpop.permute.xlu0 %282
    %vm284 = vcmask 786080
    %285 = vst.msk [vmem:[#allocation0] sm:$0x3] %vm284, %v283
    %s286 = scalar_lea.vmem [#allocation0], 22
    %287 = vst.msk [vmem:[%s286] sm:$0xc] %vm284, %v283
    %s288 = scalar_lea.vmem %s0, 60
    %v289 = vld [vmem:[%s288] sm:$0x1]
    %s290 = scalar_lea.vmem %s0, 123
    %v291 = vld [vmem:[%s290] sm:$0x2]
    %vm292 = vcmask 1041409
    %v293 = vsel %vm292, %v291, %v289
    %s294 = scalar_lea.vmem %s0, 26
    %v295 = vld [vmem:[%s294] sm:$0x4]
    %vm296 = vcmask 1042434
    %v297 = vsel %vm296, %v295, %v293
    %s298 = scalar_lea.vmem %s0, 89
    %v299 = vld [vmem:[%s298] sm:$0x8]
    %vm300 = vcmask 1043459
    %v301 = vsel %vm300, %v299, %v297
    %302 = vrot.lane.b32.xlu0 %v301, 80
    %v303 = vpop.permute.xlu0 %302
    %vm304 = vcmask 753280
    %s305 = scalar_lea.vmem [#allocation0], 40
    %306 = vst.msk [vmem:[%s305] sm:$0x3] %vm304, %v303
    %s307 = scalar_lea.vmem [#allocation0], 14
    %308 = vst.msk [vmem:[%s307] sm:$0xc] %vm304, %v303
    %s309 = scalar_lea.vmem %s0, 49
    %v310 = vld [vmem:[%s309] sm:$0x1]
    %s311 = scalar_lea.vmem %s0, 112
    %v312 = vld [vmem:[%s311] sm:$0x2]
    %vm313 = vcmask 1041409
    %v314 = vsel %vm313, %v312, %v310
    %s315 = scalar_lea.vmem %s0, 15
    %v316 = vld [vmem:[%s315] sm:$0x4]
    %vm317 = vcmask 1042434
    %v318 = vsel %vm317, %v316, %v314
    %s319 = scalar_lea.vmem %s0, 78
    %v320 = vld [vmem:[%s319] sm:$0x8]
    %vm321 = vcmask 1043459
    %v322 = vsel %vm321, %v320, %v318
    %323 = vrot.lane.b32.xlu0 %v322, 76
    %v324 = vpop.permute.xlu0 %323
    %vm325 = vcmask 720480
    %s326 = scalar_lea.vmem [#allocation0], 32
    %327 = vst.msk [vmem:[%s326] sm:$0x3] %vm325, %v324
    %s328 = scalar_lea.vmem [#allocation0], 6
    %329 = vst.msk [vmem:[%s328] sm:$0xc] %vm325, %v324
    %s330 = scalar_lea.vmem %s0, 6
    %v331 = vld [vmem:[%s330] sm:$0x1]
    %s332 = scalar_lea.vmem %s0, 69
    %v333 = vld [vmem:[%s332] sm:$0x2]
    %vm334 = vcmask 1041409
    %v335 = vsel %vm334, %v333, %v331
    %s336 = scalar_lea.vmem %s0, 36
    %v337 = vld [vmem:[%s336] sm:$0x4]
    %vm338 = vcmask 1042434
    %v339 = vsel %vm338, %v337, %v335
    %s340 = scalar_lea.vmem %s0, 99
    %v341 = vld [vmem:[%s340] sm:$0x8]
    %vm342 = vcmask 1043459
    %v343 = vsel %vm342, %v341, %v339
    %344 = vrot.lane.b32.xlu0 %v343, 72
    %v345 = vpop.permute.xlu0 %344
    %vm346 = vcmask 687680
    %347 = vst.msk [vmem:[#allocation0] sm:$0x3] %vm346, %v345
    %s348 = scalar_lea.vmem [#allocation0], 22
    %349 = vst.msk [vmem:[%s348] sm:$0xc] %vm346, %v345
    %s350 = scalar_lea.vmem %s0, 59
    %v351 = vld [vmem:[%s350] sm:$0x1]
    %s352 = scalar_lea.vmem %s0, 122
    %v353 = vld [vmem:[%s352] sm:$0x2]
    %vm354 = vcmask 1041409
    %v355 = vsel %vm354, %v353, %v351
    %s356 = scalar_lea.vmem %s0, 25
    %v357 = vld [vmem:[%s356] sm:$0x4]
    %vm358 = vcmask 1042434
    %v359 = vsel %vm358, %v357, %v355
    %s360 = scalar_lea.vmem %s0, 88
    %v361 = vld [vmem:[%s360] sm:$0x8]
    %vm362 = vcmask 1043459
    %v363 = vsel %vm362, %v361, %v359
    %364 = vrot.lane.b32.xlu0 %v363, 68
    %v365 = vpop.permute.xlu0 %364
    %vm366 = vcmask 654880
    %s367 = scalar_lea.vmem [#allocation0], 40
    %368 = vst.msk [vmem:[%s367] sm:$0x3] %vm366, %v365
    %s369 = scalar_lea.vmem [#allocation0], 14
    %370 = vst.msk [vmem:[%s369] sm:$0xc] %vm366, %v365
    %s371 = scalar_lea.vmem %s0, 48
    %v372 = vld [vmem:[%s371] sm:$0x1]
    %s373 = scalar_lea.vmem %s0, 111
    %v374 = vld [vmem:[%s373] sm:$0x2]
    %vm375 = vcmask 1041409
    %v376 = vsel %vm375, %v374, %v372
    %s377 = scalar_lea.vmem %s0, 14
    %v378 = vld [vmem:[%s377] sm:$0x4]
    %vm379 = vcmask 1042434
    %v380 = vsel %vm379, %v378, %v376
    %s381 = scalar_lea.vmem %s0, 77
    %v382 = vld [vmem:[%s381] sm:$0x8]
    %vm383 = vcmask 1043459
    %v384 = vsel %vm383, %v382, %v380
    %385 = vrot.lane.b32.xlu0 %v384, 64
    %v386 = vpop.permute.xlu0 %385
    %vm387 = vcmask 622080
    %s388 = scalar_lea.vmem [#allocation0], 32
    %389 = vst.msk [vmem:[%s388] sm:$0x3] %vm387, %v386
    %s390 = scalar_lea.vmem [#allocation0], 6
    %391 = vst.msk [vmem:[%s390] sm:$0xc] %vm387, %v386
    %s392 = scalar_lea.vmem %s0, 5
    %v393 = vld [vmem:[%s392] sm:$0x1]
    %s394 = scalar_lea.vmem %s0, 68
    %v395 = vld [vmem:[%s394] sm:$0x2]
    %vm396 = vcmask 1041409
    %v397 = vsel %vm396, %v395, %v393
    %s398 = scalar_lea.vmem %s0, 35
    %v399 = vld [vmem:[%s398] sm:$0x4]
    %vm400 = vcmask 1042434
    %v401 = vsel %vm400, %v399, %v397
    %s402 = scalar_lea.vmem %s0, 98
    %v403 = vld [vmem:[%s402] sm:$0x8]
    %vm404 = vcmask 1043459
    %v405 = vsel %vm404, %v403, %v401
    %406 = vrot.lane.b32.xlu0 %v405, 60
    %v407 = vpop.permute.xlu0 %406
    %vm408 = vcmask 589280
    %409 = vst.msk [vmem:[#allocation0] sm:$0x3] %vm408, %v407
    %s410 = scalar_lea.vmem [#allocation0], 22
    %411 = vst.msk [vmem:[%s410] sm:$0xc] %vm408, %v407
    %s412 = scalar_lea.vmem %s0, 58
    %v413 = vld [vmem:[%s412] sm:$0x1]
    %s414 = scalar_lea.vmem %s0, 121
    %v415 = vld [vmem:[%s414] sm:$0x2]
    %vm416 = vcmask 1041409
    %v417 = vsel %vm416, %v415, %v413
    %s418 = scalar_lea.vmem %s0, 24
    %v419 = vld [vmem:[%s418] sm:$0x4]
    %vm420 = vcmask 1042434
    %v421 = vsel %vm420, %v419, %v417
    %s422 = scalar_lea.vmem %s0, 87
    %v423 = vld [vmem:[%s422] sm:$0x8]
    %vm424 = vcmask 1043459
    %v425 = vsel %vm424, %v423, %v421
    %426 = vrot.lane.b32.xlu0 %v425, 56
    %v427 = vpop.permute.xlu0 %426
    %vm428 = vcmask 556480
    %s429 = scalar_lea.vmem [#allocation0], 40
    %430 = vst.msk [vmem:[%s429] sm:$0x3] %vm428, %v427
    %s431 = scalar_lea.vmem [#allocation0], 14
    %432 = vst.msk [vmem:[%s431] sm:$0xc] %vm428, %v427
    %s433 = scalar_lea.vmem %s0, 47
    %v434 = vld [vmem:[%s433] sm:$0x1]
    %s435 = scalar_lea.vmem %s0, 110
    %v436 = vld [vmem:[%s435] sm:$0x2]
    %vm437 = vcmask 1041409
    %v438 = vsel %vm437, %v436, %v434
    %s439 = scalar_lea.vmem %s0, 13
    %v440 = vld [vmem:[%s439] sm:$0x4]
    %vm441 = vcmask 1042434
    %v442 = vsel %vm441, %v440, %v438
    %s443 = scalar_lea.vmem %s0, 76
    %v444 = vld [vmem:[%s443] sm:$0x8]
    %vm445 = vcmask 1043459
    %v446 = vsel %vm445, %v444, %v442
    %447 = vrot.lane.b32.xlu0 %v446, 52
    %v448 = vpop.permute.xlu0 %447
    %vm449 = vcmask 523680
    %s450 = scalar_lea.vmem [#allocation0], 32
    %451 = vst.msk [vmem:[%s450] sm:$0x3] %vm449, %v448
    %s452 = scalar_lea.vmem [#allocation0], 6
    %453 = vst.msk [vmem:[%s452] sm:$0xc] %vm449, %v448
    %s454 = scalar_lea.vmem %s0, 4
    %v455 = vld [vmem:[%s454] sm:$0x1]
    %s456 = scalar_lea.vmem %s0, 67
    %v457 = vld [vmem:[%s456] sm:$0x2]
    %vm458 = vcmask 1041409
    %v459 = vsel %vm458, %v457, %v455
    %s460 = scalar_lea.vmem %s0, 34
    %v461 = vld [vmem:[%s460] sm:$0x4]
    %vm462 = vcmask 1042434
    %v463 = vsel %vm462, %v461, %v459
    %s464 = scalar_lea.vmem %s0, 97
    %v465 = vld [vmem:[%s464] sm:$0x8]
    %vm466 = vcmask 1043459
    %v467 = vsel %vm466, %v465, %v463
    %468 = vrot.lane.b32.xlu0 %v467, 48
    %v469 = vpop.permute.xlu0 %468
    %vm470 = vcmask 490880
    %471 = vst.msk [vmem:[#allocation0] sm:$0x3] %vm470, %v469
    %s472 = scalar_lea.vmem [#allocation0], 22
    %473 = vst.msk [vmem:[%s472] sm:$0xc] %vm470, %v469
    %s474 = scalar_lea.vmem %s0, 57
    %v475 = vld [vmem:[%s474] sm:$0x1]
    %s476 = scalar_lea.vmem %s0, 120
    %v477 = vld [vmem:[%s476] sm:$0x2]
    %vm478 = vcmask 1041409
    %v479 = vsel %vm478, %v477, %v475
    %s480 = scalar_lea.vmem %s0, 23
    %v481 = vld [vmem:[%s480] sm:$0x4]
    %vm482 = vcmask 1042434
    %v483 = vsel %vm482, %v481, %v479
    %s484 = scalar_lea.vmem %s0, 86
    %v485 = vld [vmem:[%s484] sm:$0x8]
    %vm486 = vcmask 1043459
    %v487 = vsel %vm486, %v485, %v483
    %488 = vrot.lane.b32.xlu0 %v487, 44
    %v489 = vpop.permute.xlu0 %488
    %vm490 = vcmask 458080
    %s491 = scalar_lea.vmem [#allocation0], 40
    %492 = vst.msk [vmem:[%s491] sm:$0x3] %vm490, %v489
    %s493 = scalar_lea.vmem [#allocation0], 14
    %494 = vst.msk [vmem:[%s493] sm:$0xc] %vm490, %v489
    %s495 = scalar_lea.vmem %s0, 46
    %v496 = vld [vmem:[%s495] sm:$0x1]
    %s497 = scalar_lea.vmem %s0, 109
    %v498 = vld [vmem:[%s497] sm:$0x2]
    %vm499 = vcmask 1041409
    %v500 = vsel %vm499, %v498, %v496
    %s501 = scalar_lea.vmem %s0, 12
    %v502 = vld [vmem:[%s501] sm:$0x4]
    %vm503 = vcmask 1042434
    %v504 = vsel %vm503, %v502, %v500
    %s505 = scalar_lea.vmem %s0, 75
    %v506 = vld [vmem:[%s505] sm:$0x8]
    %vm507 = vcmask 1043459
    %v508 = vsel %vm507, %v506, %v504
    %509 = vrot.lane.b32.xlu0 %v508, 40
    %v510 = vpop.permute.xlu0 %509
    %vm511 = vcmask 425280
    %s512 = scalar_lea.vmem [#allocation0], 32
    %513 = vst.msk [vmem:[%s512] sm:$0x3] %vm511, %v510
    %s514 = scalar_lea.vmem [#allocation0], 6
    %515 = vst.msk [vmem:[%s514] sm:$0xc] %vm511, %v510
    %s516 = scalar_lea.vmem %s0, 3
    %v517 = vld [vmem:[%s516] sm:$0x1]
    %s518 = scalar_lea.vmem %s0, 66
    %v519 = vld [vmem:[%s518] sm:$0x2]
    %vm520 = vcmask 1041409
    %v521 = vsel %vm520, %v519, %v517
    %s522 = scalar_lea.vmem %s0, 33
    %v523 = vld [vmem:[%s522] sm:$0x4]
    %vm524 = vcmask 1042434
    %v525 = vsel %vm524, %v523, %v521
    %s526 = scalar_lea.vmem %s0, 96
    %v527 = vld [vmem:[%s526] sm:$0x8]
    %vm528 = vcmask 1043459
    %v529 = vsel %vm528, %v527, %v525
    %530 = vrot.lane.b32.xlu0 %v529, 36
    %v531 = vpop.permute.xlu0 %530
    %vm532 = vcmask 392480
    %533 = vst.msk [vmem:[#allocation0] sm:$0x3] %vm532, %v531
    %s534 = scalar_lea.vmem [#allocation0], 22
    %535 = vst.msk [vmem:[%s534] sm:$0xc] %vm532, %v531
    %s536 = scalar_lea.vmem %s0, 56
    %v537 = vld [vmem:[%s536] sm:$0x1]
    %s538 = scalar_lea.vmem %s0, 119
    %v539 = vld [vmem:[%s538] sm:$0x2]
    %vm540 = vcmask 1041409
    %v541 = vsel %vm540, %v539, %v537
    %s542 = scalar_lea.vmem %s0, 22
    %v543 = vld [vmem:[%s542] sm:$0x4]
    %vm544 = vcmask 1042434
    %v545 = vsel %vm544, %v543, %v541
    %s546 = scalar_lea.vmem %s0, 85
    %v547 = vld [vmem:[%s546] sm:$0x8]
    %vm548 = vcmask 1043459
    %v549 = vsel %vm548, %v547, %v545
    %550 = vrot.lane.b32.xlu0 %v549, 32
    %v551 = vpop.permute.xlu0 %550
    %vm552 = vcmask 359680
    %s553 = scalar_lea.vmem [#allocation0], 40
    %554 = vst.msk [vmem:[%s553] sm:$0x3] %vm552, %v551
    %s555 = scalar_lea.vmem [#allocation0], 14
    %556 = vst.msk [vmem:[%s555] sm:$0xc] %vm552, %v551
    %s557 = scalar_lea.vmem %s0, 45
    %v558 = vld [vmem:[%s557] sm:$0x1]
    %s559 = scalar_lea.vmem %s0, 108
    %v560 = vld [vmem:[%s559] sm:$0x2]
    %vm561 = vcmask 1041409
    %v562 = vsel %vm561, %v560, %v558
    %s563 = scalar_lea.vmem %s0, 11
    %v564 = vld [vmem:[%s563] sm:$0x4]
    %vm565 = vcmask 1042434
    %v566 = vsel %vm565, %v564, %v562
    %s567 = scalar_lea.vmem %s0, 74
    %v568 = vld [vmem:[%s567] sm:$0x8]
    %vm569 = vcmask 1043459
    %v570 = vsel %vm569, %v568, %v566
    %571 = vrot.lane.b32.xlu0 %v570, 28
    %v572 = vpop.permute.xlu0 %571
    %vm573 = vcmask 326880
    %s574 = scalar_lea.vmem [#allocation0], 32
    %575 = vst.msk [vmem:[%s574] sm:$0x3] %vm573, %v572
    %s576 = scalar_lea.vmem [#allocation0], 6
    %577 = vst.msk [vmem:[%s576] sm:$0xc] %vm573, %v572
    %s578 = scalar_lea.vmem %s0, 2
    %v579 = vld [vmem:[%s578] sm:$0x1]
    %s580 = scalar_lea.vmem %s0, 65
    %v581 = vld [vmem:[%s580] sm:$0x2]
    %vm582 = vcmask 1041409
    %v583 = vsel %vm582, %v581, %v579
    %s584 = scalar_lea.vmem %s0, 32
    %v585 = vld [vmem:[%s584] sm:$0x4]
    %vm586 = vcmask 1042434
    %v587 = vsel %vm586, %v585, %v583
    %s588 = scalar_lea.vmem %s0, 95
    %v589 = vld [vmem:[%s588] sm:$0x8]
    %vm590 = vcmask 1043459
    %v591 = vsel %vm590, %v589, %v587
    %592 = vrot.lane.b32.xlu0 %v591, 24
    %v593 = vpop.permute.xlu0 %592
    %vm594 = vcmask 294080
    %595 = vst.msk [vmem:[#allocation0] sm:$0x3] %vm594, %v593
    %s596 = scalar_lea.vmem [#allocation0], 22
    %597 = vst.msk [vmem:[%s596] sm:$0xc] %vm594, %v593
    %s598 = scalar_lea.vmem %s0, 55
    %v599 = vld [vmem:[%s598] sm:$0x1]
    %s600 = scalar_lea.vmem %s0, 118
    %v601 = vld [vmem:[%s600] sm:$0x2]
    %vm602 = vcmask 1041409
    %v603 = vsel %vm602, %v601, %v599
    %s604 = scalar_lea.vmem %s0, 21
    %v605 = vld [vmem:[%s604] sm:$0x4]
    %vm606 = vcmask 1042434
    %v607 = vsel %vm606, %v605, %v603
    %s608 = scalar_lea.vmem %s0, 84
    %v609 = vld [vmem:[%s608] sm:$0x8]
    %vm610 = vcmask 1043459
    %v611 = vsel %vm610, %v609, %v607
    %612 = vrot.lane.b32.xlu0 %v611, 20
    %v613 = vpop.permute.xlu0 %612
    %vm614 = vcmask 261280
    %s615 = scalar_lea.vmem [#allocation0], 40
    %616 = vst.msk [vmem:[%s615] sm:$0x3] %vm614, %v613
    %s617 = scalar_lea.vmem [#allocation0], 14
    %618 = vst.msk [vmem:[%s617] sm:$0xc] %vm614, %v613
    %s619 = scalar_lea.vmem %s0, 44
    %v620 = vld [vmem:[%s619] sm:$0x1]
    %s621 = scalar_lea.vmem %s0, 107
    %v622 = vld [vmem:[%s621] sm:$0x2]
    %vm623 = vcmask 1041409
    %v624 = vsel %vm623, %v622, %v620
    %s625 = scalar_lea.vmem %s0, 10
    %v626 = vld [vmem:[%s625] sm:$0x4]
    %vm627 = vcmask 1042434
    %v628 = vsel %vm627, %v626, %v624
    %s629 = scalar_lea.vmem %s0, 73
    %v630 = vld [vmem:[%s629] sm:$0x8]
    %vm631 = vcmask 1043459
    %v632 = vsel %vm631, %v630, %v628
    %633 = vrot.lane.b32.xlu0 %v632, 16
    %v634 = vpop.permute.xlu0 %633
    %vm635 = vcmask 228480
    %s636 = scalar_lea.vmem [#allocation0], 32
    %637 = vst.msk [vmem:[%s636] sm:$0x3] %vm635, %v634
    %s638 = scalar_lea.vmem [#allocation0], 6
    %639 = vst.msk [vmem:[%s638] sm:$0xc] %vm635, %v634
    %s640 = scalar_lea.vmem %s0, 1
    %v641 = vld [vmem:[%s640] sm:$0x1]
    %s642 = scalar_lea.vmem %s0, 64
    %v643 = vld [vmem:[%s642] sm:$0x2]
    %vm644 = vcmask 1041409
    %v645 = vsel %vm644, %v643, %v641
    %s646 = scalar_lea.vmem %s0, 31
    %v647 = vld [vmem:[%s646] sm:$0x4]
    %vm648 = vcmask 1042434
    %v649 = vsel %vm648, %v647, %v645
    %s650 = scalar_lea.vmem %s0, 94
    %v651 = vld [vmem:[%s650] sm:$0x8]
    %vm652 = vcmask 1043459
    %v653 = vsel %vm652, %v651, %v649
    %654 = vrot.lane.b32.xlu0 %v653, 12
    %v655 = vpop.permute.xlu0 %654
    %vm656 = vcmask 195680
    %657 = vst.msk [vmem:[#allocation0] sm:$0x3] %vm656, %v655
    %s658 = scalar_lea.vmem [#allocation0], 22
    %659 = vst.msk [vmem:[%s658] sm:$0xc] %vm656, %v655
    %s660 = scalar_lea.vmem %s0, 54
    %v661 = vld [vmem:[%s660] sm:$0x1]
    %s662 = scalar_lea.vmem %s0, 117
    %v663 = vld [vmem:[%s662] sm:$0x2]
    %vm664 = vcmask 1041409
    %v665 = vsel %vm664, %v663, %v661
    %s666 = scalar_lea.vmem %s0, 20
    %v667 = vld [vmem:[%s666] sm:$0x4]
    %vm668 = vcmask 1042434
    %v669 = vsel %vm668, %v667, %v665
    %s670 = scalar_lea.vmem %s0, 83
    %v671 = vld [vmem:[%s670] sm:$0x8]
    %vm672 = vcmask 1043459
    %v673 = vsel %vm672, %v671, %v669
    %674 = vrot.lane.b32.xlu0 %v673, 8
    %v675 = vpop.permute.xlu0 %674
    %vm676 = vcmask 162880
    %s677 = scalar_lea.vmem [#allocation0], 40
    %678 = vst.msk [vmem:[%s677] sm:$0x3] %vm676, %v675
    %s679 = scalar_lea.vmem [#allocation0], 14
    %680 = vst.msk [vmem:[%s679] sm:$0xc] %vm676, %v675
    %s681 = scalar_lea.vmem %s0, 43
    %v682 = vld [vmem:[%s681] sm:$0x1]
    %s683 = scalar_lea.vmem %s0, 106
    %v684 = vld [vmem:[%s683] sm:$0x2]
    %vm685 = vcmask 1041409
    %v686 = vsel %vm685, %v684, %v682
    %s687 = scalar_lea.vmem %s0, 9
    %v688 = vld [vmem:[%s687] sm:$0x4]
    %vm689 = vcmask 1042434
    %v690 = vsel %vm689, %v688, %v686
    %s691 = scalar_lea.vmem %s0, 72
    %v692 = vld [vmem:[%s691] sm:$0x8]
    %vm693 = vcmask 1043459
    %v694 = vsel %vm693, %v692, %v690
    %695 = vrot.lane.b32.xlu0 %v694, 4
    %v696 = vpop.permute.xlu0 %695
    %vm697 = vcmask 130080
    %s698 = scalar_lea.vmem [#allocation0], 32
    %699 = vst.msk [vmem:[%s698] sm:$0x3] %vm697, %v696
    %s700 = scalar_lea.vmem [#allocation0], 6
    %701 = vst.msk [vmem:[%s700] sm:$0xc] %vm697, %v696
    %s703 = sshllo.u32 0, 2
    %v705 = vld [vmem:[#allocation0] sm:%s703]
    %s706 = sshllo.u32 0, 2
    %707 = vst [vmem:[%s1] sm:%s706] %v705
    %s708 = scalar_lea.vmem [#allocation0], 8
    %v709 = vld [vmem:[%s708] sm:%s703]
    %s710 = sshllo.u32 0, 2
    %s711 = scalar_lea.vmem %s1, 2
    %712 = vst [vmem:[%s711] sm:%s710] %v709
    %s713 = scalar_lea.vmem [#allocation0], 16
    %v714 = vld [vmem:[%s713] sm:%s703]
    %s715 = sshllo.u32 0, 2
    %s716 = smul.addr 2, 2
    %s717 = scalar_lea.vmem %s1, %s716
    %718 = vst [vmem:[%s717] sm:%s715] %v714
    %s719 = scalar_lea.vmem [#allocation0], 24
    %v720 = vld [vmem:[%s719] sm:%s703]
    %s721 = sshllo.u32 0, 2
    %s722 = smul.addr 2, 3
    %s723 = scalar_lea.vmem %s1, %s722
    %724 = vst [vmem:[%s723] sm:%s721] %v720
    %s725 = scalar_lea.vmem [#allocation0], 32
    %v726 = vld [vmem:[%s725] sm:%s703]
    %s727 = sshllo.u32 0, 2
    %s728 = smul.addr 2, 4
    %s729 = scalar_lea.vmem %s1, %s728
    %730 = vst [vmem:[%s729] sm:%s727] %v726
    %s731 = scalar_lea.vmem [#allocation0], 40
    %v732 = vld [vmem:[%s731] sm:%s703]
    %s733 = sshllo.u32 0, 2
    %s734 = smul.addr 2, 5
    %s735 = scalar_lea.vmem %s1, %s734
    %736 = vst [vmem:[%s735] sm:%s733] %v732

// kernel: squeeze.5
$region0: #{squeeze.5}
  %s0 = inlined_call_operand.vmem [shape: f32[1,32,12], index: 0, kind: input, shape index: {}]
  %s1 = inlined_call_operand.vmem [shape: f32[2,192], index: 1, kind: output, shape index: {}]
  $region1: #{squeeze.5} parent=0
    #allocation0 [shape = 'u8[8192]{0}', space=vmem, size = 0x2000, scoped, tag = 'scoped mem for output reshape']
    %s2 = smov 3
    %v3 = vld [vmem:[%s0] ss:$16 sm:%s2]
    %vm4 = vcmask 97280
    %5 = vst.msk [vmem:[#allocation0] sm:$0x3] %vm4, %v3
    %s6 = scalar_lea.vmem %s0, 10
    %s7 = smov 3
    %v8 = vld [vmem:[%s6] ss:$16 sm:%s7]
    %s9 = scalar_lea.vmem %s0, 10
    %s10 = smov 3
    %v11 = vld [vmem:[%s9] ss:$16 sm:%s10]
    %vm12 = vcmask 64512
    %v13 = vsel %vm12, %v11, %v8
    %14 = vrot.lane.b32.xlu0 %v13, 120
    %v15 = vpop.permute.xlu0 %14
    %vm16 = vcmask 31744
    %s17 = scalar_lea.vmem [#allocation0], 8
    %18 = vst.msk [vmem:[%s17] sm:$0x3] %vm16, %v15
    %vm19 = vcmask 1048512
    %20 = vst.msk [vmem:[#allocation0] sm:$0x3] %vm19, %v15
    %s21 = scalar_lea.vmem %s0, 9
    %s22 = smov 3
    %v23 = vld [vmem:[%s21] ss:$16 sm:%s22]
    %24 = vrot.lane.b32.xlu0 %v23, 108
    %v25 = vpop.permute.xlu0 %24
    %vm26 = vcmask 982880
    %27 = vst.msk [vmem:[#allocation0] sm:$0x3] %vm26, %v25
    %s28 = scalar_lea.vmem %s0, 8
    %s29 = smov 3
    %v30 = vld [vmem:[%s28] ss:$16 sm:%s29]
    %31 = vrot.lane.b32.xlu0 %v30, 96
    %v32 = vpop.permute.xlu0 %31
    %vm33 = vcmask 884480
    %34 = vst.msk [vmem:[#allocation0] sm:$0x3] %vm33, %v32
    %s35 = scalar_lea.vmem %s0, 7
    %s36 = smov 3
    %v37 = vld [vmem:[%s35] ss:$16 sm:%s36]
    %38 = vrot.lane.b32.xlu0 %v37, 84
    %v39 = vpop.permute.xlu0 %38
    %vm40 = vcmask 786080
    %41 = vst.msk [vmem:[#allocation0] sm:$0x3] %vm40, %v39
    %s42 = scalar_lea.vmem %s0, 6
    %s43 = smov 3
    %v44 = vld [vmem:[%s42] ss:$16 sm:%s43]
    %45 = vrot.lane.b32.xlu0 %v44, 72
    %v46 = vpop.permute.xlu0 %45
    %vm47 = vcmask 687680
    %48 = vst.msk [vmem:[#allocation0] sm:$0x3] %vm47, %v46
    %s49 = scalar_lea.vmem %s0, 5
    %s50 = smov 3
    %v51 = vld [vmem:[%s49] ss:$16 sm:%s50]
    %52 = vrot.lane.b32.xlu0 %v51, 60
    %v53 = vpop.permute.xlu0 %52
    %vm54 = vcmask 589280
    %55 = vst.msk [vmem:[#allocation0] sm:$0x3] %vm54, %v53
    %s56 = scalar_lea.vmem %s0, 15
    %s57 = smov 3
    %v58 = vld [vmem:[%s56] ss:$16 sm:%s57]
    %59 = vrot.lane.b32.xlu0 %v58, 52
    %v60 = vpop.permute.xlu0 %59
    %vm61 = vcmask 523680
    %s62 = scalar_lea.vmem [#allocation0], 8
    %63 = vst.msk [vmem:[%s62] sm:$0x3] %vm61, %v60
    %s64 = scalar_lea.vmem %s0, 4
    %s65 = smov 3
    %v66 = vld [vmem:[%s64] ss:$16 sm:%s65]
    %67 = vrot.lane.b32.xlu0 %v66, 48
    %v68 = vpop.permute.xlu0 %67
    %vm69 = vcmask 490880
    %70 = vst.msk [vmem:[#allocation0] sm:$0x3] %vm69, %v68
    %s71 = scalar_lea.vmem %s0, 14
    %s72 = smov 3
    %v73 = vld [vmem:[%s71] ss:$16 sm:%s72]
    %74 = vrot.lane.b32.xlu0 %v73, 40
    %v75 = vpop.permute.xlu0 %74
    %vm76 = vcmask 425280
    %s77 = scalar_lea.vmem [#allocation0], 8
    %78 = vst.msk [vmem:[%s77] sm:$0x3] %vm76, %v75
    %s79 = scalar_lea.vmem %s0, 3
    %s80 = smov 3
    %v81 = vld [vmem:[%s79] ss:$16 sm:%s80]
    %82 = vrot.lane.b32.xlu0 %v81, 36
    %v83 = vpop.permute.xlu0 %82
    %vm84 = vcmask 392480
    %85 = vst.msk [vmem:[#allocation0] sm:$0x3] %vm84, %v83
    %s86 = scalar_lea.vmem %s0, 13
    %s87 = smov 3
    %v88 = vld [vmem:[%s86] ss:$16 sm:%s87]
    %89 = vrot.lane.b32.xlu0 %v88, 28
    %v90 = vpop.permute.xlu0 %89
    %vm91 = vcmask 326880
    %s92 = scalar_lea.vmem [#allocation0], 8
    %93 = vst.msk [vmem:[%s92] sm:$0x3] %vm91, %v90
    %s94 = scalar_lea.vmem %s0, 2
    %s95 = smov 3
    %v96 = vld [vmem:[%s94] ss:$16 sm:%s95]
    %97 = vrot.lane.b32.xlu0 %v96, 24
    %v98 = vpop.permute.xlu0 %97
    %vm99 = vcmask 294080
    %100 = vst.msk [vmem:[#allocation0] sm:$0x3] %vm99, %v98
    %s101 = scalar_lea.vmem %s0, 12
    %s102 = smov 3
    %v103 = vld [vmem:[%s101] ss:$16 sm:%s102]
    %104 = vrot.lane.b32.xlu0 %v103, 16
    %v105 = vpop.permute.xlu0 %104
    %vm106 = vcmask 228480
    %s107 = scalar_lea.vmem [#allocation0], 8
    %108 = vst.msk [vmem:[%s107] sm:$0x3] %vm106, %v105
    %s109 = scalar_lea.vmem %s0, 1
    %s110 = smov 3
    %v111 = vld [vmem:[%s109] ss:$16 sm:%s110]
    %112 = vrot.lane.b32.xlu0 %v111, 12
    %v113 = vpop.permute.xlu0 %112
    %vm114 = vcmask 195680
    %115 = vst.msk [vmem:[#allocation0] sm:$0x3] %vm114, %v113
    %s116 = scalar_lea.vmem %s0, 11
    %s117 = smov 3
    %v118 = vld [vmem:[%s116] ss:$16 sm:%s117]
    %119 = vrot.lane.b32.xlu0 %v118, 4
    %v120 = vpop.permute.xlu0 %119
    %vm121 = vcmask 130080
    %s122 = scalar_lea.vmem [#allocation0], 8
    %123 = vst.msk [vmem:[%s122] sm:$0x3] %vm121, %v120
    %s125 = sshllo.u32 0, 2
    %v127 = vld [vmem:[#allocation0] sm:%s125]
    %s128 = sshllo.u32 0, 2
    %129 = vst [vmem:[%s1] sm:%s128] %v127
    %s130 = scalar_lea.vmem [#allocation0], 8
    %v131 = vld [vmem:[%s130] sm:%s125]
    %s132 = sshllo.u32 0, 2
    %s133 = scalar_lea.vmem %s1, 2
    %134 = vst [vmem:[%s133] sm:%s132] %v131

// kernel: xssd_forward.7
$region0: #{xssd_forward.7}
  #allocation0 [shape = 'u32[]', space=smem, size = 0x4, offset = 0x4, fixed_abs, tag = 'smem constant byte address 0x4 - core index']
  #allocation1 [shape = 'u32[144,128]{1,0:T(1,128)}', space=vmem, size = 0x12000, scoped, tag = 'internal scratch']
  %s0 = inlined_call_operand.vmem [shape: bf16[2,128,144], index: 0, kind: input, shape index: {}]
  %s1 = inlined_call_operand.vmem [shape: bf16[2,144,27], index: 1, kind: input, shape index: {}]
  %s2 = inlined_call_operand.vmem [shape: f32[2,1,27], index: 2, kind: input, shape index: {}]
  %s3 = inlined_call_operand.vmem [shape: f32[2,128,12], index: 3, kind: output, shape index: {0}]
  %s4 = inlined_call_operand.vmem [shape: f32[2,128,15], index: 4, kind: output, shape index: {1}]
  %5 = xla_tuple %s3, %s4
  %s6 = sld [smem:[#allocation0]]
  $region53: #{xssd_forward.7} parent=0
    _
  %s8 = ssub.s32 1, %s6
  %s9 = scalar_select 0, %s8, %s6
  loop: start=0, step=1, limit=4
  $region2: #{xssd_forward.7} parent=0 // loop_pre_header
    _
  $region3: #{xssd_forward.7} parent=0 // loop_header
    %s11 = sphi 0, %s15
    %p12 = scmp.ge.s32.totalorder %s11, 4
    %s21 = sphi 0, %s23
    %s24 = sphi 0, %s21
    %s25 = sphi 0, %s24
    %s41 = sphi 0, %s25
    %s47 = sphi 0, %s49
    %s50 = sphi 0, %s47
    %s51 = sphi 0, %s50
    %s67 = sphi 0, %s51
    %s73 = sphi 0, %s75
    %s76 = sphi 0, %s73
    %s77 = sphi 0, %s76
    %s93 = sphi 0, %s77
    %s99 = sphi 0, %s101
    %s102 = sphi 0, %s99
    %s103 = sphi 0, %s102
    %s119 = sphi 0, %s103
    %s125 = sphi 0, %s127
    %s128 = sphi 0, %s125
    %s129 = sphi 0, %s128
    %s145 = sphi 0, %s129
  $region4: #{xssd_forward.7} parent=0 // loop_header_branch
    %14 = sbr.rel (%p12) target = $region8
  $region5: #{xssd_forward.7} parent=0 // loop_body
    %s16 = ssub.s32 %s11, 1
    %s17 = ssub.s32 %s11, 2
    %s18 = sadd.s32 %s11, 1
    %s19 = ssub.s32 %s11, %s18
    %p20 = scmp.eq.s32.totalorder %s19, 0
    %s22 = sadd.s32 %s21, 1
    %s23 = scalar_select %p20, %s21, %s22
    %p26 = pneg %p20
    %p27 = scmp.eq.s32.totalorder %s11, 1
    %p28 = por %p26, %p27
    %p29 = scmp.ne.s32.totalorder %s21, %s24
    %p30 = scmp.eq.s32.totalorder %s11, 0
    %p31 = por %p29, %p30
    %p32 = scmp.ne.s32.totalorder %s21, %s24
    %p33 = scmp.eq.s32.totalorder %s16, 1
    %p34 = por %p32, %p33
    %p35 = scmp.ne.s32.totalorder %s24, %s25
    %p36 = scmp.eq.s32.totalorder %s16, 0
    %p37 = por %p35, %p36
    %p38 = scmp.ne.s32.totalorder %s24, %s25
    %p39 = scmp.eq.s32.totalorder %s17, 1
    %p40 = por %p38, %p39
    %p42 = scmp.ne.s32.totalorder %s25, %s41
    %p43 = scmp.eq.s32.totalorder %s17, 0
    %p44 = por %p42, %p43
    %s45 = ssub.s32 %s11, %s18
    %p46 = scmp.eq.s32.totalorder %s45, 0
    %s48 = sadd.s32 %s47, 1
    %s49 = scalar_select %p46, %s47, %s48
    %p52 = pneg %p46
    %p53 = scmp.eq.s32.totalorder %s11, 1
    %p54 = por %p52, %p53
    %p55 = scmp.ne.s32.totalorder %s47, %s50
    %p56 = scmp.eq.s32.totalorder %s11, 0
    %p57 = por %p55, %p56
    %p58 = scmp.ne.s32.totalorder %s47, %s50
    %p59 = scmp.eq.s32.totalorder %s16, 1
    %p60 = por %p58, %p59
    %p61 = scmp.ne.s32.totalorder %s50, %s51
    %p62 = scmp.eq.s32.totalorder %s16, 0
    %p63 = por %p61, %p62
    %p64 = scmp.ne.s32.totalorder %s50, %s51
    %p65 = scmp.eq.s32.totalorder %s17, 1
    %p66 = por %p64, %p65
    %p68 = scmp.ne.s32.totalorder %s51, %s67
    %p69 = scmp.eq.s32.totalorder %s17, 0
    %p70 = por %p68, %p69
    %s71 = ssub.s32 %s11, %s18
    %p72 = scmp.eq.s32.totalorder %s71, 0
    %s74 = sadd.s32 %s73, 1
    %s75 = scalar_select %p72, %s73, %s74
    %p78 = pneg %p72
    %p79 = scmp.eq.s32.totalorder %s11, 1
    %p80 = por %p78, %p79
    %p81 = scmp.ne.s32.totalorder %s73, %s76
    %p82 = scmp.eq.s32.totalorder %s11, 0
    %p83 = por %p81, %p82
    %p84 = scmp.ne.s32.totalorder %s73, %s76
    %p85 = scmp.eq.s32.totalorder %s16, 1
    %p86 = por %p84, %p85
    %p87 = scmp.ne.s32.totalorder %s76, %s77
    %p88 = scmp.eq.s32.totalorder %s16, 0
    %p89 = por %p87, %p88
    %p90 = scmp.ne.s32.totalorder %s76, %s77
    %p91 = scmp.eq.s32.totalorder %s17, 1
    %p92 = por %p90, %p91
    %p94 = scmp.ne.s32.totalorder %s77, %s93
    %p95 = scmp.eq.s32.totalorder %s17, 0
    %p96 = por %p94, %p95
    %s97 = ssub.s32 %s11, %s18
    %p98 = scmp.eq.s32.totalorder %s97, 0
    %s100 = sadd.s32 %s99, 1
    %s101 = scalar_select %p98, %s99, %s100
    %p104 = pneg %p98
    %p105 = scmp.eq.s32.totalorder %s11, 1
    %p106 = por %p104, %p105
    %p107 = scmp.ne.s32.totalorder %s99, %s102
    %p108 = scmp.eq.s32.totalorder %s11, 0
    %p109 = por %p107, %p108
    %p110 = scmp.ne.s32.totalorder %s99, %s102
    %p111 = scmp.eq.s32.totalorder %s16, 1
    %p112 = por %p110, %p111
    %p113 = scmp.ne.s32.totalorder %s102, %s103
    %p114 = scmp.eq.s32.totalorder %s16, 0
    %p115 = por %p113, %p114
    %p116 = scmp.ne.s32.totalorder %s102, %s103
    %p117 = scmp.eq.s32.totalorder %s17, 1
    %p118 = por %p116, %p117
    %p120 = scmp.ne.s32.totalorder %s103, %s119
    %p121 = scmp.eq.s32.totalorder %s17, 0
    %p122 = por %p120, %p121
    %s123 = ssub.s32 %s11, %s18
    %p124 = scmp.eq.s32.totalorder %s123, 0
    %s126 = sadd.s32 %s125, 1
    %s127 = scalar_select %p124, %s125, %s126
    %p130 = pneg %p124
    %p131 = scmp.eq.s32.totalorder %s11, 1
    %p132 = por %p130, %p131
    %p133 = scmp.ne.s32.totalorder %s125, %s128
    %p134 = scmp.eq.s32.totalorder %s11, 0
    %p135 = por %p133, %p134
    %p136 = scmp.ne.s32.totalorder %s125, %s128
    %p137 = scmp.eq.s32.totalorder %s16, 1
    %p138 = por %p136, %p137
    %p139 = scmp.ne.s32.totalorder %s128, %s129
    %p140 = scmp.eq.s32.totalorder %s16, 0
    %p141 = por %p139, %p140
    %p142 = scmp.ne.s32.totalorder %s128, %s129
    %p143 = scmp.eq.s32.totalorder %s17, 1
    %p144 = por %p142, %p143
    %p146 = scmp.ne.s32.totalorder %s129, %s145
    %p147 = scmp.eq.s32.totalorder %s17, 0
    %p148 = por %p146, %p147
    %p149 = scmp.le.s32.totalorder 1, %s11
    %p150 = scmp.lt.s32.totalorder %s11, 3
    %p151 = pnand %p149, %p150
    %p152 = pneg %p151
    // Predicated region
    $region9: #{xssd_forward.7} parent=5 // pred_check
      _
    $region10: #{xssd_forward.7} parent=5 // pred_check_branch
      %154 = sbr.rel (%p151) target = $region12
    $region11: #{xssd_forward.7} parent=5 // pred_region
      %s155 = ssub.s32 %s11, 1
    $region12: #{xssd_forward.7} parent=5 // pred_fallthru
      _
    %p156 = scmp.lt.s32.totalorder %s11, 2
    // Predicated region
    $region13: #{xssd_forward.7} parent=5 // pred_check
      %p157 = pneg %p156
    $region14: #{xssd_forward.7} parent=5 // pred_check_branch
      %159 = sbr.rel (%p157) target = $region16
    $region15: #{xssd_forward.7} parent=5 // pred_region
      // Predicated region
      $region17: #{xssd_forward.7} parent=15 // pred_check
        %p160 = pneg %p31
      $region18: #{xssd_forward.7} parent=15 // pred_check_branch
        %162 = sbr.rel (%p160) target = $region20
      $region19: #{xssd_forward.7} parent=15 // pred_region
        %p163 = scmp.lt.s32.totalorder %s11, 1
        %s164 = scalar_select %p163, %s11, 1
        %s165 = smul.addr %s164, 32
        %s166 = smul.addr %s165, 4
        %s167 = scalar_lea.vmem %s0, %s166
      $region20: #{xssd_forward.7} parent=15 // pred_fallthru
        _
      // Predicated region
      $region21: #{xssd_forward.7} parent=15 // pred_check
        %p168 = pneg %p57
      $region22: #{xssd_forward.7} parent=15 // pred_check_branch
        %170 = sbr.rel (%p168) target = $region24
      $region23: #{xssd_forward.7} parent=15 // pred_region
        %p171 = scmp.lt.s32.totalorder %s11, 1
        %s172 = scalar_select %p171, %s11, 1
        %s173 = smul.addr %s172, 18
        %s174 = smul.addr %s173, 4
        %s175 = scalar_lea.vmem %s1, %s174
      $region24: #{xssd_forward.7} parent=15 // pred_fallthru
        _
      // Predicated region
      $region25: #{xssd_forward.7} parent=15 // pred_check
        %p176 = pneg %p83
      $region26: #{xssd_forward.7} parent=15 // pred_check_branch
        %178 = sbr.rel (%p176) target = $region28
      $region27: #{xssd_forward.7} parent=15 // pred_region
        %p179 = scmp.lt.s32.totalorder %s11, 1
        %s180 = scalar_select %p179, %s11, 1
        %s181 = scalar_lea.vmem %s2, %s180
      $region28: #{xssd_forward.7} parent=15 // pred_fallthru
        _
    $region16: #{xssd_forward.7} parent=5 // pred_fallthru
      _
    %p182 = scmp.le.s32.totalorder 1, %s11
    %p183 = scmp.lt.s32.totalorder %s11, 3
    %p184 = pnand %p182, %p183
    %p185 = pneg %p184
    // Predicated region
    $region29: #{xssd_forward.7} parent=5 // pred_check
      _
    $region30: #{xssd_forward.7} parent=5 // pred_check_branch
      %187 = sbr.rel (%p184) target = $region32
    $region31: #{xssd_forward.7} parent=5 // pred_region
      %s188 = ssub.s32 %s11, 1
      %p189 = scmp.lt.s32.totalorder %s16, 1
      %s190 = scalar_select %p189, %s16, 1
      %s191 = smul.addr %s190, 32
      %s192 = smul.addr %s191, 4
      %s193 = scalar_lea.vmem %s0, %s192
      %p194 = pneg %p37
      %p195 = pneg %p34
      %p196 = scmp.lt.s32.totalorder %s16, 1
      %s197 = scalar_select %p196, %s16, 1
      %s198 = smul.addr %s197, 18
      %s199 = smul.addr %s198, 4
      %s200 = scalar_lea.vmem %s1, %s199
      %p201 = pneg %p63
      %p202 = pneg %p60
      %p203 = scmp.lt.s32.totalorder %s16, 1
      %s204 = scalar_select %p203, %s16, 1
      %s205 = scalar_lea.vmem %s2, %s204
      %p206 = pneg %p89
      %p207 = pneg %p86
      %p208 = pneg %p115
      %p209 = pneg %p112
      %p210 = scmp.lt.s32.totalorder %s16, 1
      %s211 = scalar_select %p210, %s16, 1
      %s212 = smul.addr %s211, 16
      %s213 = smul.addr %s212, 8
      %s214 = scalar_lea.vmem %s3, %s213
      %p215 = pneg %p141
      %p216 = pneg %p138
      %p217 = scmp.lt.s32.totalorder %s16, 1
      %s218 = scalar_select %p217, %s16, 1
      %s219 = smul.addr %s218, 16
      %s220 = smul.addr %s219, 8
      %s221 = scalar_lea.vmem %s4, %s220
      %p222 = scmp.lt.s32.totalorder %s16, 1
      %s223 = scalar_select %p222, %s16, 1
      %s224 = smul.addr %s223, 32
      %s225 = smul.addr %s224, 4
      %s226 = scalar_lea.vmem %s0, %s225
      %p227 = scmp.lt.s32.totalorder %s16, 1
      %s228 = scalar_select %p227, %s16, 1
      %s229 = smul.addr %s228, 18
      %s230 = smul.addr %s229, 4
      %s231 = scalar_lea.vmem %s1, %s230
      %p232 = scmp.lt.s32.totalorder %s16, 1
      %s233 = scalar_select %p232, %s16, 1
      %s234 = scalar_lea.vmem %s2, %s233
      %p235 = scmp.lt.s32.totalorder %s16, 1
      %s236 = scalar_select %p235, %s16, 1
      %s237 = smul.addr %s236, 16
      %s238 = smul.addr %s237, 8
      %s239 = scalar_lea.vmem %s3, %s238
      %p240 = scmp.lt.s32.totalorder %s16, 1
      %s241 = scalar_select %p240, %s16, 1
      %s242 = smul.addr %s241, 16
      %s243 = smul.addr %s242, 8
      %s244 = scalar_lea.vmem %s4, %s243
      %v246 = vld [vmem:[%s226] sm:$0xff]
      %v247 = vld [vmem:[%s226 + $0x8] sm:$0xff]
      %v248 = vld [vmem:[%s226 + $0x10] sm:$0xff]
      %v249 = vld [vmem:[%s226 + $0x18] sm:$0xff]
      %v250 = vld [vmem:[%s226 + $0x20] sm:$0xff]
      %v251 = vld [vmem:[%s226 + $0x28] sm:$0xff]
      %v252 = vld [vmem:[%s226 + $0x30] sm:$0xff]
      %v253 = vld [vmem:[%s226 + $0x38] sm:$0xff]
      %v254 = vld [vmem:[%s226 + $0x40] sm:$0xff]
      %v255 = vld [vmem:[%s226 + $0x48] sm:$0xff]
      %v256 = vld [vmem:[%s226 + $0x50] sm:$0xff]
      %v257 = vld [vmem:[%s226 + $0x58] sm:$0xff]
      %v258 = vld [vmem:[%s226 + $0x60] sm:$0xff]
      %v259 = vld [vmem:[%s226 + $0x68] sm:$0xff]
      %v260 = vld [vmem:[%s226 + $0x70] sm:$0xff]
      %v261 = vld [vmem:[%s226 + $0x78] sm:$0xff]
      %v262 = vld [vmem:[%s231] sm:$0xf]
      %v263 = vld [vmem:[%s231 + $0x4] sm:$0xf]
      %v264 = vld [vmem:[%s231 + $0x8] sm:$0xf]
      %v265 = vld [vmem:[%s231 + $0xc] sm:$0xf]
      %v266 = vld [vmem:[%s231 + $0x10] sm:$0xf]
      %v267 = vld [vmem:[%s231 + $0x14] sm:$0xf]
      %v268 = vld [vmem:[%s231 + $0x18] sm:$0xf]
      %v269 = vld [vmem:[%s231 + $0x1c] sm:$0xf]
      %v270 = vld [vmem:[%s231 + $0x20] sm:$0xf]
      %v271 = vld [vmem:[%s231 + $0x24] sm:$0xf]
      %v272 = vld [vmem:[%s231 + $0x28] sm:$0xf]
      %v273 = vld [vmem:[%s231 + $0x2c] sm:$0xf]
      %v274 = vld [vmem:[%s231 + $0x30] sm:$0xf]
      %v275 = vld [vmem:[%s231 + $0x34] sm:$0xf]
      %v276 = vld [vmem:[%s231 + $0x38] sm:$0xf]
      %v277 = vld [vmem:[%s231 + $0x3c] sm:$0xf]
      %v278 = vld [vmem:[%s231 + $0x40] sm:$0xf]
      %v279 = vld [vmem:[%s231 + $0x44] sm:$0xf]
      %v280 = vld [vmem:[%s234] sm:$0x1]
      %v282 = vlaneseq
      %v283 = vshrl.u32 %v282, 7
      %v284 = vsub.s32 0, %v283
      %v285 = vrot.slane %v280, %v284
      %v303 = vunpack.c.l.b16 %v246
      %v304 = vunpack.c.h.b16 %v246
      %v305 = vunpack.c.l.b16 %v247
      %v306 = vunpack.c.h.b16 %v247
      %v307 = vunpack.c.l.b16 %v248
      %v308 = vunpack.c.h.b16 %v248
      %v309 = vunpack.c.l.b16 %v249
      %v310 = vunpack.c.h.b16 %v249
      %v311 = vunpack.c.l.b16 %v250
      %v312 = vunpack.c.h.b16 %v250
      %v313 = vunpack.c.l.b16 %v251
      %v314 = vunpack.c.h.b16 %v251
      %v315 = vunpack.c.l.b16 %v252
      %v316 = vunpack.c.h.b16 %v252
      %v317 = vunpack.c.l.b16 %v253
      %v318 = vunpack.c.h.b16 %v253
      %v319 = vunpack.c.l.b16 %v254
      %v320 = vunpack.c.h.b16 %v254
      %v321 = vunpack.c.l.b16 %v255
      %v322 = vunpack.c.h.b16 %v255
      %v323 = vunpack.c.l.b16 %v256
      %v324 = vunpack.c.h.b16 %v256
      %v325 = vunpack.c.l.b16 %v257
      %v326 = vunpack.c.h.b16 %v257
      %v327 = vunpack.c.l.b16 %v258
      %v328 = vunpack.c.h.b16 %v258
      %v329 = vunpack.c.l.b16 %v259
      %v330 = vunpack.c.h.b16 %v259
      %v331 = vunpack.c.l.b16 %v260
      %v332 = vunpack.c.h.b16 %v260
      %v333 = vunpack.c.l.b16 %v261
      %v334 = vunpack.c.h.b16 %v261
      %v335 = vpack.c.b16 %v305, %v303
      %v336 = vpack.c.b16 %v306, %v304
      %v337 = vpack.c.b16 %v309, %v307
      %v338 = vpack.c.b16 %v310, %v308
      %v339 = vpack.c.b16 %v313, %v311
      %v340 = vpack.c.b16 %v314, %v312
      %v341 = vpack.c.b16 %v317, %v315
      %v342 = vpack.c.b16 %v318, %v316
      %v343 = vpack.c.b16 %v321, %v319
      %v344 = vpack.c.b16 %v322, %v320
      %v345 = vpack.c.b16 %v325, %v323
      %v346 = vpack.c.b16 %v326, %v324
      %v347 = vpack.c.b16 %v329, %v327
      %v348 = vpack.c.b16 %v330, %v328
      %v349 = vpack.c.b16 %v333, %v331
      %v350 = vpack.c.b16 %v334, %v332
      %v377 = vunpack.c.l.b16 %v262
      %v378 = vunpack.c.l.b16 %v263
      %v379 = vunpack.c.l.b16 %v264
      %v380 = vunpack.c.l.b16 %v265
      %v381 = vunpack.c.l.b16 %v266
      %v382 = vunpack.c.l.b16 %v267
      %v383 = vunpack.c.l.b16 %v268
      %v384 = vunpack.c.l.b16 %v269
      %v385 = vunpack.c.l.b16 %v270
      %v386 = vunpack.c.l.b16 %v271
      %v387 = vunpack.c.l.b16 %v272
      %v388 = vunpack.c.l.b16 %v273
      %v389 = vunpack.c.l.b16 %v274
      %v390 = vunpack.c.l.b16 %v275
      %v391 = vunpack.c.l.b16 %v276
      %v392 = vunpack.c.l.b16 %v277
      %v393 = vunpack.c.l.b16 %v278
      %v394 = vunpack.c.l.b16 %v279
      %v395 = vpack.c.b16 %v378, %v377
      %v396 = vpack.c.b16 %v380, %v379
      %v397 = vpack.c.b16 %v382, %v381
      %v398 = vpack.c.b16 %v384, %v383
      %v399 = vpack.c.b16 %v386, %v385
      %v400 = vpack.c.b16 %v388, %v387
      %v401 = vpack.c.b16 %v390, %v389
      %v402 = vpack.c.b16 %v392, %v391
      %v403 = vpack.c.b16 %v394, %v393
      %vm413 = vcmask 130048
      %v415 = vsel %vm413, %v336, 0
      %v418 = vsel %vm413, %v338, 0
      %v421 = vsel %vm413, %v340, 0
      %v424 = vsel %vm413, %v342, 0
      %v427 = vsel %vm413, %v344, 0
      %v430 = vsel %vm413, %v346, 0
      %v433 = vsel %vm413, %v348, 0
      %v436 = vsel %vm413, %v350, 0
      %438 = vmatprep.subr.bf16.mxu0 0
      %439 = vmatpush1.bf16.msra.mxu0 %v395
      %440 = vmatprep.subr.bf16.mxu0 0
      %441 = vmatpush1.bf16.msra.mxu0 %v396
      %442 = vmatprep.subr.bf16.mxu0 0
      %443 = vmatpush1.bf16.msra.mxu0 %v397
      %444 = vmatprep.subr.bf16.mxu0 0
      %445 = vmatpush1.bf16.msra.mxu0 %v398
      %446 = vmatprep.subr.bf16.mxu0 0
      %447 = vmatpush1.bf16.msra.mxu0 %v399
      %448 = vmatprep.subr.bf16.mxu0 0
      %449 = vmatpush1.bf16.msra.mxu0 %v400
      %450 = vmatprep.subr.bf16.mxu0 0
      %451 = vmatpush1.bf16.msra.mxu0 %v401
      %452 = vmatprep.subr.bf16.mxu0 0
      %453 = vmatpush1.bf16.msra.mxu0 %v402
      %454 = vmatprep.subr.bf16.mxu0 0
      %455 = vmatpush1.bf16.msra.mxu0 %v403
      %456 = vmatprep.subr.bf16.mxu0 0
      %457 = vmatpush1.bf16.msra.mxu0 0
      %458 = vmatprep.subr.bf16.mxu0 0
      %459 = vmatpush1.bf16.msra.mxu0 0
      %460 = vmatprep.subr.bf16.mxu0 0
      %461 = vmatpush1.bf16.msra.mxu0 0
      %462 = vmatprep.subr.bf16.mxu0 0
      %463 = vmatpush1.bf16.msra.mxu0 0
      %464 = vmatprep.subr.bf16.mxu0 0
      %465 = vmatpush1.bf16.msra.mxu0 0
      %466 = vmatprep.subr.bf16.mxu0 0
      %467 = vmatpush1.bf16.msra.mxu0 0
      %468 = vmatprep.subr.bf16.mxu0 0
      %469 = vmatpush1.bf16.msra.mxu0 0
      %470 = vmatprep.mubr.bf16.mxu0 %v415
      %471 = vmatmul.mubr.bf16.gmra.mrb[0].mxu0 %v335
      %v472 = vpop.f32.mrb[0].mxu0
      %v473 = vadd.f32 %v285, %v472
      %v474 = vpop.f32.mrb[0].mxu0
      %v475 = vpop.f32.mrb[0].mxu0
      %v476 = vadd.f32 %v285, %v475
      %v477 = vpop.f32.mrb[0].mxu0
      %478 = vmatprep.mubr.bf16.mxu0 %v418
      %479 = vmatmul.mubr.bf16.gmra.mrb[0].mxu0 %v337
      %v480 = vpop.f32.mrb[0].mxu0
      %v481 = vadd.f32 %v285, %v480
      %v482 = vpop.f32.mrb[0].mxu0
      %v483 = vpop.f32.mrb[0].mxu0
      %v484 = vadd.f32 %v285, %v483
      %v485 = vpop.f32.mrb[0].mxu0
      %486 = vmatprep.mubr.bf16.mxu0 %v421
      %487 = vmatmul.mubr.bf16.gmra.mrb[0].mxu0 %v339
      %v488 = vpop.f32.mrb[0].mxu0
      %v489 = vadd.f32 %v285, %v488
      %v490 = vpop.f32.mrb[0].mxu0
      %v491 = vpop.f32.mrb[0].mxu0
      %v492 = vadd.f32 %v285, %v491
      %v493 = vpop.f32.mrb[0].mxu0
      %494 = vmatprep.mubr.bf16.mxu0 %v424
      %495 = vmatmul.mubr.bf16.gmra.mrb[0].mxu0 %v341
      %v496 = vpop.f32.mrb[0].mxu0
      %v497 = vadd.f32 %v285, %v496
      %v498 = vpop.f32.mrb[0].mxu0
      %v499 = vpop.f32.mrb[0].mxu0
      %v500 = vadd.f32 %v285, %v499
      %v501 = vpop.f32.mrb[0].mxu0
      %502 = vmatprep.mubr.bf16.mxu0 %v427
      %503 = vmatmul.mubr.bf16.gmra.mrb[0].mxu0 %v343
      %v504 = vpop.f32.mrb[0].mxu0
      %v505 = vadd.f32 %v285, %v504
      %v506 = vpop.f32.mrb[0].mxu0
      %v507 = vpop.f32.mrb[0].mxu0
      %v508 = vadd.f32 %v285, %v507
      %v509 = vpop.f32.mrb[0].mxu0
      %510 = vmatprep.mubr.bf16.mxu0 %v430
      %511 = vmatmul.mubr.bf16.gmra.mrb[0].mxu0 %v345
      %v512 = vpop.f32.mrb[0].mxu0
      %v513 = vadd.f32 %v285, %v512
      %v514 = vpop.f32.mrb[0].mxu0
      %v515 = vpop.f32.mrb[0].mxu0
      %v516 = vadd.f32 %v285, %v515
      %v517 = vpop.f32.mrb[0].mxu0
      %518 = vmatprep.mubr.bf16.mxu0 %v433
      %519 = vmatmul.mubr.bf16.gmra.mrb[0].mxu0 %v347
      %v520 = vpop.f32.mrb[0].mxu0
      %v521 = vadd.f32 %v285, %v520
      %v522 = vpop.f32.mrb[0].mxu0
      %v523 = vpop.f32.mrb[0].mxu0
      %v524 = vadd.f32 %v285, %v523
      %v525 = vpop.f32.mrb[0].mxu0
      %526 = vmatprep.mubr.bf16.mxu0 %v436
      %527 = vmatmul.mubr.bf16.gmra.mrb[0].mxu0 %v349
      %v528 = vpop.f32.mrb[0].mxu0
      %v529 = vadd.f32 %v285, %v528
      %v530 = vpop.f32.mrb[0].mxu0
      %v531 = vpop.f32.mrb[0].mxu0
      %v532 = vadd.f32 %v285, %v531
      %v533 = vpop.f32.mrb[0].mxu0
      %534 = vdwg.mxu0
      %vm535 = vcmask 97280
      %536 = vst.msk [vmem:[%s239] sm:$0xff] %vm535, %v473
      %537 = vst.msk [vmem:[%s239 + $0x8] sm:$0xff] %vm535, %v476
      %538 = vst.msk [vmem:[%s239 + $0x10] sm:$0xff] %vm535, %v481
      %539 = vst.msk [vmem:[%s239 + $0x18] sm:$0xff] %vm535, %v484
      %540 = vst.msk [vmem:[%s239 + $0x20] sm:$0xff] %vm535, %v489
      %541 = vst.msk [vmem:[%s239 + $0x28] sm:$0xff] %vm535, %v492
      %542 = vst.msk [vmem:[%s239 + $0x30] sm:$0xff] %vm535, %v497
      %543 = vst.msk [vmem:[%s239 + $0x38] sm:$0xff] %vm535, %v500
      %544 = vst.msk [vmem:[%s239 + $0x40] sm:$0xff] %vm535, %v505
      %545 = vst.msk [vmem:[%s239 + $0x48] sm:$0xff] %vm535, %v508
      %546 = vst.msk [vmem:[%s239 + $0x50] sm:$0xff] %vm535, %v513
      %547 = vst.msk [vmem:[%s239 + $0x58] sm:$0xff] %vm535, %v516
      %548 = vst.msk [vmem:[%s239 + $0x60] sm:$0xff] %vm535, %v521
      %549 = vst.msk [vmem:[%s239 + $0x68] sm:$0xff] %vm535, %v524
      %550 = vst.msk [vmem:[%s239 + $0x70] sm:$0xff] %vm535, %v529
      %551 = vst.msk [vmem:[%s239 + $0x78] sm:$0xff] %vm535, %v532
      %vm552 = vcmask 138336
      %v553 = vsel %vm552, %v473, -inf
      %554 = vmax.xlane.f32.xlu0 %v553
      %v555 = vpop.xlane.xlu0 %554
      %v556 = vsel %vm552, %v476, -inf
      %557 = vmax.xlane.f32.xlu0 %v556
      %v558 = vpop.xlane.xlu0 %557
      %v559 = vsel %vm552, %v481, -inf
      %560 = vmax.xlane.f32.xlu0 %v559
      %v561 = vpop.xlane.xlu0 %560
      %v562 = vsel %vm552, %v484, -inf
      %563 = vmax.xlane.f32.xlu0 %v562
      %v564 = vpop.xlane.xlu0 %563
      %v565 = vsel %vm552, %v489, -inf
      %566 = vmax.xlane.f32.xlu0 %v565
      %v567 = vpop.xlane.xlu0 %566
      %v568 = vsel %vm552, %v492, -inf
      %569 = vmax.xlane.f32.xlu0 %v568
      %v570 = vpop.xlane.xlu0 %569
      %v571 = vsel %vm552, %v497, -inf
      %572 = vmax.xlane.f32.xlu0 %v571
      %v573 = vpop.xlane.xlu0 %572
      %v574 = vsel %vm552, %v500, -inf
      %575 = vmax.xlane.f32.xlu0 %v574
      %v576 = vpop.xlane.xlu0 %575
      %v577 = vsel %vm552, %v505, -inf
      %578 = vmax.xlane.f32.xlu0 %v577
      %v579 = vpop.xlane.xlu0 %578
      %v580 = vsel %vm552, %v508, -inf
      %581 = vmax.xlane.f32.xlu0 %v580
      %v582 = vpop.xlane.xlu0 %581
      %v583 = vsel %vm552, %v513, -inf
      %584 = vmax.xlane.f32.xlu0 %v583
      %v585 = vpop.xlane.xlu0 %584
      %v586 = vsel %vm552, %v516, -inf
      %587 = vmax.xlane.f32.xlu0 %v586
      %v588 = vpop.xlane.xlu0 %587
      %v589 = vsel %vm552, %v521, -inf
      %590 = vmax.xlane.f32.xlu0 %v589
      %v591 = vpop.xlane.xlu0 %590
      %v592 = vsel %vm552, %v524, -inf
      %593 = vmax.xlane.f32.xlu0 %v592
      %v594 = vpop.xlane.xlu0 %593
      %v595 = vsel %vm552, %v529, -inf
      %596 = vmax.xlane.f32.xlu0 %v595
      %v597 = vpop.xlane.xlu0 %596
      %v598 = vsel %vm552, %v532, -inf
      %599 = vmax.xlane.f32.xlu0 %v598
      %v600 = vpop.xlane.xlu0 %599
      %v601 = vsub.f32 %v473, %v555
      %v602 = vsub.f32 %v476, %v558
      %v603 = vsub.f32 %v481, %v561
      %v604 = vsub.f32 %v484, %v564
      %v605 = vsub.f32 %v489, %v567
      %v606 = vsub.f32 %v492, %v570
      %v607 = vsub.f32 %v497, %v573
      %v608 = vsub.f32 %v500, %v576
      %v609 = vsub.f32 %v505, %v579
      %v610 = vsub.f32 %v508, %v582
      %v611 = vsub.f32 %v513, %v585
      %v612 = vsub.f32 %v516, %v588
      %v613 = vsub.f32 %v521, %v591
      %v614 = vsub.f32 %v524, %v594
      %v615 = vsub.f32 %v529, %v597
      %v616 = vsub.f32 %v532, %v600
      %v617 = vmul.f32 %v601, 1.442695
      %v618 = vpow.pop %v617
      %v619 = vmul.f32 %v602, 1.442695
      %v620 = vpow.pop %v619
      %v621 = vmul.f32 %v603, 1.442695
      %v622 = vpow.pop %v621
      %v623 = vmul.f32 %v604, 1.442695
      %v624 = vpow.pop %v623
      %v625 = vmul.f32 %v605, 1.442695
      %v626 = vpow.pop %v625
      %v627 = vmul.f32 %v606, 1.442695
      %v628 = vpow.pop %v627
      %v629 = vmul.f32 %v607, 1.442695
      %v630 = vpow.pop %v629
      %v631 = vmul.f32 %v608, 1.442695
      %v632 = vpow.pop %v631
      %v633 = vmul.f32 %v609, 1.442695
      %v634 = vpow.pop %v633
      %v635 = vmul.f32 %v610, 1.442695
      %v636 = vpow.pop %v635
      %v637 = vmul.f32 %v611, 1.442695
      %v638 = vpow.pop %v637
      %v639 = vmul.f32 %v612, 1.442695
      %v640 = vpow.pop %v639
      %v641 = vmul.f32 %v613, 1.442695
      %v642 = vpow.pop %v641
      %v643 = vmul.f32 %v614, 1.442695
      %v644 = vpow.pop %v643
      %v645 = vmul.f32 %v615, 1.442695
      %v646 = vpow.pop %v645
      %v647 = vmul.f32 %v616, 1.442695
      %v648 = vpow.pop %v647
      %665 = vrot.lane.b32.xlu0 %v618, 116
      %v666 = vpop.permute.xlu0 %665
      %667 = vrot.lane.b32.xlu0 %v620, 116
      %v668 = vpop.permute.xlu0 %667
      %669 = vrot.lane.b32.xlu0 %v622, 116
      %v670 = vpop.permute.xlu0 %669
      %671 = vrot.lane.b32.xlu0 %v624, 116
      %v672 = vpop.permute.xlu0 %671
      %673 = vrot.lane.b32.xlu0 %v626, 116
      %v674 = vpop.permute.xlu0 %673
      %675 = vrot.lane.b32.xlu0 %v628, 116
      %v676 = vpop.permute.xlu0 %675
      %677 = vrot.lane.b32.xlu0 %v630, 116
      %v678 = vpop.permute.xlu0 %677
      %679 = vrot.lane.b32.xlu0 %v632, 116
      %v680 = vpop.permute.xlu0 %679
      %681 = vrot.lane.b32.xlu0 %v634, 116
      %v682 = vpop.permute.xlu0 %681
      %683 = vrot.lane.b32.xlu0 %v636, 116
      %v684 = vpop.permute.xlu0 %683
      %685 = vrot.lane.b32.xlu0 %v638, 116
      %v686 = vpop.permute.xlu0 %685
      %687 = vrot.lane.b32.xlu0 %v640, 116
      %v688 = vpop.permute.xlu0 %687
      %689 = vrot.lane.b32.xlu0 %v642, 116
      %v690 = vpop.permute.xlu0 %689
      %691 = vrot.lane.b32.xlu0 %v644, 116
      %v692 = vpop.permute.xlu0 %691
      %693 = vrot.lane.b32.xlu0 %v646, 116
      %v694 = vpop.permute.xlu0 %693
      %695 = vrot.lane.b32.xlu0 %v648, 116
      %v696 = vpop.permute.xlu0 %695
      %vm713 = vcmask 39936
      %v714 = vsel %vm713, %v666, 0.0
      %715 = vadd.xlane.f32.xlu0 %v714
      %v716 = vpop.xlane.xlu0 %715
      %v717 = vsel %vm713, %v668, 0.0
      %718 = vadd.xlane.f32.xlu0 %v717
      %v719 = vpop.xlane.xlu0 %718
      %v720 = vsel %vm713, %v670, 0.0
      %721 = vadd.xlane.f32.xlu0 %v720
      %v722 = vpop.xlane.xlu0 %721
      %v723 = vsel %vm713, %v672, 0.0
      %724 = vadd.xlane.f32.xlu0 %v723
      %v725 = vpop.xlane.xlu0 %724
      %v726 = vsel %vm713, %v674, 0.0
      %727 = vadd.xlane.f32.xlu0 %v726
      %v728 = vpop.xlane.xlu0 %727
      %v729 = vsel %vm713, %v676, 0.0
      %730 = vadd.xlane.f32.xlu0 %v729
      %v731 = vpop.xlane.xlu0 %730
      %v732 = vsel %vm713, %v678, 0.0
      %733 = vadd.xlane.f32.xlu0 %v732
      %v734 = vpop.xlane.xlu0 %733
      %v735 = vsel %vm713, %v680, 0.0
      %736 = vadd.xlane.f32.xlu0 %v735
      %v737 = vpop.xlane.xlu0 %736
      %v738 = vsel %vm713, %v682, 0.0
      %739 = vadd.xlane.f32.xlu0 %v738
      %v740 = vpop.xlane.xlu0 %739
      %v741 = vsel %vm713, %v684, 0.0
      %742 = vadd.xlane.f32.xlu0 %v741
      %v743 = vpop.xlane.xlu0 %742
      %v744 = vsel %vm713, %v686, 0.0
      %745 = vadd.xlane.f32.xlu0 %v744
      %v746 = vpop.xlane.xlu0 %745
      %v747 = vsel %vm713, %v688, 0.0
      %748 = vadd.xlane.f32.xlu0 %v747
      %v749 = vpop.xlane.xlu0 %748
      %v750 = vsel %vm713, %v690, 0.0
      %751 = vadd.xlane.f32.xlu0 %v750
      %v752 = vpop.xlane.xlu0 %751
      %v753 = vsel %vm713, %v692, 0.0
      %754 = vadd.xlane.f32.xlu0 %v753
      %v755 = vpop.xlane.xlu0 %754
      %v756 = vsel %vm713, %v694, 0.0
      %757 = vadd.xlane.f32.xlu0 %v756
      %v758 = vpop.xlane.xlu0 %757
      %v759 = vsel %vm713, %v696, 0.0
      %760 = vadd.xlane.f32.xlu0 %v759
      %v761 = vpop.xlane.xlu0 %760
      %v762 = vrcp.pop %v716
      %v763 = vmul.f32 %v618, %v762
      %v764 = vrcp.pop %v719
      %v765 = vmul.f32 %v620, %v764
      %v766 = vrcp.pop %v722
      %v767 = vmul.f32 %v622, %v766
      %v768 = vrcp.pop %v725
      %v769 = vmul.f32 %v624, %v768
      %v770 = vrcp.pop %v728
      %v771 = vmul.f32 %v626, %v770
      %v772 = vrcp.pop %v731
      %v773 = vmul.f32 %v628, %v772
      %v774 = vrcp.pop %v734
      %v775 = vmul.f32 %v630, %v774
      %v776 = vrcp.pop %v737
      %v777 = vmul.f32 %v632, %v776
      %v778 = vrcp.pop %v740
      %v779 = vmul.f32 %v634, %v778
      %v780 = vrcp.pop %v743
      %v781 = vmul.f32 %v636, %v780
      %v782 = vrcp.pop %v746
      %v783 = vmul.f32 %v638, %v782
      %v784 = vrcp.pop %v749
      %v785 = vmul.f32 %v640, %v784
      %v786 = vrcp.pop %v752
      %v787 = vmul.f32 %v642, %v786
      %v788 = vrcp.pop %v755
      %v789 = vmul.f32 %v644, %v788
      %v790 = vrcp.pop %v758
      %v791 = vmul.f32 %v646, %v790
      %v792 = vrcp.pop %v761
      %v793 = vmul.f32 %v648, %v792
      %810 = vrot.lane.b32.xlu0 %v763, 116
      %v811 = vpop.permute.xlu0 %810
      %812 = vrot.lane.b32.xlu0 %v765, 116
      %v813 = vpop.permute.xlu0 %812
      %814 = vrot.lane.b32.xlu0 %v767, 116
      %v815 = vpop.permute.xlu0 %814
      %816 = vrot.lane.b32.xlu0 %v769, 116
      %v817 = vpop.permute.xlu0 %816
      %818 = vrot.lane.b32.xlu0 %v771, 116
      %v819 = vpop.permute.xlu0 %818
      %820 = vrot.lane.b32.xlu0 %v773, 116
      %v821 = vpop.permute.xlu0 %820
      %822 = vrot.lane.b32.xlu0 %v775, 116
      %v823 = vpop.permute.xlu0 %822
      %824 = vrot.lane.b32.xlu0 %v777, 116
      %v825 = vpop.permute.xlu0 %824
      %826 = vrot.lane.b32.xlu0 %v779, 116
      %v827 = vpop.permute.xlu0 %826
      %828 = vrot.lane.b32.xlu0 %v781, 116
      %v829 = vpop.permute.xlu0 %828
      %830 = vrot.lane.b32.xlu0 %v783, 116
      %v831 = vpop.permute.xlu0 %830
      %832 = vrot.lane.b32.xlu0 %v785, 116
      %v833 = vpop.permute.xlu0 %832
      %834 = vrot.lane.b32.xlu0 %v787, 116
      %v835 = vpop.permute.xlu0 %834
      %836 = vrot.lane.b32.xlu0 %v789, 116
      %v837 = vpop.permute.xlu0 %836
      %838 = vrot.lane.b32.xlu0 %v791, 116
      %v839 = vpop.permute.xlu0 %838
      %840 = vrot.lane.b32.xlu0 %v793, 116
      %v841 = vpop.permute.xlu0 %840
      %858 = vst.msk [vmem:[%s244] sm:$0xff] %vm713, %v811
      %859 = vst.msk [vmem:[%s244 + $0x8] sm:$0xff] %vm713, %v813
      %860 = vst.msk [vmem:[%s244 + $0x10] sm:$0xff] %vm713, %v815
      %861 = vst.msk [vmem:[%s244 + $0x18] sm:$0xff] %vm713, %v817
      %862 = vst.msk [vmem:[%s244 + $0x20] sm:$0xff] %vm713, %v819
      %863 = vst.msk [vmem:[%s244 + $0x28] sm:$0xff] %vm713, %v821
      %864 = vst.msk [vmem:[%s244 + $0x30] sm:$0xff] %vm713, %v823
      %865 = vst.msk [vmem:[%s244 + $0x38] sm:$0xff] %vm713, %v825
      %866 = vst.msk [vmem:[%s244 + $0x40] sm:$0xff] %vm713, %v827
      %867 = vst.msk [vmem:[%s244 + $0x48] sm:$0xff] %vm713, %v829
      %868 = vst.msk [vmem:[%s244 + $0x50] sm:$0xff] %vm713, %v831
      %869 = vst.msk [vmem:[%s244 + $0x58] sm:$0xff] %vm713, %v833
      %870 = vst.msk [vmem:[%s244 + $0x60] sm:$0xff] %vm713, %v835
      %871 = vst.msk [vmem:[%s244 + $0x68] sm:$0xff] %vm713, %v837
      %872 = vst.msk [vmem:[%s244 + $0x70] sm:$0xff] %vm713, %v839
      %873 = vst.msk [vmem:[%s244 + $0x78] sm:$0xff] %vm713, %v841
      %vm874 = vcmask 179336
      %v875 = vsel %vm874, %v473, -inf
      %876 = vmax.xlane.f32.xlu0 %v875
      %v877 = vpop.xlane.xlu0 %876
      %v878 = vsel %vm874, %v476, -inf
      %879 = vmax.xlane.f32.xlu0 %v878
      %v880 = vpop.xlane.xlu0 %879
      %v881 = vsel %vm874, %v481, -inf
      %882 = vmax.xlane.f32.xlu0 %v881
      %v883 = vpop.xlane.xlu0 %882
      %v884 = vsel %vm874, %v484, -inf
      %885 = vmax.xlane.f32.xlu0 %v884
      %v886 = vpop.xlane.xlu0 %885
      %v887 = vsel %vm874, %v489, -inf
      %888 = vmax.xlane.f32.xlu0 %v887
      %v889 = vpop.xlane.xlu0 %888
      %v890 = vsel %vm874, %v492, -inf
      %891 = vmax.xlane.f32.xlu0 %v890
      %v892 = vpop.xlane.xlu0 %891
      %v893 = vsel %vm874, %v497, -inf
      %894 = vmax.xlane.f32.xlu0 %v893
      %v895 = vpop.xlane.xlu0 %894
      %v896 = vsel %vm874, %v500, -inf
      %897 = vmax.xlane.f32.xlu0 %v896
      %v898 = vpop.xlane.xlu0 %897
      %v899 = vsel %vm874, %v505, -inf
      %900 = vmax.xlane.f32.xlu0 %v899
      %v901 = vpop.xlane.xlu0 %900
      %v902 = vsel %vm874, %v508, -inf
      %903 = vmax.xlane.f32.xlu0 %v902
      %v904 = vpop.xlane.xlu0 %903
      %v905 = vsel %vm874, %v513, -inf
      %906 = vmax.xlane.f32.xlu0 %v905
      %v907 = vpop.xlane.xlu0 %906
      %v908 = vsel %vm874, %v516, -inf
      %909 = vmax.xlane.f32.xlu0 %v908
      %v910 = vpop.xlane.xlu0 %909
      %v911 = vsel %vm874, %v521, -inf
      %912 = vmax.xlane.f32.xlu0 %v911
      %v913 = vpop.xlane.xlu0 %912
      %v914 = vsel %vm874, %v524, -inf
      %915 = vmax.xlane.f32.xlu0 %v914
      %v916 = vpop.xlane.xlu0 %915
      %v917 = vsel %vm874, %v529, -inf
      %918 = vmax.xlane.f32.xlu0 %v917
      %v919 = vpop.xlane.xlu0 %918
      %v920 = vsel %vm874, %v532, -inf
      %921 = vmax.xlane.f32.xlu0 %v920
      %v922 = vpop.xlane.xlu0 %921
      %v923 = vsub.f32 %v473, %v877
      %v924 = vsub.f32 %v476, %v880
      %v925 = vsub.f32 %v481, %v883
      %v926 = vsub.f32 %v484, %v886
      %v927 = vsub.f32 %v489, %v889
      %v928 = vsub.f32 %v492, %v892
      %v929 = vsub.f32 %v497, %v895
      %v930 = vsub.f32 %v500, %v898
      %v931 = vsub.f32 %v505, %v901
      %v932 = vsub.f32 %v508, %v904
      %v933 = vsub.f32 %v513, %v907
      %v934 = vsub.f32 %v516, %v910
      %v935 = vsub.f32 %v521, %v913
      %v936 = vsub.f32 %v524, %v916
      %v937 = vsub.f32 %v529, %v919
      %v938 = vsub.f32 %v532, %v922
      %v939 = vmul.f32 %v923, 1.442695
      %v940 = vpow.pop %v939
      %v941 = vmul.f32 %v924, 1.442695
      %v942 = vpow.pop %v941
      %v943 = vmul.f32 %v925, 1.442695
      %v944 = vpow.pop %v943
      %v945 = vmul.f32 %v926, 1.442695
      %v946 = vpow.pop %v945
      %v947 = vmul.f32 %v927, 1.442695
      %v948 = vpow.pop %v947
      %v949 = vmul.f32 %v928, 1.442695
      %v950 = vpow.pop %v949
      %v951 = vmul.f32 %v929, 1.442695
      %v952 = vpow.pop %v951
      %v953 = vmul.f32 %v930, 1.442695
      %v954 = vpow.pop %v953
      %v955 = vmul.f32 %v931, 1.442695
      %v956 = vpow.pop %v955
      %v957 = vmul.f32 %v932, 1.442695
      %v958 = vpow.pop %v957
      %v959 = vmul.f32 %v933, 1.442695
      %v960 = vpow.pop %v959
      %v961 = vmul.f32 %v934, 1.442695
      %v962 = vpow.pop %v961
      %v963 = vmul.f32 %v935, 1.442695
      %v964 = vpow.pop %v963
      %v965 = vmul.f32 %v936, 1.442695
      %v966 = vpow.pop %v965
      %v967 = vmul.f32 %v937, 1.442695
      %v968 = vpow.pop %v967
      %v969 = vmul.f32 %v938, 1.442695
      %v970 = vpow.pop %v969
      %987 = vrot.lane.b32.xlu0 %v940, 111
      %v988 = vpop.permute.xlu0 %987
      %989 = vrot.lane.b32.xlu0 %v942, 111
      %v990 = vpop.permute.xlu0 %989
      %991 = vrot.lane.b32.xlu0 %v944, 111
      %v992 = vpop.permute.xlu0 %991
      %993 = vrot.lane.b32.xlu0 %v946, 111
      %v994 = vpop.permute.xlu0 %993
      %995 = vrot.lane.b32.xlu0 %v948, 111
      %v996 = vpop.permute.xlu0 %995
      %997 = vrot.lane.b32.xlu0 %v950, 111
      %v998 = vpop.permute.xlu0 %997
      %999 = vrot.lane.b32.xlu0 %v952, 111
      %v1000 = vpop.permute.xlu0 %999
      %1001 = vrot.lane.b32.xlu0 %v954, 111
      %v1002 = vpop.permute.xlu0 %1001
      %1003 = vrot.lane.b32.xlu0 %v956, 111
      %v1004 = vpop.permute.xlu0 %1003
      %1005 = vrot.lane.b32.xlu0 %v958, 111
      %v1006 = vpop.permute.xlu0 %1005
      %1007 = vrot.lane.b32.xlu0 %v960, 111
      %v1008 = vpop.permute.xlu0 %1007
      %1009 = vrot.lane.b32.xlu0 %v962, 111
      %v1010 = vpop.permute.xlu0 %1009
      %1011 = vrot.lane.b32.xlu0 %v964, 111
      %v1012 = vpop.permute.xlu0 %1011
      %1013 = vrot.lane.b32.xlu0 %v966, 111
      %v1014 = vpop.permute.xlu0 %1013
      %1015 = vrot.lane.b32.xlu0 %v968, 111
      %v1016 = vpop.permute.xlu0 %1015
      %1017 = vrot.lane.b32.xlu0 %v970, 111
      %v1018 = vpop.permute.xlu0 %1017
      %v1035 = vsel %vm713, %v988, 0.0
      %1036 = vadd.xlane.f32.xlu0 %v1035
      %v1037 = vpop.xlane.xlu0 %1036
      %v1038 = vsel %vm713, %v990, 0.0
      %1039 = vadd.xlane.f32.xlu0 %v1038
      %v1040 = vpop.xlane.xlu0 %1039
      %v1041 = vsel %vm713, %v992, 0.0
      %1042 = vadd.xlane.f32.xlu0 %v1041
      %v1043 = vpop.xlane.xlu0 %1042
      %v1044 = vsel %vm713, %v994, 0.0
      %1045 = vadd.xlane.f32.xlu0 %v1044
      %v1046 = vpop.xlane.xlu0 %1045
      %v1047 = vsel %vm713, %v996, 0.0
      %1048 = vadd.xlane.f32.xlu0 %v1047
      %v1049 = vpop.xlane.xlu0 %1048
      %v1050 = vsel %vm713, %v998, 0.0
      %1051 = vadd.xlane.f32.xlu0 %v1050
      %v1052 = vpop.xlane.xlu0 %1051
      %v1053 = vsel %vm713, %v1000, 0.0
      %1054 = vadd.xlane.f32.xlu0 %v1053
      %v1055 = vpop.xlane.xlu0 %1054
      %v1056 = vsel %vm713, %v1002, 0.0
      %1057 = vadd.xlane.f32.xlu0 %v1056
      %v1058 = vpop.xlane.xlu0 %1057
      %v1059 = vsel %vm713, %v1004, 0.0
      %1060 = vadd.xlane.f32.xlu0 %v1059
      %v1061 = vpop.xlane.xlu0 %1060
      %v1062 = vsel %vm713, %v1006, 0.0
      %1063 = vadd.xlane.f32.xlu0 %v1062
      %v1064 = vpop.xlane.xlu0 %1063
      %v1065 = vsel %vm713, %v1008, 0.0
      %1066 = vadd.xlane.f32.xlu0 %v1065
      %v1067 = vpop.xlane.xlu0 %1066
      %v1068 = vsel %vm713, %v1010, 0.0
      %1069 = vadd.xlane.f32.xlu0 %v1068
      %v1070 = vpop.xlane.xlu0 %1069
      %v1071 = vsel %vm713, %v1012, 0.0
      %1072 = vadd.xlane.f32.xlu0 %v1071
      %v1073 = vpop.xlane.xlu0 %1072
      %v1074 = vsel %vm713, %v1014, 0.0
      %1075 = vadd.xlane.f32.xlu0 %v1074
      %v1076 = vpop.xlane.xlu0 %1075
      %v1077 = vsel %vm713, %v1016, 0.0
      %1078 = vadd.xlane.f32.xlu0 %v1077
      %v1079 = vpop.xlane.xlu0 %1078
      %v1080 = vsel %vm713, %v1018, 0.0
      %1081 = vadd.xlane.f32.xlu0 %v1080
      %v1082 = vpop.xlane.xlu0 %1081
      %v1083 = vrcp.pop %v1037
      %v1084 = vmul.f32 %v940, %v1083
      %v1085 = vrcp.pop %v1040
      %v1086 = vmul.f32 %v942, %v1085
      %v1087 = vrcp.pop %v1043
      %v1088 = vmul.f32 %v944, %v1087
      %v1089 = vrcp.pop %v1046
      %v1090 = vmul.f32 %v946, %v1089
      %v1091 = vrcp.pop %v1049
      %v1092 = vmul.f32 %v948, %v1091
      %v1093 = vrcp.pop %v1052
      %v1094 = vmul.f32 %v950, %v1093
      %v1095 = vrcp.pop %v1055
      %v1096 = vmul.f32 %v952, %v1095
      %v1097 = vrcp.pop %v1058
      %v1098 = vmul.f32 %v954, %v1097
      %v1099 = vrcp.pop %v1061
      %v1100 = vmul.f32 %v956, %v1099
      %v1101 = vrcp.pop %v1064
      %v1102 = vmul.f32 %v958, %v1101
      %v1103 = vrcp.pop %v1067
      %v1104 = vmul.f32 %v960, %v1103
      %v1105 = vrcp.pop %v1070
      %v1106 = vmul.f32 %v962, %v1105
      %v1107 = vrcp.pop %v1073
      %v1108 = vmul.f32 %v964, %v1107
      %v1109 = vrcp.pop %v1076
      %v1110 = vmul.f32 %v966, %v1109
      %v1111 = vrcp.pop %v1079
      %v1112 = vmul.f32 %v968, %v1111
      %v1113 = vrcp.pop %v1082
      %v1114 = vmul.f32 %v970, %v1113
      %1131 = vrot.lane.b32.xlu0 %v1084, 116
      %v1132 = vpop.permute.xlu0 %1131
      %1133 = vrot.lane.b32.xlu0 %v1086, 116
      %v1134 = vpop.permute.xlu0 %1133
      %1135 = vrot.lane.b32.xlu0 %v1088, 116
      %v1136 = vpop.permute.xlu0 %1135
      %1137 = vrot.lane.b32.xlu0 %v1090, 116
      %v1138 = vpop.permute.xlu0 %1137
      %1139 = vrot.lane.b32.xlu0 %v1092, 116
      %v1140 = vpop.permute.xlu0 %1139
      %1141 = vrot.lane.b32.xlu0 %v1094, 116
      %v1142 = vpop.permute.xlu0 %1141
      %1143 = vrot.lane.b32.xlu0 %v1096, 116
      %v1144 = vpop.permute.xlu0 %1143
      %1145 = vrot.lane.b32.xlu0 %v1098, 116
      %v1146 = vpop.permute.xlu0 %1145
      %1147 = vrot.lane.b32.xlu0 %v1100, 116
      %v1148 = vpop.permute.xlu0 %1147
      %1149 = vrot.lane.b32.xlu0 %v1102, 116
      %v1150 = vpop.permute.xlu0 %1149
      %1151 = vrot.lane.b32.xlu0 %v1104, 116
      %v1152 = vpop.permute.xlu0 %1151
      %1153 = vrot.lane.b32.xlu0 %v1106, 116
      %v1154 = vpop.permute.xlu0 %1153
      %1155 = vrot.lane.b32.xlu0 %v1108, 116
      %v1156 = vpop.permute.xlu0 %1155
      %1157 = vrot.lane.b32.xlu0 %v1110, 116
      %v1158 = vpop.permute.xlu0 %1157
      %1159 = vrot.lane.b32.xlu0 %v1112, 116
      %v1160 = vpop.permute.xlu0 %1159
      %1161 = vrot.lane.b32.xlu0 %v1114, 116
      %v1162 = vpop.permute.xlu0 %1161
      %vm1179 = vcmask 80936
      %1180 = vst.msk [vmem:[%s244] sm:$0xff] %vm1179, %v1132
      %1181 = vst.msk [vmem:[%s244 + $0x8] sm:$0xff] %vm1179, %v1134
      %1182 = vst.msk [vmem:[%s244 + $0x10] sm:$0xff] %vm1179, %v1136
      %1183 = vst.msk [vmem:[%s244 + $0x18] sm:$0xff] %vm1179, %v1138
      %1184 = vst.msk [vmem:[%s244 + $0x20] sm:$0xff] %vm1179, %v1140
      %1185 = vst.msk [vmem:[%s244 + $0x28] sm:$0xff] %vm1179, %v1142
      %1186 = vst.msk [vmem:[%s244 + $0x30] sm:$0xff] %vm1179, %v1144
      %1187 = vst.msk [vmem:[%s244 + $0x38] sm:$0xff] %vm1179, %v1146
      %1188 = vst.msk [vmem:[%s244 + $0x40] sm:$0xff] %vm1179, %v1148
      %1189 = vst.msk [vmem:[%s244 + $0x48] sm:$0xff] %vm1179, %v1150
      %1190 = vst.msk [vmem:[%s244 + $0x50] sm:$0xff] %vm1179, %v1152
      %1191 = vst.msk [vmem:[%s244 + $0x58] sm:$0xff] %vm1179, %v1154
      %1192 = vst.msk [vmem:[%s244 + $0x60] sm:$0xff] %vm1179, %v1156
      %1193 = vst.msk [vmem:[%s244 + $0x68] sm:$0xff] %vm1179, %v1158
      %1194 = vst.msk [vmem:[%s244 + $0x70] sm:$0xff] %vm1179, %v1160
      %1195 = vst.msk [vmem:[%s244 + $0x78] sm:$0xff] %vm1179, %v1162
      %vm1196 = vcmask 220336
      %v1197 = vsel %vm1196, %v473, -inf
      %1198 = vmax.xlane.f32.xlu0 %v1197
      %v1199 = vpop.xlane.xlu0 %1198
      %v1200 = vsel %vm1196, %v476, -inf
      %1201 = vmax.xlane.f32.xlu0 %v1200
      %v1202 = vpop.xlane.xlu0 %1201
      %v1203 = vsel %vm1196, %v481, -inf
      %1204 = vmax.xlane.f32.xlu0 %v1203
      %v1205 = vpop.xlane.xlu0 %1204
      %v1206 = vsel %vm1196, %v484, -inf
      %1207 = vmax.xlane.f32.xlu0 %v1206
      %v1208 = vpop.xlane.xlu0 %1207
      %v1209 = vsel %vm1196, %v489, -inf
      %1210 = vmax.xlane.f32.xlu0 %v1209
      %v1211 = vpop.xlane.xlu0 %1210
      %v1212 = vsel %vm1196, %v492, -inf
      %1213 = vmax.xlane.f32.xlu0 %v1212
      %v1214 = vpop.xlane.xlu0 %1213
      %v1215 = vsel %vm1196, %v497, -inf
      %1216 = vmax.xlane.f32.xlu0 %v1215
      %v1217 = vpop.xlane.xlu0 %1216
      %v1218 = vsel %vm1196, %v500, -inf
      %1219 = vmax.xlane.f32.xlu0 %v1218
      %v1220 = vpop.xlane.xlu0 %1219
      %v1221 = vsel %vm1196, %v505, -inf
      %1222 = vmax.xlane.f32.xlu0 %v1221
      %v1223 = vpop.xlane.xlu0 %1222
      %v1224 = vsel %vm1196, %v508, -inf
      %1225 = vmax.xlane.f32.xlu0 %v1224
      %v1226 = vpop.xlane.xlu0 %1225
      %v1227 = vsel %vm1196, %v513, -inf
      %1228 = vmax.xlane.f32.xlu0 %v1227
      %v1229 = vpop.xlane.xlu0 %1228
      %v1230 = vsel %vm1196, %v516, -inf
      %1231 = vmax.xlane.f32.xlu0 %v1230
      %v1232 = vpop.xlane.xlu0 %1231
      %v1233 = vsel %vm1196, %v521, -inf
      %1234 = vmax.xlane.f32.xlu0 %v1233
      %v1235 = vpop.xlane.xlu0 %1234
      %v1236 = vsel %vm1196, %v524, -inf
      %1237 = vmax.xlane.f32.xlu0 %v1236
      %v1238 = vpop.xlane.xlu0 %1237
      %v1239 = vsel %vm1196, %v529, -inf
      %1240 = vmax.xlane.f32.xlu0 %v1239
      %v1241 = vpop.xlane.xlu0 %1240
      %v1242 = vsel %vm1196, %v532, -inf
      %1243 = vmax.xlane.f32.xlu0 %v1242
      %v1244 = vpop.xlane.xlu0 %1243
      %v1245 = vsub.f32 %v473, %v1199
      %v1246 = vsub.f32 %v476, %v1202
      %v1247 = vsub.f32 %v481, %v1205
      %v1248 = vsub.f32 %v484, %v1208
      %v1249 = vsub.f32 %v489, %v1211
      %v1250 = vsub.f32 %v492, %v1214
      %v1251 = vsub.f32 %v497, %v1217
      %v1252 = vsub.f32 %v500, %v1220
      %v1253 = vsub.f32 %v505, %v1223
      %v1254 = vsub.f32 %v508, %v1226
      %v1255 = vsub.f32 %v513, %v1229
      %v1256 = vsub.f32 %v516, %v1232
      %v1257 = vsub.f32 %v521, %v1235
      %v1258 = vsub.f32 %v524, %v1238
      %v1259 = vsub.f32 %v529, %v1241
      %v1260 = vsub.f32 %v532, %v1244
      %v1261 = vmul.f32 %v1245, 1.442695
      %v1262 = vpow.pop %v1261
      %v1263 = vmul.f32 %v1246, 1.442695
      %v1264 = vpow.pop %v1263
      %v1265 = vmul.f32 %v1247, 1.442695
      %v1266 = vpow.pop %v1265
      %v1267 = vmul.f32 %v1248, 1.442695
      %v1268 = vpow.pop %v1267
      %v1269 = vmul.f32 %v1249, 1.442695
      %v1270 = vpow.pop %v1269
      %v1271 = vmul.f32 %v1250, 1.442695
      %v1272 = vpow.pop %v1271
      %v1273 = vmul.f32 %v1251, 1.442695
      %v1274 = vpow.pop %v1273
      %v1275 = vmul.f32 %v1252, 1.442695
      %v1276 = vpow.pop %v1275
      %v1277 = vmul.f32 %v1253, 1.442695
      %v1278 = vpow.pop %v1277
      %v1279 = vmul.f32 %v1254, 1.442695
      %v1280 = vpow.pop %v1279
      %v1281 = vmul.f32 %v1255, 1.442695
      %v1282 = vpow.pop %v1281
      %v1283 = vmul.f32 %v1256, 1.442695
      %v1284 = vpow.pop %v1283
      %v1285 = vmul.f32 %v1257, 1.442695
      %v1286 = vpow.pop %v1285
      %v1287 = vmul.f32 %v1258, 1.442695
      %v1288 = vpow.pop %v1287
      %v1289 = vmul.f32 %v1259, 1.442695
      %v1290 = vpow.pop %v1289
      %v1291 = vmul.f32 %v1260, 1.442695
      %v1292 = vpow.pop %v1291
      %1309 = vrot.lane.b32.xlu0 %v1262, 106
      %v1310 = vpop.permute.xlu0 %1309
      %1311 = vrot.lane.b32.xlu0 %v1264, 106
      %v1312 = vpop.permute.xlu0 %1311
      %1313 = vrot.lane.b32.xlu0 %v1266, 106
      %v1314 = vpop.permute.xlu0 %1313
      %1315 = vrot.lane.b32.xlu0 %v1268, 106
      %v1316 = vpop.permute.xlu0 %1315
      %1317 = vrot.lane.b32.xlu0 %v1270, 106
      %v1318 = vpop.permute.xlu0 %1317
      %1319 = vrot.lane.b32.xlu0 %v1272, 106
      %v1320 = vpop.permute.xlu0 %1319
      %1321 = vrot.lane.b32.xlu0 %v1274, 106
      %v1322 = vpop.permute.xlu0 %1321
      %1323 = vrot.lane.b32.xlu0 %v1276, 106
      %v1324 = vpop.permute.xlu0 %1323
      %1325 = vrot.lane.b32.xlu0 %v1278, 106
      %v1326 = vpop.permute.xlu0 %1325
      %1327 = vrot.lane.b32.xlu0 %v1280, 106
      %v1328 = vpop.permute.xlu0 %1327
      %1329 = vrot.lane.b32.xlu0 %v1282, 106
      %v1330 = vpop.permute.xlu0 %1329
      %1331 = vrot.lane.b32.xlu0 %v1284, 106
      %v1332 = vpop.permute.xlu0 %1331
      %1333 = vrot.lane.b32.xlu0 %v1286, 106
      %v1334 = vpop.permute.xlu0 %1333
      %1335 = vrot.lane.b32.xlu0 %v1288, 106
      %v1336 = vpop.permute.xlu0 %1335
      %1337 = vrot.lane.b32.xlu0 %v1290, 106
      %v1338 = vpop.permute.xlu0 %1337
      %1339 = vrot.lane.b32.xlu0 %v1292, 106
      %v1340 = vpop.permute.xlu0 %1339
      %v1357 = vsel %vm713, %v1310, 0.0
      %1358 = vadd.xlane.f32.xlu0 %v1357
      %v1359 = vpop.xlane.xlu0 %1358
      %v1360 = vsel %vm713, %v1312, 0.0
      %1361 = vadd.xlane.f32.xlu0 %v1360
      %v1362 = vpop.xlane.xlu0 %1361
      %v1363 = vsel %vm713, %v1314, 0.0
      %1364 = vadd.xlane.f32.xlu0 %v1363
      %v1365 = vpop.xlane.xlu0 %1364
      %v1366 = vsel %vm713, %v1316, 0.0
      %1367 = vadd.xlane.f32.xlu0 %v1366
      %v1368 = vpop.xlane.xlu0 %1367
      %v1369 = vsel %vm713, %v1318, 0.0
      %1370 = vadd.xlane.f32.xlu0 %v1369
      %v1371 = vpop.xlane.xlu0 %1370
      %v1372 = vsel %vm713, %v1320, 0.0
      %1373 = vadd.xlane.f32.xlu0 %v1372
      %v1374 = vpop.xlane.xlu0 %1373
      %v1375 = vsel %vm713, %v1322, 0.0
      %1376 = vadd.xlane.f32.xlu0 %v1375
      %v1377 = vpop.xlane.xlu0 %1376
      %v1378 = vsel %vm713, %v1324, 0.0
      %1379 = vadd.xlane.f32.xlu0 %v1378
      %v1380 = vpop.xlane.xlu0 %1379
      %v1381 = vsel %vm713, %v1326, 0.0
      %1382 = vadd.xlane.f32.xlu0 %v1381
      %v1383 = vpop.xlane.xlu0 %1382
      %v1384 = vsel %vm713, %v1328, 0.0
      %1385 = vadd.xlane.f32.xlu0 %v1384
      %v1386 = vpop.xlane.xlu0 %1385
      %v1387 = vsel %vm713, %v1330, 0.0
      %1388 = vadd.xlane.f32.xlu0 %v1387
      %v1389 = vpop.xlane.xlu0 %1388
      %v1390 = vsel %vm713, %v1332, 0.0
      %1391 = vadd.xlane.f32.xlu0 %v1390
      %v1392 = vpop.xlane.xlu0 %1391
      %v1393 = vsel %vm713, %v1334, 0.0
      %1394 = vadd.xlane.f32.xlu0 %v1393
      %v1395 = vpop.xlane.xlu0 %1394
      %v1396 = vsel %vm713, %v1336, 0.0
      %1397 = vadd.xlane.f32.xlu0 %v1396
      %v1398 = vpop.xlane.xlu0 %1397
      %v1399 = vsel %vm713, %v1338, 0.0
      %1400 = vadd.xlane.f32.xlu0 %v1399
      %v1401 = vpop.xlane.xlu0 %1400
      %v1402 = vsel %vm713, %v1340, 0.0
      %1403 = vadd.xlane.f32.xlu0 %v1402
      %v1404 = vpop.xlane.xlu0 %1403
      %v1405 = vrcp.pop %v1359
      %v1406 = vmul.f32 %v1262, %v1405
      %v1407 = vrcp.pop %v1362
      %v1408 = vmul.f32 %v1264, %v1407
      %v1409 = vrcp.pop %v1365
      %v1410 = vmul.f32 %v1266, %v1409
      %v1411 = vrcp.pop %v1368
      %v1412 = vmul.f32 %v1268, %v1411
      %v1413 = vrcp.pop %v1371
      %v1414 = vmul.f32 %v1270, %v1413
      %v1415 = vrcp.pop %v1374
      %v1416 = vmul.f32 %v1272, %v1415
      %v1417 = vrcp.pop %v1377
      %v1418 = vmul.f32 %v1274, %v1417
      %v1419 = vrcp.pop %v1380
      %v1420 = vmul.f32 %v1276, %v1419
      %v1421 = vrcp.pop %v1383
      %v1422 = vmul.f32 %v1278, %v1421
      %v1423 = vrcp.pop %v1386
      %v1424 = vmul.f32 %v1280, %v1423
      %v1425 = vrcp.pop %v1389
      %v1426 = vmul.f32 %v1282, %v1425
      %v1427 = vrcp.pop %v1392
      %v1428 = vmul.f32 %v1284, %v1427
      %v1429 = vrcp.pop %v1395
      %v1430 = vmul.f32 %v1286, %v1429
      %v1431 = vrcp.pop %v1398
      %v1432 = vmul.f32 %v1288, %v1431
      %v1433 = vrcp.pop %v1401
      %v1434 = vmul.f32 %v1290, %v1433
      %v1435 = vrcp.pop %v1404
      %v1436 = vmul.f32 %v1292, %v1435
      %1453 = vrot.lane.b32.xlu0 %v1406, 116
      %v1454 = vpop.permute.xlu0 %1453
      %1455 = vrot.lane.b32.xlu0 %v1408, 116
      %v1456 = vpop.permute.xlu0 %1455
      %1457 = vrot.lane.b32.xlu0 %v1410, 116
      %v1458 = vpop.permute.xlu0 %1457
      %1459 = vrot.lane.b32.xlu0 %v1412, 116
      %v1460 = vpop.permute.xlu0 %1459
      %1461 = vrot.lane.b32.xlu0 %v1414, 116
      %v1462 = vpop.permute.xlu0 %1461
      %1463 = vrot.lane.b32.xlu0 %v1416, 116
      %v1464 = vpop.permute.xlu0 %1463
      %1465 = vrot.lane.b32.xlu0 %v1418, 116
      %v1466 = vpop.permute.xlu0 %1465
      %1467 = vrot.lane.b32.xlu0 %v1420, 116
      %v1468 = vpop.permute.xlu0 %1467
      %1469 = vrot.lane.b32.xlu0 %v1422, 116
      %v1470 = vpop.permute.xlu0 %1469
      %1471 = vrot.lane.b32.xlu0 %v1424, 116
      %v1472 = vpop.permute.xlu0 %1471
      %1473 = vrot.lane.b32.xlu0 %v1426, 116
      %v1474 = vpop.permute.xlu0 %1473
      %1475 = vrot.lane.b32.xlu0 %v1428, 116
      %v1476 = vpop.permute.xlu0 %1475
      %1477 = vrot.lane.b32.xlu0 %v1430, 116
      %v1478 = vpop.permute.xlu0 %1477
      %1479 = vrot.lane.b32.xlu0 %v1432, 116
      %v1480 = vpop.permute.xlu0 %1479
      %1481 = vrot.lane.b32.xlu0 %v1434, 116
      %v1482 = vpop.permute.xlu0 %1481
      %1483 = vrot.lane.b32.xlu0 %v1436, 116
      %v1484 = vpop.permute.xlu0 %1483
      %vm1501 = vcmask 121936
      %1502 = vst.msk [vmem:[%s244] sm:$0xff] %vm1501, %v1454
      %1503 = vst.msk [vmem:[%s244 + $0x8] sm:$0xff] %vm1501, %v1456
      %1504 = vst.msk [vmem:[%s244 + $0x10] sm:$0xff] %vm1501, %v1458
      %1505 = vst.msk [vmem:[%s244 + $0x18] sm:$0xff] %vm1501, %v1460
      %1506 = vst.msk [vmem:[%s244 + $0x20] sm:$0xff] %vm1501, %v1462
      %1507 = vst.msk [vmem:[%s244 + $0x28] sm:$0xff] %vm1501, %v1464
      %1508 = vst.msk [vmem:[%s244 + $0x30] sm:$0xff] %vm1501, %v1466
      %1509 = vst.msk [vmem:[%s244 + $0x38] sm:$0xff] %vm1501, %v1468
      %1510 = vst.msk [vmem:[%s244 + $0x40] sm:$0xff] %vm1501, %v1470
      %1511 = vst.msk [vmem:[%s244 + $0x48] sm:$0xff] %vm1501, %v1472
      %1512 = vst.msk [vmem:[%s244 + $0x50] sm:$0xff] %vm1501, %v1474
      %1513 = vst.msk [vmem:[%s244 + $0x58] sm:$0xff] %vm1501, %v1476
      %1514 = vst.msk [vmem:[%s244 + $0x60] sm:$0xff] %vm1501, %v1478
      %1515 = vst.msk [vmem:[%s244 + $0x68] sm:$0xff] %vm1501, %v1480
      %1516 = vst.msk [vmem:[%s244 + $0x70] sm:$0xff] %vm1501, %v1482
      %1517 = vst.msk [vmem:[%s244 + $0x78] sm:$0xff] %vm1501, %v1484
      %p1518 = scmp.lt.s32.totalorder %s16, 1
      %s1519 = scalar_select %p1518, %s16, 1
      %s1520 = smul.addr %s1519, 16
      %s1521 = smul.addr %s1520, 8
      %s1522 = scalar_lea.vmem %s3, %s1521
      %p1523 = scmp.lt.s32.totalorder %s16, 1
      %s1524 = scalar_select %p1523, %s16, 1
      %s1525 = smul.addr %s1524, 16
      %s1526 = smul.addr %s1525, 8
      %s1527 = scalar_lea.vmem %s4, %s1526
      // Predicated region
      $region33: #{xssd_forward.7} parent=31 // pred_check
        %p1528 = pneg %p112
      $region34: #{xssd_forward.7} parent=31 // pred_check_branch
        %1530 = sbr.rel (%p1528) target = $region36
      $region35: #{xssd_forward.7} parent=31 // pred_region
        _
      $region36: #{xssd_forward.7} parent=31 // pred_fallthru
        _
      // Predicated region
      $region37: #{xssd_forward.7} parent=31 // pred_check
        %p1531 = pneg %p138
      $region38: #{xssd_forward.7} parent=31 // pred_check_branch
        %1533 = sbr.rel (%p1531) target = $region40
      $region39: #{xssd_forward.7} parent=31 // pred_region
        _
      $region40: #{xssd_forward.7} parent=31 // pred_fallthru
        _
    $region32: #{xssd_forward.7} parent=5 // pred_fallthru
      _
    %p1534 = scmp.le.s32.totalorder 2, %s11
    // Predicated region
    $region41: #{xssd_forward.7} parent=5 // pred_check
      %p1535 = pneg %p1534
    $region42: #{xssd_forward.7} parent=5 // pred_check_branch
      %1537 = sbr.rel (%p1535) target = $region44
    $region43: #{xssd_forward.7} parent=5 // pred_region
      %s1538 = ssub.s32 %s11, 2
      // Predicated region
      $region45: #{xssd_forward.7} parent=43 // pred_check
        %p1539 = pneg %p118
      $region46: #{xssd_forward.7} parent=43 // pred_check_branch
        %1541 = sbr.rel (%p1539) target = $region48
      $region47: #{xssd_forward.7} parent=43 // pred_region
        %p1542 = scmp.lt.s32.totalorder %s17, 1
        %s1543 = scalar_select %p1542, %s17, 1
        %s1544 = smul.addr %s1543, 16
        %s1545 = smul.addr %s1544, 8
        %s1546 = scalar_lea.vmem %s3, %s1545
      $region48: #{xssd_forward.7} parent=43 // pred_fallthru
        _
      // Predicated region
      $region49: #{xssd_forward.7} parent=43 // pred_check
        %p1547 = pneg %p144
      $region50: #{xssd_forward.7} parent=43 // pred_check_branch
        %1549 = sbr.rel (%p1547) target = $region52
      $region51: #{xssd_forward.7} parent=43 // pred_region
        %p1550 = scmp.lt.s32.totalorder %s17, 1
        %s1551 = scalar_select %p1550, %s17, 1
        %s1552 = smul.addr %s1551, 16
        %s1553 = smul.addr %s1552, 8
        %s1554 = scalar_lea.vmem %s4, %s1553
      $region52: #{xssd_forward.7} parent=43 // pred_fallthru
        _
    $region44: #{xssd_forward.7} parent=5 // pred_fallthru
      _
  $region6: #{xssd_forward.7} parent=0 // loop_footer
    %s15 = sadd.s32 1, %s11
  $region7: #{xssd_forward.7} parent=0 // loop_footer_branch
    %10 = sbr.rel target = $region3
  $region8: #{xssd_forward.7} parent=0 // loop_exit
    _

</llo_original>
